<compile_context>
chip_gen: v7x
topology: tpu7x:2x2x1
jax: 0.10.0
libtpu: 0.0.40
codegen_flags: <defaults>
</compile_context>

<pallas_src>
import math

import jax
import jax.numpy as jnp
from jax import lax
from jax.experimental import pallas as pl
from jax.experimental.pallas import tpu as pltpu

BLOCK = 33  # CS block size (33x33 = 1089)


def round_up(n, m):
    return ((n + m - 1) // m) * m


# ---------------------------------------------------------------------------
# Kernel 1: gradient step   r = x - lambda * (x @ PhiTPhi) + lambda * PhiTb
#   PhiTPhi arrives pre-padded to (Dp, Dp) bf16 (one-time host prep); the
#   grid is 2 balanced column tiles (megacore-friendly, minimal overhead).
# ---------------------------------------------------------------------------
def grad_step_kernel(lam_ref, x_ref, xblk_ref, ptp_ref, ptb_ref, out_ref):
    lam = lam_ref[0]
    prod = jnp.dot(x_ref[...].astype(jnp.bfloat16), ptp_ref[...],
                   preferred_element_type=jnp.float32)          # (Nb, TN) f32
    out_ref[...] = xblk_ref[...] - lam * prod + lam * ptb_ref[...]


def grad_step(x, PhiTPhi_prep, PhiTb, lam):
    Nb, D = x.shape
    Dp = PhiTPhi_prep.shape[1]
    # two balanced column tiles (keeps both v7x TCs busy under "parallel");
    # fall back to a single tile if Dp/2 is not lane aligned.
    tn = Dp // 2 if (Dp // 2) % 128 == 0 else Dp
    pad = Dp - D
    x_p = jnp.pad(x, ((0, 0), (0, pad))) if pad else x
    ptb_p = jnp.pad(PhiTb, ((0, 0), (0, pad))) if pad else PhiTb
    lam1 = jnp.reshape(lam, (1,)).astype(jnp.float32)

    out = pl.pallas_call(
        grad_step_kernel,
        out_shape=jax.ShapeDtypeStruct((Nb, Dp), jnp.float32),
        grid=(Dp // tn,),
        in_specs=[
            pl.BlockSpec(memory_space=pltpu.MemorySpace.SMEM),   # lambda
            pl.BlockSpec((Nb, Dp), lambda j: (0, 0)),            # x (full, for the dot)
            pl.BlockSpec((Nb, tn), lambda j: (0, j)),            # x  (column tile)
            pl.BlockSpec((Dp, tn), lambda j: (0, j)),            # PhiTPhi tile (bf16)
            pl.BlockSpec((Nb, tn), lambda j: (0, j)),            # PhiTb tile
        ],
        out_specs=pl.BlockSpec((Nb, tn), lambda j: (0, j)),
        compiler_params=pltpu.CompilerParams(
            dimension_semantics=("parallel",)),
    )(lam1, x_p, x_p, PhiTPhi_prep, ptb_p)
    return out[:, :D] if pad else out


def prepare_phitphi(PhiTPhi):
    """One-time host prep: zero-pad D to a 128 multiple and cast to bf16."""
    D = PhiTPhi.shape[0]
    Dp = round_up(D, 128)
    return jnp.pad(PhiTPhi, ((0, Dp - D), (0, Dp - D))).astype(jnp.bfloat16)


# ---------------------------------------------------------------------------
# Kernel 2: fused 6-layer 3x3 conv chain + residual add
#   conv_D (1->32) -> conv1_f (+relu) -> conv2_f (+relu) -> conv1_b (+relu)
#   -> conv2_b -> conv_G (32->1) ;  out = x_input + conv_G(...)
#
# Layout: feature maps are (32, NPAD) bf16 slabs, channels on sublanes,
# flattened padded spatial on lanes with a 128-lane row stride (image pixel
# (i, j) sits at flat index (i+2)*128 + j).  A layer builds the (288, L)
# stack of 9 lane-shifted copies and runs ONE (32,288)@(288,L) MXU matmul.
# ---------------------------------------------------------------------------
def make_conv_chain_kernel(H, W):
    C = 32
    WP = max(128, round_up(W + 2, 128))   # 128-aligned row stride
    NROWS = H + 4                         # 2 top pad rows + H + bottom slack
    NPAD = NROWS * WP
    S = 2 * WP                            # flat index of image pixel (0, 0)
    L = H * WP                            # contiguous range covering the image
    offsets = [(dy - 1) * WP + (dx - 1) for dy in range(3) for dx in range(3)]

    def kernel(xD_ref, xval_ref, mask_ref, wD_ref,
               w1_ref, b1_ref, w2_ref, b2_ref,
               w3_ref, b3_ref, w4_ref, b4_ref,
               wG_ref, out_ref, slab, stack):
        mask = mask_ref[...]                       # (1, L) f32: 1 on real pixels

        # top/bottom pad strips are never rewritten -> zero them once
        # (aligned full-vreg stores, S and NPAD-S-L are both 2*WP = 256).
        slab[:, 0:S] = jnp.zeros((C, S), jnp.bfloat16)
        slab[:, S + L:] = jnp.zeros((C, NPAD - S - L), jnp.bfloat16)

        # ---- conv_D : 1 -> 32, taps folded to K=16 (9 real + 7 zero rows) --
        accD = jnp.dot(wD_ref[...], xD_ref[...],
                       preferred_element_type=jnp.float32)      # (32, L) f32
        slab[:, S:S + L] = (accD * mask).astype(jnp.bfloat16)

        def build_stack():
            # 9 lane-shifted copies of the slab stacked on sublanes (288, L).
            for g, off in enumerate(offsets):
                stack[g * C:(g + 1) * C, :] = slab[:, S + off:S + off + L]

        # ---- generic 32 -> 32 layer: ONE (32,288)@(288,L) MXU matmul --------
        def conv32(w_ref, b_ref, relu):
            build_stack()
            acc = jnp.dot(w_ref[...], stack[...],
                          preferred_element_type=jnp.float32)   # (32, L) f32
            acc = acc + b_ref[...]
            if relu:
                acc = jnp.maximum(acc, 0.0)
            slab[:, S:S + L] = (acc * mask).astype(jnp.bfloat16)

        conv32(w1_ref, b1_ref, True)    # conv1_forward  + relu
        conv32(w2_ref, b2_ref, True)    # conv2_forward  + relu
        conv32(w3_ref, b3_ref, True)    # conv1_backward + relu
        conv32(w4_ref, b4_ref, False)   # conv2_backward (bias only)

        # ---- conv_G : 32 -> 1 as (8,288)@(288,L) (row 0 real) + residual ----
        build_stack()
        xg = jnp.dot(wG_ref[...], stack[...],
                     preferred_element_type=jnp.float32)        # (8, L) f32
        out_ref[...] = xg[0:1, :] + xval_ref[...]               # x_pred (flat)

    return kernel, WP, NROWS, NPAD, S, L, offsets


def conv_chain(x_img, kw):
    H, W = x_img.shape
    kernel, WP, NROWS, NPAD, S, L, offsets = make_conv_chain_kernel(H, W)

    # zero-padded, 128-stride flat input (pure layout plumbing, host side)
    xpad = jnp.zeros((NROWS, WP), jnp.float32)
    xpad = xpad.at[2:H + 2, 0:W].set(x_img.astype(jnp.float32))
    xflat = xpad.reshape(-1)                                     # (NPAD,)

    # 9 shifted copies of the (single-channel) input + 7 zero rows -> (16, L)
    rows = [xflat[S + off:S + off + L] for off in offsets]
    rows += [jnp.zeros((L,), jnp.float32)] * 7
    xD_stack = jnp.stack(rows, axis=0).astype(jnp.bfloat16)      # (16, L) bf16
    xval = xflat[S:S + L].reshape(1, L)                          # residual, f32

    # intra-row padding-column mask (rows in [S, S+L) are always valid rows)
    mask = ((jnp.arange(L) % WP) < W).astype(jnp.float32).reshape(1, L)

    out = pl.pallas_call(
        kernel,
        out_shape=jax.ShapeDtypeStruct((1, L), jnp.float32),
        in_specs=[pl.BlockSpec(memory_space=pltpu.MemorySpace.VMEM)] * 13,
        out_specs=pl.BlockSpec(memory_space=pltpu.MemorySpace.VMEM),
        scratch_shapes=[
            pltpu.VMEM((32, NPAD), jnp.bfloat16),       # activation slab
            pltpu.VMEM((9 * 32, L), jnp.bfloat16),      # stacked 9-tap slab
        ],
    )(xD_stack, xval, mask, kw['wD'],
      kw['w1f'], kw['b1f'], kw['w2f'], kw['b2f'],
      kw['w1b'], kw['b1b'], kw['w2b'], kw['b2b'], kw['wG'])

    # scatter the lane-dense flat result back into the padded image and crop
    flat = jnp.pad(out[0], (S, NPAD - S - L))
    return flat.reshape(NROWS, WP)[2:H + 2, 0:W]


# ---------------------------------------------------------------------------
# col2im / img2col (pure reshuffles -> plain JAX glue)
# ---------------------------------------------------------------------------
def col2im_cs(x_col, row_new, col_new):
    rb, cb = row_new // BLOCK, col_new // BLOCK
    x = x_col.reshape(rb, cb, BLOCK, BLOCK).transpose(0, 2, 1, 3)
    return x.reshape(row_new, col_new)


def img2col(img, bs=BLOCK):
    row, col = img.shape
    rb, cb = row // bs, col // bs
    x = img.reshape(rb, bs, cb, bs).transpose(0, 2, 1, 3)
    return x.reshape(-1, bs * bs)


# ---------------------------------------------------------------------------
# parameters (deterministic, synthetic — shapes from BasicBlock.__init__)
# ---------------------------------------------------------------------------
def xavier_normal(key, shape):  # shape is torch OIHW
    fan_out = shape[0] * shape[2] * shape[3]
    fan_in = shape[1] * shape[2] * shape[3]
    std = math.sqrt(2.0 / (fan_in + fan_out))
    return (jax.random.normal(key, shape) * std).astype(jnp.float32)


def init_params(key):
    ks = jax.random.split(key, 6)
    return {
        'lambda_step': jnp.float32(0.5),
        'conv_D': xavier_normal(ks[0], (32, 1, 3, 3)),
        'conv1_forward': xavier_normal(ks[1], (32, 32, 3, 3)),
        'bias1_f': jnp.full((32,), 0.01, jnp.float32),
        'conv2_forward': xavier_normal(ks[2], (32, 32, 3, 3)),
        'bias2_f': jnp.full((32,), 0.01, jnp.float32),
        'conv1_backward': xavier_normal(ks[3], (32, 32, 3, 3)),
        'bias1_b': jnp.full((32,), 0.01, jnp.float32),
        'conv2_backward': xavier_normal(ks[4], (32, 32, 3, 3)),
        'bias2_b': jnp.full((32,), 0.01, jnp.float32),
        'conv_G': xavier_normal(ks[5], (1, 32, 3, 3)),
    }


def kernel_weights(p):
    """One-time host prep: fold 3x3 taps into the contraction dim, cast bf16.

    Stacked-slab row index is (dy*3 + dx)*32 + ci, so the folded weight column
    index must match: W_fold[co, (dy*3+dx)*32 + ci] = w_OIHW[co, ci, dy, dx].
    """
    def fold32(w):                                   # (32,32,3,3) -> (32, 288)
        return jnp.transpose(w, (0, 2, 3, 1)).reshape(32, 288).astype(jnp.bfloat16)

    wD = p['conv_D'].reshape(32, 9)                  # (co, dy*3+dx)
    wD16 = jnp.pad(wD, ((0, 0), (0, 7))).astype(jnp.bfloat16)        # (32, 16)
    wG = jnp.transpose(p['conv_G'], (0, 2, 3, 1)).reshape(1, 288)
    wG8 = jnp.pad(wG, ((0, 7), (0, 0))).astype(jnp.bfloat16)         # (8, 288)
    b = lambda v: v.reshape(32, 1).astype(jnp.float32)
    return {
        'wD': wD16,
        'w1f': fold32(p['conv1_forward']), 'b1f': b(p['bias1_f']),
        'w2f': fold32(p['conv2_forward']), 'b2f': b(p['bias2_f']),
        'w1b': fold32(p['conv1_backward']), 'b1b': b(p['bias1_b']),
        'w2b': fold32(p['conv2_backward']), 'b2b': b(p['bias2_b']),
        'wG': wG8,
    }


# ---------------------------------------------------------------------------
# forward (Pallas) and pure-JAX reference
# ---------------------------------------------------------------------------
def basic_block_forward(p, kw, x, PhiTPhi_prep, PhiTb, row_new, col_new):
    # kw / PhiTPhi_prep are one-time host-prepped (cast/pad hoisted out of the
    # per-call path, per perf review).
    r = grad_step(x, PhiTPhi_prep, PhiTb.astype(jnp.float32), p['lambda_step'])
    x_input = col2im_cs(r, row_new, col_new)
    x_pred_img = conv_chain(x_input, kw)
    return img2col(x_pred_img, BLOCK)


def reference_forward(p, x, PhiTPhi, PhiTb, row_new, col_new):
    lam = p['lambda_step']
    x = x - lam * (x @ PhiTPhi)
    x = x + lam * PhiTb
    img = col2im_cs(x, row_new, col_new)[None, None]               # NCHW
    dn = ('NCHW', 'OIHW', 'NCHW')
    conv = lambda a, w: lax.conv_general_dilated(a, w, (1, 1), 'SAME',
                                                 dimension_numbers=dn)
    xD = conv(img, p['conv_D'])
    h = jax.nn.relu(conv(xD, p['conv1_forward']) + p['bias1_f'][None, :, None, None])
    h = jax.nn.relu(conv(h, p['conv2_forward']) + p['bias2_f'][None, :, None, None])
    h = jax.nn.relu(conv(h, p['conv1_backward']) + p['bias1_b'][None, :, None, None])
    xb = conv(h, p['conv2_backward']) + p['bias2_b'][None, :, None, None]
    xG = conv(xb, p['conv_G'])
    x_pred = img + xG
    return img2col(x_pred[0, 0], BLOCK)


if __name__ == "__main__":
    key = jax.random.PRNGKey(0)
    kp, kx, kphi, kb = jax.random.split(key, 4)

    row_new = col_new = 2 * BLOCK          # 66x66 image -> 4 blocks of 33x33
    Nb = (row_new // BLOCK) * (col_new // BLOCK)
    D = BLOCK * BLOCK                      # 1089

    x = jax.random.normal(kx, (Nb, D), jnp.float32) * 0.1
    PhiTPhi = jax.random.normal(kphi, (D, D), jnp.float32) * 0.01
    PhiTb = jax.random.normal(kb, (Nb, D), jnp.float32) * 0.1
    params = init_params(kp)

    # one-time prep (reused across phases/calls in a real multi-phase net)
    PhiTPhi_prep = prepare_phitphi(PhiTPhi)     # padded to 1152, bf16
    kw = kernel_weights(params)                 # folded (32, 288) bf16 weights

    out = basic_block_forward(params, kw, x, PhiTPhi_prep, PhiTb,
                              row_new, col_new)
    out = jax.block_until_ready(out)

    ref = jax.block_until_ready(
        reference_forward(params, x, PhiTPhi, PhiTb, row_new, col_new))

    assert out.shape == (Nb, D)
    err = float(jnp.max(jnp.abs(out - ref)))
    assert err < 5e-2, f"max abs err too large: {err}"
    print("KERNEL_OK")
</pallas_src>

<mosaic_0001>
module attributes {stable_mosaic.version = 11 : i64} {
  func.func @grad_step_kernel(%arg0: i32, %arg1: memref<1xf32, #tpu.memory_space<smem>>, %arg2: memref<4x1152xf32, #tpu.memory_space<vmem>>, %arg3: memref<4x1152xf32, #tpu.memory_space<vmem>>, %arg4: memref<1152x1152xbf16, #tpu.memory_space<vmem>>, %arg5: memref<4x1152xf32, #tpu.memory_space<vmem>>, %arg6: memref<4x1152xf32, #tpu.memory_space<vmem>>) attributes {dimension_semantics = [#tpu.dimension_semantics<parallel>], iteration_bounds = array<i64: 1>, scalar_prefetch = 0 : i64, scratch_operands = 0 : i64, tpu.core_type = #tpu.core_type<tc>, window_params = [{transform_indices = @transform_0, window_bounds = array<i64: 1>}, {pipeline_mode = #tpu.pipeline_mode<synchronous>, transform_indices = @transform_1, window_bounds = array<i64: 4, 1152>}, {transform_indices = @transform_2, window_bounds = array<i64: 4, 1152>}, {transform_indices = @transform_3, window_bounds = array<i64: 1152, 1152>}, {transform_indices = @transform_4, window_bounds = array<i64: 4, 1152>}, {transform_indices = @transform_5, window_bounds = array<i64: 4, 1152>}]} {
    %c0 = arith.constant 0 : index
    %0 = memref.load %arg1[%c0] : memref<1xf32, #tpu.memory_space<smem>>
    %c0_0 = arith.constant 0 : index
    %c0_1 = arith.constant 0 : index
    %1 = vector.load %arg2[%c0_0, %c0_1] : memref<4x1152xf32, #tpu.memory_space<vmem>>, vector<4x1152xf32>
    %2 = arith.truncf %1 : vector<4x1152xf32> to vector<4x1152xbf16>
    %c0_2 = arith.constant 0 : index
    %c0_3 = arith.constant 0 : index
    %3 = vector.load %arg4[%c0_2, %c0_3] : memref<1152x1152xbf16, #tpu.memory_space<vmem>>, vector<1152x1152xbf16>
    %cst = arith.constant dense<0.000000e+00> : vector<4x1152xf32>
    %4 = tpu.matmul %2, %3, %cst {dimension_numbers = #tpu.dot_dimension_numbers<[1], [0], [0], [1], [0, 0, 1, 1], [], []>} : vector<4x1152xbf16>, vector<1152x1152xbf16>, vector<4x1152xf32> -> vector<4x1152xf32>
    %c0_4 = arith.constant 0 : index
    %c0_5 = arith.constant 0 : index
    %5 = vector.load %arg3[%c0_4, %c0_5] : memref<4x1152xf32, #tpu.memory_space<vmem>>, vector<4x1152xf32>
    %6 = vector.broadcast %0 : f32 to vector<4x1152xf32>
    %7 = arith.mulf %6, %4 : vector<4x1152xf32>
    %8 = arith.subf %5, %7 : vector<4x1152xf32>
    %c0_6 = arith.constant 0 : index
    %c0_7 = arith.constant 0 : index
    %9 = vector.load %arg5[%c0_6, %c0_7] : memref<4x1152xf32, #tpu.memory_space<vmem>>, vector<4x1152xf32>
    %10 = vector.broadcast %0 : f32 to vector<4x1152xf32>
    %11 = arith.mulf %10, %9 : vector<4x1152xf32>
    %12 = arith.addf %8, %11 : vector<4x1152xf32>
    %c0_8 = arith.constant 0 : index
    %c0_9 = arith.constant 0 : index
    %13 = vector.load %arg6[%c0_8, %c0_9] : memref<4x1152xf32, #tpu.memory_space<vmem>>, vector<4x1152xf32>
    tpu.vector_store %arg6[%c0_8, %c0_9], %12 {strides = array<i32>} : memref<4x1152xf32, #tpu.memory_space<vmem>>, vector<4x1152xf32>,
    return
  }
  func.func @transform_0(%arg0: i32) -> i32 {
    %c0_i32 = arith.constant 0 : i32
    %c0_i32_0 = arith.constant 0 : i32
    return %c0_i32 : i32
  }
  func.func @transform_1(%arg0: i32) -> (i32, i32) {
    %c0_i32 = arith.constant 0 : i32
    %c0_i32_0 = arith.constant 0 : i32
    %c0_i32_1 = arith.constant 0 : i32
    return %c0_i32, %c0_i32_0 : i32, i32
  }
  func.func @transform_2(%arg0: i32) -> (i32, i32) {
    %c0_i32 = arith.constant 0 : i32
    %c0_i32_0 = arith.constant 0 : i32
    return %c0_i32, %arg0 : i32, i32
  }
  func.func @transform_3(%arg0: i32) -> (i32, i32) {
    %c0_i32 = arith.constant 0 : i32
    %c0_i32_0 = arith.constant 0 : i32
    return %c0_i32, %arg0 : i32, i32
  }
  func.func @transform_4(%arg0: i32) -> (i32, i32) {
    %c0_i32 = arith.constant 0 : i32
    %c0_i32_0 = arith.constant 0 : i32
    return %c0_i32, %arg0 : i32, i32
  }
  func.func @transform_5(%arg0: i32) -> (i32, i32) {
    %c0_i32 = arith.constant 0 : i32
    %c0_i32_0 = arith.constant 0 : i32
    return %c0_i32, %arg0 : i32, i32
  }
}

</mosaic_0001>

<llo_original>
// kernel: tpu_custom_call.1
$region0: #{tpu_custom_call.1}
  #allocation0 [shape = 'u32[]', space=smem, size = 0x4, offset = 0x4, fixed_abs, tag = 'smem constant byte address 0x4 - core index']
  #allocation1 [shape = 'u32[144,128]{1,0:T(1,128)}', space=vmem, size = 0x12000, scoped, tag = 'internal scratch']
  #allocation2 [shape = 'f32[1]{0:T(128)S(6)}', space=smem, size = 0x200, scoped, tag = 'scoped memory for tpu_custom_call.1']
  %s0 = inlined_call_operand.<no memory space> [shape: f32[1], index: 0, kind: input, shape index: {}]
  %s1 = inlined_call_operand.hbm [shape: f32[4,1152], index: 1, kind: input, shape index: {}]
  %s2 = inlined_call_operand.hbm [shape: f32[4,1152], index: 2, kind: input, shape index: {}]
  %s3 = inlined_call_operand.hbm [shape: bf16[1152,1152], index: 3, kind: input, shape index: {}]
  %s4 = inlined_call_operand.hbm [shape: f32[4,1152], index: 4, kind: input, shape index: {}]
  %s5 = inlined_call_operand.hbm [shape: f32[4,1152], index: 5, kind: output, shape index: {}]
  %s6 = sld [smem:[#allocation0]]
  $region46: #{tpu_custom_call.1} parent=0
    _
  %s8 = ssub.s32 1, %s6
  %s9 = scalar_select 0, %s8, %s6
  %10 = sst [smem:[#allocation2]] %s0
  $region1: #{tpu_custom_call.1} parent=0
    #allocation3 [shape = 'u8[18432]{0}', space=vmem, size = 0x4800, scoped, tag = 'input window, operand 1, single buffered']
    #allocation4 [shape = 's32[1]{0}', space=sflag, size = 0x4, scoped, tag = 'scoped memory for tpu_custom_call.1']
    #allocation5 [shape = 's32[1]{0}', space=sflag, size = 0x4, scoped, tag = 'scoped memory for tpu_custom_call.1']
    #allocation6 [shape = 'u8[18432]{0}', space=vmem, size = 0x4800, scoped, tag = 'input window, operand 2, single buffered']
    #allocation7 [shape = 's32[1]{0}', space=sflag, size = 0x4, scoped, tag = 'scoped memory for tpu_custom_call.1']
    #allocation8 [shape = 'u8[2654208]{0}', space=vmem, size = 0x288000, scoped, tag = 'input window, operand 3, single buffered']
    #allocation9 [shape = 'u8[18432]{0}', space=vmem, size = 0x4800, scoped, tag = 'input window, operand 4, single buffered']
    #allocation10 [shape = 's32[1]{0}', space=sflag, size = 0x4, scoped, tag = 'scoped memory for tpu_custom_call.1']
    #allocation11 [shape = 'u8[18432]{0}', space=vmem, size = 0x4800, scoped, tag = 'output window, operand 0, single buffered']
    %11 = vsyncpa [#allocation4], 0
    %12 = vsyncpa [#allocation7], 0
    %13 = vsyncpa [#allocation10], 0
    %14 = vsyncpa [#allocation5], 0
    // Predicated region
    $region2: #{tpu_custom_call.1} parent=1 // pred_check
      _
    $region3: #{tpu_custom_call.1} parent=1 // pred_check_branch
      %16 = sbr.rel (0) target = $region5
    $region4: #{tpu_custom_call.1} parent=1 // pred_region
      _
    $region5: #{tpu_custom_call.1} parent=1 // pred_fallthru
      _
    // Predicated region
    $region6: #{tpu_custom_call.1} parent=1 // pred_check
      _
    $region7: #{tpu_custom_call.1} parent=1 // pred_check_branch
      %18 = sbr.rel (0) target = $region9
    $region8: #{tpu_custom_call.1} parent=1 // pred_region
      %s20 = ssub.s32 576, 576
      %21 = vsyncadd [#allocation4], %s20
      %s23 = sshll.u32 [#allocation3], 4
      %s24 = int_to_ptr.vmem [resolvable:$true] %s23
      %26 = dma.hbm_to_vmem [thread:$0]  %s1, 576, %s24, [#allocation4]
    $region9: #{tpu_custom_call.1} parent=1 // pred_fallthru
      _
    // Predicated region
    $region10: #{tpu_custom_call.1} parent=1 // pred_check
      _
    $region11: #{tpu_custom_call.1} parent=1 // pred_check_branch
      %28 = sbr.rel (0) target = $region13
    $region12: #{tpu_custom_call.1} parent=1 // pred_region
      %s30 = ssub.s32 576, 576
      %31 = vsyncadd [#allocation7], %s30
      %s33 = sshll.u32 [#allocation6], 4
      %s34 = int_to_ptr.vmem [resolvable:$true] %s33
      %36 = dma.hbm_to_vmem [thread:$0]  %s2, 576, %s34, [#allocation7]
    $region13: #{tpu_custom_call.1} parent=1 // pred_fallthru
      _
    // Predicated region
    $region14: #{tpu_custom_call.1} parent=1 // pred_check
      _
    $region15: #{tpu_custom_call.1} parent=1 // pred_check_branch
      %38 = sbr.rel (0) target = $region17
    $region16: #{tpu_custom_call.1} parent=1 // pred_region
      %s40 = ssub.s32 82944, 82944
      %41 = vsyncadd [#allocation7], %s40
      %s42 = sshll.u32 [#allocation8], 4
      %s43 = int_to_ptr.vmem [resolvable:$true] %s42
      %48 = dma.hbm_to_vmem [thread:$0]  %s3, 82944, %s43, [#allocation7], 576, 576, 36
    $region17: #{tpu_custom_call.1} parent=1 // pred_fallthru
      _
    // Predicated region
    $region18: #{tpu_custom_call.1} parent=1 // pred_check
      _
    $region19: #{tpu_custom_call.1} parent=1 // pred_check_branch
      %50 = sbr.rel (0) target = $region21
    $region20: #{tpu_custom_call.1} parent=1 // pred_region
      %s52 = ssub.s32 576, 576
      %53 = vsyncadd [#allocation10], %s52
      %s55 = sshll.u32 [#allocation9], 4
      %s56 = int_to_ptr.vmem [resolvable:$true] %s55
      %58 = dma.hbm_to_vmem [thread:$0]  %s4, 576, %s56, [#allocation10]
    $region21: #{tpu_custom_call.1} parent=1 // pred_fallthru
      _
    // Predicated region
    $region22: #{tpu_custom_call.1} parent=1 // pred_check
      _
    $region23: #{tpu_custom_call.1} parent=1 // pred_check_branch
      %60 = sbr.rel (0) target = $region25
    $region24: #{tpu_custom_call.1} parent=1 // pred_region
      %61 = dma.done [#allocation4], 576
    $region25: #{tpu_custom_call.1} parent=1 // pred_fallthru
      _
    // Predicated region
    $region26: #{tpu_custom_call.1} parent=1 // pred_check
      _
    $region27: #{tpu_custom_call.1} parent=1 // pred_check_branch
      %63 = sbr.rel (0) target = $region29
    $region28: #{tpu_custom_call.1} parent=1 // pred_region
      %64 = dma.done [#allocation7], 576
    $region29: #{tpu_custom_call.1} parent=1 // pred_fallthru
      _
    // Predicated region
    $region30: #{tpu_custom_call.1} parent=1 // pred_check
      _
    $region31: #{tpu_custom_call.1} parent=1 // pred_check_branch
      %66 = sbr.rel (0) target = $region33
    $region32: #{tpu_custom_call.1} parent=1 // pred_region
      %67 = dma.done [#allocation7], 82944
    $region33: #{tpu_custom_call.1} parent=1 // pred_fallthru
      _
    // Predicated region
    $region34: #{tpu_custom_call.1} parent=1 // pred_check
      _
    $region35: #{tpu_custom_call.1} parent=1 // pred_check_branch
      %69 = sbr.rel (0) target = $region37
    $region36: #{tpu_custom_call.1} parent=1 // pred_region
      %70 = dma.done [#allocation10], 576
    $region37: #{tpu_custom_call.1} parent=1 // pred_fallthru
      _
    %s72 = sld [smem:[#allocation2]]
    %v73 = vld [vmem:[#allocation3] sm:$0xff]
    %v74 = vld [vmem:[#allocation3 + $0x8] sm:$0xff]
    %v75 = vld [vmem:[#allocation3 + $0x10] sm:$0xff]
    %v76 = vld [vmem:[#allocation3 + $0x18] sm:$0xff]
    %v77 = vld [vmem:[#allocation3 + $0x20] sm:$0xf]
    %v82 = vcombine.high %v73, %v73
    %v83 = vcombine.high %v74, %v74
    %v84 = vcombine.high %v75, %v75
    %v85 = vcombine.high %v76, %v76
    %v90 = vpack.c.bf16 %v73, %v73
    %v91 = vpack.c.bf16 %v82, %v82
    %v92 = vpack.c.bf16 %v74, %v74
    %v93 = vpack.c.bf16 %v83, %v83
    %v94 = vpack.c.bf16 %v75, %v75
    %v95 = vpack.c.bf16 %v84, %v84
    %v96 = vpack.c.bf16 %v76, %v76
    %v97 = vpack.c.bf16 %v85, %v85
    %v98 = vpack.c.bf16 %v77, %v77
    %v99 = vld [vmem:[#allocation8] sm:$0xff]
    %v100 = vld [vmem:[#allocation8 + $0x8] sm:$0xff]
    %v101 = vld [vmem:[#allocation8 + $0x10] sm:$0xff]
    %v102 = vld [vmem:[#allocation8 + $0x18] sm:$0xff]
    %v103 = vld [vmem:[#allocation8 + $0x20] sm:$0xf]
    %v104 = vld [vmem:[#allocation8 + $0x24] sm:$0xff]
    %v105 = vld [vmem:[#allocation8 + $0x2c] sm:$0xff]
    %v106 = vld [vmem:[#allocation8 + $0x34] sm:$0xff]
    %v107 = vld [vmem:[#allocation8 + $0x3c] sm:$0xff]
    %v108 = vld [vmem:[#allocation8 + $0x44] sm:$0xf]
    %v109 = vld [vmem:[#allocation8 + $0x48] sm:$0xff]
    %v110 = vld [vmem:[#allocation8 + $0x50] sm:$0xff]
    %v111 = vld [vmem:[#allocation8 + $0x58] sm:$0xff]
    %v112 = vld [vmem:[#allocation8 + $0x60] sm:$0xff]
    %v113 = vld [vmem:[#allocation8 + $0x68] sm:$0xf]
    %v114 = vld [vmem:[#allocation8 + $0x6c] sm:$0xff]
    %v115 = vld [vmem:[#allocation8 + $0x74] sm:$0xff]
    %v116 = vld [vmem:[#allocation8 + $0x7c] sm:$0xff]
    %v117 = vld [vmem:[#allocation8 + $0x84] sm:$0xff]
    %v118 = vld [vmem:[#allocation8 + $0x8c] sm:$0xf]
    %v119 = vld [vmem:[#allocation8 + $0x90] sm:$0xff]
    %v120 = vld [vmem:[#allocation8 + $0x98] sm:$0xff]
    %v121 = vld [vmem:[#allocation8 + $0xa0] sm:$0xff]
    %v122 = vld [vmem:[#allocation8 + $0xa8] sm:$0xff]
    %v123 = vld [vmem:[#allocation8 + $0xb0] sm:$0xf]
    %v124 = vld [vmem:[#allocation8 + $0xb4] sm:$0xff]
    %v125 = vld [vmem:[#allocation8 + $0xbc] sm:$0xff]
    %v126 = vld [vmem:[#allocation8 + $0xc4] sm:$0xff]
    %v127 = vld [vmem:[#allocation8 + $0xcc] sm:$0xff]
    %v128 = vld [vmem:[#allocation8 + $0xd4] sm:$0xf]
    %v129 = vld [vmem:[#allocation8 + $0xd8] sm:$0xff]
    %v130 = vld [vmem:[#allocation8 + $0xe0] sm:$0xff]
    %v131 = vld [vmem:[#allocation8 + $0xe8] sm:$0xff]
    %v132 = vld [vmem:[#allocation8 + $0xf0] sm:$0xff]
    %v133 = vld [vmem:[#allocation8 + $0xf8] sm:$0xf]
    %v134 = vld [vmem:[#allocation8 + $0xfc] sm:$0xff]
    %v135 = vld [vmem:[#allocation8 + $0x104] sm:$0xff]
    %v136 = vld [vmem:[#allocation8 + $0x10c] sm:$0xff]
    %v137 = vld [vmem:[#allocation8 + $0x114] sm:$0xff]
    %v138 = vld [vmem:[#allocation8 + $0x11c] sm:$0xf]
    %v139 = vld [vmem:[#allocation8 + $0x120] sm:$0xff]
    %v140 = vld [vmem:[#allocation8 + $0x128] sm:$0xff]
    %v141 = vld [vmem:[#allocation8 + $0x130] sm:$0xff]
    %v142 = vld [vmem:[#allocation8 + $0x138] sm:$0xff]
    %v143 = vld [vmem:[#allocation8 + $0x140] sm:$0xf]
    %v144 = vld [vmem:[#allocation8 + $0x144] sm:$0xff]
    %v145 = vld [vmem:[#allocation8 + $0x14c] sm:$0xff]
    %v146 = vld [vmem:[#allocation8 + $0x154] sm:$0xff]
    %v147 = vld [vmem:[#allocation8 + $0x15c] sm:$0xff]
    %v148 = vld [vmem:[#allocation8 + $0x164] sm:$0xf]
    %v149 = vld [vmem:[#allocation8 + $0x168] sm:$0xff]
    %v150 = vld [vmem:[#allocation8 + $0x170] sm:$0xff]
    %v151 = vld [vmem:[#allocation8 + $0x178] sm:$0xff]
    %v152 = vld [vmem:[#allocation8 + $0x180] sm:$0xff]
    %v153 = vld [vmem:[#allocation8 + $0x188] sm:$0xf]
    %v154 = vld [vmem:[#allocation8 + $0x18c] sm:$0xff]
    %v155 = vld [vmem:[#allocation8 + $0x194] sm:$0xff]
    %v156 = vld [vmem:[#allocation8 + $0x19c] sm:$0xff]
    %v157 = vld [vmem:[#allocation8 + $0x1a4] sm:$0xff]
    %v158 = vld [vmem:[#allocation8 + $0x1ac] sm:$0xf]
    %v159 = vld [vmem:[#allocation8 + $0x1b0] sm:$0xff]
    %v160 = vld [vmem:[#allocation8 + $0x1b8] sm:$0xff]
    %v161 = vld [vmem:[#allocation8 + $0x1c0] sm:$0xff]
    %v162 = vld [vmem:[#allocation8 + $0x1c8] sm:$0xff]
    %v163 = vld [vmem:[#allocation8 + $0x1d0] sm:$0xf]
    %v164 = vld [vmem:[#allocation8 + $0x1d4] sm:$0xff]
    %v165 = vld [vmem:[#allocation8 + $0x1dc] sm:$0xff]
    %v166 = vld [vmem:[#allocation8 + $0x1e4] sm:$0xff]
    %v167 = vld [vmem:[#allocation8 + $0x1ec] sm:$0xff]
    %v168 = vld [vmem:[#allocation8 + $0x1f4] sm:$0xf]
    %v169 = vld [vmem:[#allocation8 + $0x1f8] sm:$0xff]
    %v170 = vld [vmem:[#allocation8 + $0x200] sm:$0xff]
    %v171 = vld [vmem:[#allocation8 + $0x208] sm:$0xff]
    %v172 = vld [vmem:[#allocation8 + $0x210] sm:$0xff]
    %v173 = vld [vmem:[#allocation8 + $0x218] sm:$0xf]
    %v174 = vld [vmem:[#allocation8 + $0x21c] sm:$0xff]
    %v175 = vld [vmem:[#allocation8 + $0x224] sm:$0xff]
    %v176 = vld [vmem:[#allocation8 + $0x22c] sm:$0xff]
    %v177 = vld [vmem:[#allocation8 + $0x234] sm:$0xff]
    %v178 = vld [vmem:[#allocation8 + $0x23c] sm:$0xf]
    %v179 = vld [vmem:[#allocation8 + $0x240] sm:$0xff]
    %v180 = vld [vmem:[#allocation8 + $0x248] sm:$0xff]
    %v181 = vld [vmem:[#allocation8 + $0x250] sm:$0xff]
    %v182 = vld [vmem:[#allocation8 + $0x258] sm:$0xff]
    %v183 = vld [vmem:[#allocation8 + $0x260] sm:$0xf]
    %v184 = vld [vmem:[#allocation8 + $0x264] sm:$0xff]
    %v185 = vld [vmem:[#allocation8 + $0x26c] sm:$0xff]
    %v186 = vld [vmem:[#allocation8 + $0x274] sm:$0xff]
    %v187 = vld [vmem:[#allocation8 + $0x27c] sm:$0xff]
    %v188 = vld [vmem:[#allocation8 + $0x284] sm:$0xf]
    %v189 = vld [vmem:[#allocation8 + $0x288] sm:$0xff]
    %v190 = vld [vmem:[#allocation8 + $0x290] sm:$0xff]
    %v191 = vld [vmem:[#allocation8 + $0x298] sm:$0xff]
    %v192 = vld [vmem:[#allocation8 + $0x2a0] sm:$0xff]
    %v193 = vld [vmem:[#allocation8 + $0x2a8] sm:$0xf]
    %v194 = vld [vmem:[#allocation8 + $0x2ac] sm:$0xff]
    %v195 = vld [vmem:[#allocation8 + $0x2b4] sm:$0xff]
    %v196 = vld [vmem:[#allocation8 + $0x2bc] sm:$0xff]
    %v197 = vld [vmem:[#allocation8 + $0x2c4] sm:$0xff]
    %v198 = vld [vmem:[#allocation8 + $0x2cc] sm:$0xf]
    %v199 = vld [vmem:[#allocation8 + $0x2d0] sm:$0xff]
    %v200 = vld [vmem:[#allocation8 + $0x2d8] sm:$0xff]
    %v201 = vld [vmem:[#allocation8 + $0x2e0] sm:$0xff]
    %v202 = vld [vmem:[#allocation8 + $0x2e8] sm:$0xff]
    %v203 = vld [vmem:[#allocation8 + $0x2f0] sm:$0xf]
    %v204 = vld [vmem:[#allocation8 + $0x2f4] sm:$0xff]
    %v205 = vld [vmem:[#allocation8 + $0x2fc] sm:$0xff]
    %v206 = vld [vmem:[#allocation8 + $0x304] sm:$0xff]
    %v207 = vld [vmem:[#allocation8 + $0x30c] sm:$0xff]
    %v208 = vld [vmem:[#allocation8 + $0x314] sm:$0xf]
    %v209 = vld [vmem:[#allocation8 + $0x318] sm:$0xff]
    %v210 = vld [vmem:[#allocation8 + $0x320] sm:$0xff]
    %v211 = vld [vmem:[#allocation8 + $0x328] sm:$0xff]
    %v212 = vld [vmem:[#allocation8 + $0x330] sm:$0xff]
    %v213 = vld [vmem:[#allocation8 + $0x338] sm:$0xf]
    %v214 = vld [vmem:[#allocation8 + $0x33c] sm:$0xff]
    %v215 = vld [vmem:[#allocation8 + $0x344] sm:$0xff]
    %v216 = vld [vmem:[#allocation8 + $0x34c] sm:$0xff]
    %v217 = vld [vmem:[#allocation8 + $0x354] sm:$0xff]
    %v218 = vld [vmem:[#allocation8 + $0x35c] sm:$0xf]
    %v219 = vld [vmem:[#allocation8 + $0x360] sm:$0xff]
    %v220 = vld [vmem:[#allocation8 + $0x368] sm:$0xff]
    %v221 = vld [vmem:[#allocation8 + $0x370] sm:$0xff]
    %v222 = vld [vmem:[#allocation8 + $0x378] sm:$0xff]
    %v223 = vld [vmem:[#allocation8 + $0x380] sm:$0xf]
    %v224 = vld [vmem:[#allocation8 + $0x384] sm:$0xff]
    %v225 = vld [vmem:[#allocation8 + $0x38c] sm:$0xff]
    %v226 = vld [vmem:[#allocation8 + $0x394] sm:$0xff]
    %v227 = vld [vmem:[#allocation8 + $0x39c] sm:$0xff]
    %v228 = vld [vmem:[#allocation8 + $0x3a4] sm:$0xf]
    %v229 = vld [vmem:[#allocation8 + $0x3a8] sm:$0xff]
    %v230 = vld [vmem:[#allocation8 + $0x3b0] sm:$0xff]
    %v231 = vld [vmem:[#allocation8 + $0x3b8] sm:$0xff]
    %v232 = vld [vmem:[#allocation8 + $0x3c0] sm:$0xff]
    %v233 = vld [vmem:[#allocation8 + $0x3c8] sm:$0xf]
    %v234 = vld [vmem:[#allocation8 + $0x3cc] sm:$0xff]
    %v235 = vld [vmem:[#allocation8 + $0x3d4] sm:$0xff]
    %v236 = vld [vmem:[#allocation8 + $0x3dc] sm:$0xff]
    %v237 = vld [vmem:[#allocation8 + $0x3e4] sm:$0xff]
    %v238 = vld [vmem:[#allocation8 + $0x3ec] sm:$0xf]
    %v239 = vld [vmem:[#allocation8 + $0x3f0] sm:$0xff]
    %v240 = vld [vmem:[#allocation8 + $0x3f8] sm:$0xff]
    %v241 = vld [vmem:[#allocation8 + $0x400] sm:$0xff]
    %v242 = vld [vmem:[#allocation8 + $0x408] sm:$0xff]
    %v243 = vld [vmem:[#allocation8 + $0x410] sm:$0xf]
    %v244 = vld [vmem:[#allocation8 + $0x414] sm:$0xff]
    %v245 = vld [vmem:[#allocation8 + $0x41c] sm:$0xff]
    %v246 = vld [vmem:[#allocation8 + $0x424] sm:$0xff]
    %v247 = vld [vmem:[#allocation8 + $0x42c] sm:$0xff]
    %v248 = vld [vmem:[#allocation8 + $0x434] sm:$0xf]
    %v249 = vld [vmem:[#allocation8 + $0x438] sm:$0xff]
    %v250 = vld [vmem:[#allocation8 + $0x440] sm:$0xff]
    %v251 = vld [vmem:[#allocation8 + $0x448] sm:$0xff]
    %v252 = vld [vmem:[#allocation8 + $0x450] sm:$0xff]
    %v253 = vld [vmem:[#allocation8 + $0x458] sm:$0xf]
    %v254 = vld [vmem:[#allocation8 + $0x45c] sm:$0xff]
    %v255 = vld [vmem:[#allocation8 + $0x464] sm:$0xff]
    %v256 = vld [vmem:[#allocation8 + $0x46c] sm:$0xff]
    %v257 = vld [vmem:[#allocation8 + $0x474] sm:$0xff]
    %v258 = vld [vmem:[#allocation8 + $0x47c] sm:$0xf]
    %v259 = vld [vmem:[#allocation8 + $0x480] sm:$0xff]
    %v260 = vld [vmem:[#allocation8 + $0x488] sm:$0xff]
    %v261 = vld [vmem:[#allocation8 + $0x490] sm:$0xff]
    %v262 = vld [vmem:[#allocation8 + $0x498] sm:$0xff]
    %v263 = vld [vmem:[#allocation8 + $0x4a0] sm:$0xf]
    %v264 = vld [vmem:[#allocation8 + $0x4a4] sm:$0xff]
    %v265 = vld [vmem:[#allocation8 + $0x4ac] sm:$0xff]
    %v266 = vld [vmem:[#allocation8 + $0x4b4] sm:$0xff]
    %v267 = vld [vmem:[#allocation8 + $0x4bc] sm:$0xff]
    %v268 = vld [vmem:[#allocation8 + $0x4c4] sm:$0xf]
    %v269 = vld [vmem:[#allocation8 + $0x4c8] sm:$0xff]
    %v270 = vld [vmem:[#allocation8 + $0x4d0] sm:$0xff]
    %v271 = vld [vmem:[#allocation8 + $0x4d8] sm:$0xff]
    %v272 = vld [vmem:[#allocation8 + $0x4e0] sm:$0xff]
    %v273 = vld [vmem:[#allocation8 + $0x4e8] sm:$0xf]
    %v274 = vld [vmem:[#allocation8 + $0x4ec] sm:$0xff]
    %v275 = vld [vmem:[#allocation8 + $0x4f4] sm:$0xff]
    %v276 = vld [vmem:[#allocation8 + $0x4fc] sm:$0xff]
    %v277 = vld [vmem:[#allocation8 + $0x504] sm:$0xff]
    %v278 = vld [vmem:[#allocation8 + $0x50c] sm:$0xf]
    %v279 = vld [vmem:[#allocation8 + $0x510] sm:$0xff]
    %v280 = vld [vmem:[#allocation8 + $0x518] sm:$0xff]
    %v281 = vld [vmem:[#allocation8 + $0x520] sm:$0xff]
    %v282 = vld [vmem:[#allocation8 + $0x528] sm:$0xff]
    %v283 = vld [vmem:[#allocation8 + $0x530] sm:$0xf]
    %v284 = vld [vmem:[#allocation8 + $0x534] sm:$0xff]
    %v285 = vld [vmem:[#allocation8 + $0x53c] sm:$0xff]
    %v286 = vld [vmem:[#allocation8 + $0x544] sm:$0xff]
    %v287 = vld [vmem:[#allocation8 + $0x54c] sm:$0xff]
    %v288 = vld [vmem:[#allocation8 + $0x554] sm:$0xf]
    %v289 = vld [vmem:[#allocation8 + $0x558] sm:$0xff]
    %v290 = vld [vmem:[#allocation8 + $0x560] sm:$0xff]
    %v291 = vld [vmem:[#allocation8 + $0x568] sm:$0xff]
    %v292 = vld [vmem:[#allocation8 + $0x570] sm:$0xff]
    %v293 = vld [vmem:[#allocation8 + $0x578] sm:$0xf]
    %v294 = vld [vmem:[#allocation8 + $0x57c] sm:$0xff]
    %v295 = vld [vmem:[#allocation8 + $0x584] sm:$0xff]
    %v296 = vld [vmem:[#allocation8 + $0x58c] sm:$0xff]
    %v297 = vld [vmem:[#allocation8 + $0x594] sm:$0xff]
    %v298 = vld [vmem:[#allocation8 + $0x59c] sm:$0xf]
    %v299 = vld [vmem:[#allocation8 + $0x5a0] sm:$0xff]
    %v300 = vld [vmem:[#allocation8 + $0x5a8] sm:$0xff]
    %v301 = vld [vmem:[#allocation8 + $0x5b0] sm:$0xff]
    %v302 = vld [vmem:[#allocation8 + $0x5b8] sm:$0xff]
    %v303 = vld [vmem:[#allocation8 + $0x5c0] sm:$0xf]
    %v304 = vld [vmem:[#allocation8 + $0x5c4] sm:$0xff]
    %v305 = vld [vmem:[#allocation8 + $0x5cc] sm:$0xff]
    %v306 = vld [vmem:[#allocation8 + $0x5d4] sm:$0xff]
    %v307 = vld [vmem:[#allocation8 + $0x5dc] sm:$0xff]
    %v308 = vld [vmem:[#allocation8 + $0x5e4] sm:$0xf]
    %v309 = vld [vmem:[#allocation8 + $0x5e8] sm:$0xff]
    %v310 = vld [vmem:[#allocation8 + $0x5f0] sm:$0xff]
    %v311 = vld [vmem:[#allocation8 + $0x5f8] sm:$0xff]
    %v312 = vld [vmem:[#allocation8 + $0x600] sm:$0xff]
    %v313 = vld [vmem:[#allocation8 + $0x608] sm:$0xf]
    %v314 = vld [vmem:[#allocation8 + $0x60c] sm:$0xff]
    %v315 = vld [vmem:[#allocation8 + $0x614] sm:$0xff]
    %v316 = vld [vmem:[#allocation8 + $0x61c] sm:$0xff]
    %v317 = vld [vmem:[#allocation8 + $0x624] sm:$0xff]
    %v318 = vld [vmem:[#allocation8 + $0x62c] sm:$0xf]
    %v319 = vld [vmem:[#allocation8 + $0x630] sm:$0xff]
    %v320 = vld [vmem:[#allocation8 + $0x638] sm:$0xff]
    %v321 = vld [vmem:[#allocation8 + $0x640] sm:$0xff]
    %v322 = vld [vmem:[#allocation8 + $0x648] sm:$0xff]
    %v323 = vld [vmem:[#allocation8 + $0x650] sm:$0xf]
    %v324 = vld [vmem:[#allocation8 + $0x654] sm:$0xff]
    %v325 = vld [vmem:[#allocation8 + $0x65c] sm:$0xff]
    %v326 = vld [vmem:[#allocation8 + $0x664] sm:$0xff]
    %v327 = vld [vmem:[#allocation8 + $0x66c] sm:$0xff]
    %v328 = vld [vmem:[#allocation8 + $0x674] sm:$0xf]
    %v329 = vld [vmem:[#allocation8 + $0x678] sm:$0xff]
    %v330 = vld [vmem:[#allocation8 + $0x680] sm:$0xff]
    %v331 = vld [vmem:[#allocation8 + $0x688] sm:$0xff]
    %v332 = vld [vmem:[#allocation8 + $0x690] sm:$0xff]
    %v333 = vld [vmem:[#allocation8 + $0x698] sm:$0xf]
    %v334 = vld [vmem:[#allocation8 + $0x69c] sm:$0xff]
    %v335 = vld [vmem:[#allocation8 + $0x6a4] sm:$0xff]
    %v336 = vld [vmem:[#allocation8 + $0x6ac] sm:$0xff]
    %v337 = vld [vmem:[#allocation8 + $0x6b4] sm:$0xff]
    %v338 = vld [vmem:[#allocation8 + $0x6bc] sm:$0xf]
    %v339 = vld [vmem:[#allocation8 + $0x6c0] sm:$0xff]
    %v340 = vld [vmem:[#allocation8 + $0x6c8] sm:$0xff]
    %v341 = vld [vmem:[#allocation8 + $0x6d0] sm:$0xff]
    %v342 = vld [vmem:[#allocation8 + $0x6d8] sm:$0xff]
    %v343 = vld [vmem:[#allocation8 + $0x6e0] sm:$0xf]
    %v344 = vld [vmem:[#allocation8 + $0x6e4] sm:$0xff]
    %v345 = vld [vmem:[#allocation8 + $0x6ec] sm:$0xff]
    %v346 = vld [vmem:[#allocation8 + $0x6f4] sm:$0xff]
    %v347 = vld [vmem:[#allocation8 + $0x6fc] sm:$0xff]
    %v348 = vld [vmem:[#allocation8 + $0x704] sm:$0xf]
    %v349 = vld [vmem:[#allocation8 + $0x708] sm:$0xff]
    %v350 = vld [vmem:[#allocation8 + $0x710] sm:$0xff]
    %v351 = vld [vmem:[#allocation8 + $0x718] sm:$0xff]
    %v352 = vld [vmem:[#allocation8 + $0x720] sm:$0xff]
    %v353 = vld [vmem:[#allocation8 + $0x728] sm:$0xf]
    %v354 = vld [vmem:[#allocation8 + $0x72c] sm:$0xff]
    %v355 = vld [vmem:[#allocation8 + $0x734] sm:$0xff]
    %v356 = vld [vmem:[#allocation8 + $0x73c] sm:$0xff]
    %v357 = vld [vmem:[#allocation8 + $0x744] sm:$0xff]
    %v358 = vld [vmem:[#allocation8 + $0x74c] sm:$0xf]
    %v359 = vld [vmem:[#allocation8 + $0x750] sm:$0xff]
    %v360 = vld [vmem:[#allocation8 + $0x758] sm:$0xff]
    %v361 = vld [vmem:[#allocation8 + $0x760] sm:$0xff]
    %v362 = vld [vmem:[#allocation8 + $0x768] sm:$0xff]
    %v363 = vld [vmem:[#allocation8 + $0x770] sm:$0xf]
    %v364 = vld [vmem:[#allocation8 + $0x774] sm:$0xff]
    %v365 = vld [vmem:[#allocation8 + $0x77c] sm:$0xff]
    %v366 = vld [vmem:[#allocation8 + $0x784] sm:$0xff]
    %v367 = vld [vmem:[#allocation8 + $0x78c] sm:$0xff]
    %v368 = vld [vmem:[#allocation8 + $0x794] sm:$0xf]
    %v369 = vld [vmem:[#allocation8 + $0x798] sm:$0xff]
    %v370 = vld [vmem:[#allocation8 + $0x7a0] sm:$0xff]
    %v371 = vld [vmem:[#allocation8 + $0x7a8] sm:$0xff]
    %v372 = vld [vmem:[#allocation8 + $0x7b0] sm:$0xff]
    %v373 = vld [vmem:[#allocation8 + $0x7b8] sm:$0xf]
    %v374 = vld [vmem:[#allocation8 + $0x7bc] sm:$0xff]
    %v375 = vld [vmem:[#allocation8 + $0x7c4] sm:$0xff]
    %v376 = vld [vmem:[#allocation8 + $0x7cc] sm:$0xff]
    %v377 = vld [vmem:[#allocation8 + $0x7d4] sm:$0xff]
    %v378 = vld [vmem:[#allocation8 + $0x7dc] sm:$0xf]
    %v379 = vld [vmem:[#allocation8 + $0x7e0] sm:$0xff]
    %v380 = vld [vmem:[#allocation8 + $0x7e8] sm:$0xff]
    %v381 = vld [vmem:[#allocation8 + $0x7f0] sm:$0xff]
    %v382 = vld [vmem:[#allocation8 + $0x7f8] sm:$0xff]
    %v383 = vld [vmem:[#allocation8 + $0x800] sm:$0xf]
    %v384 = vld [vmem:[#allocation8 + $0x804] sm:$0xff]
    %v385 = vld [vmem:[#allocation8 + $0x80c] sm:$0xff]
    %v386 = vld [vmem:[#allocation8 + $0x814] sm:$0xff]
    %v387 = vld [vmem:[#allocation8 + $0x81c] sm:$0xff]
    %v388 = vld [vmem:[#allocation8 + $0x824] sm:$0xf]
    %v389 = vld [vmem:[#allocation8 + $0x828] sm:$0xff]
    %v390 = vld [vmem:[#allocation8 + $0x830] sm:$0xff]
    %v391 = vld [vmem:[#allocation8 + $0x838] sm:$0xff]
    %v392 = vld [vmem:[#allocation8 + $0x840] sm:$0xff]
    %v393 = vld [vmem:[#allocation8 + $0x848] sm:$0xf]
    %v394 = vld [vmem:[#allocation8 + $0x84c] sm:$0xff]
    %v395 = vld [vmem:[#allocation8 + $0x854] sm:$0xff]
    %v396 = vld [vmem:[#allocation8 + $0x85c] sm:$0xff]
    %v397 = vld [vmem:[#allocation8 + $0x864] sm:$0xff]
    %v398 = vld [vmem:[#allocation8 + $0x86c] sm:$0xf]
    %v399 = vld [vmem:[#allocation8 + $0x870] sm:$0xff]
    %v400 = vld [vmem:[#allocation8 + $0x878] sm:$0xff]
    %v401 = vld [vmem:[#allocation8 + $0x880] sm:$0xff]
    %v402 = vld [vmem:[#allocation8 + $0x888] sm:$0xff]
    %v403 = vld [vmem:[#allocation8 + $0x890] sm:$0xf]
    %v404 = vld [vmem:[#allocation8 + $0x894] sm:$0xff]
    %v405 = vld [vmem:[#allocation8 + $0x89c] sm:$0xff]
    %v406 = vld [vmem:[#allocation8 + $0x8a4] sm:$0xff]
    %v407 = vld [vmem:[#allocation8 + $0x8ac] sm:$0xff]
    %v408 = vld [vmem:[#allocation8 + $0x8b4] sm:$0xf]
    %v409 = vld [vmem:[#allocation8 + $0x8b8] sm:$0xff]
    %v410 = vld [vmem:[#allocation8 + $0x8c0] sm:$0xff]
    %v411 = vld [vmem:[#allocation8 + $0x8c8] sm:$0xff]
    %v412 = vld [vmem:[#allocation8 + $0x8d0] sm:$0xff]
    %v413 = vld [vmem:[#allocation8 + $0x8d8] sm:$0xf]
    %v414 = vld [vmem:[#allocation8 + $0x8dc] sm:$0xff]
    %v415 = vld [vmem:[#allocation8 + $0x8e4] sm:$0xff]
    %v416 = vld [vmem:[#allocation8 + $0x8ec] sm:$0xff]
    %v417 = vld [vmem:[#allocation8 + $0x8f4] sm:$0xff]
    %v418 = vld [vmem:[#allocation8 + $0x8fc] sm:$0xf]
    %v419 = vld [vmem:[#allocation8 + $0x900] sm:$0xff]
    %v420 = vld [vmem:[#allocation8 + $0x908] sm:$0xff]
    %v421 = vld [vmem:[#allocation8 + $0x910] sm:$0xff]
    %v422 = vld [vmem:[#allocation8 + $0x918] sm:$0xff]
    %v423 = vld [vmem:[#allocation8 + $0x920] sm:$0xf]
    %v424 = vld [vmem:[#allocation8 + $0x924] sm:$0xff]
    %v425 = vld [vmem:[#allocation8 + $0x92c] sm:$0xff]
    %v426 = vld [vmem:[#allocation8 + $0x934] sm:$0xff]
    %v427 = vld [vmem:[#allocation8 + $0x93c] sm:$0xff]
    %v428 = vld [vmem:[#allocation8 + $0x944] sm:$0xf]
    %v429 = vld [vmem:[#allocation8 + $0x948] sm:$0xff]
    %v430 = vld [vmem:[#allocation8 + $0x950] sm:$0xff]
    %v431 = vld [vmem:[#allocation8 + $0x958] sm:$0xff]
    %v432 = vld [vmem:[#allocation8 + $0x960] sm:$0xff]
    %v433 = vld [vmem:[#allocation8 + $0x968] sm:$0xf]
    %v434 = vld [vmem:[#allocation8 + $0x96c] sm:$0xff]
    %v435 = vld [vmem:[#allocation8 + $0x974] sm:$0xff]
    %v436 = vld [vmem:[#allocation8 + $0x97c] sm:$0xff]
    %v437 = vld [vmem:[#allocation8 + $0x984] sm:$0xff]
    %v438 = vld [vmem:[#allocation8 + $0x98c] sm:$0xf]
    %v439 = vld [vmem:[#allocation8 + $0x990] sm:$0xff]
    %v440 = vld [vmem:[#allocation8 + $0x998] sm:$0xff]
    %v441 = vld [vmem:[#allocation8 + $0x9a0] sm:$0xff]
    %v442 = vld [vmem:[#allocation8 + $0x9a8] sm:$0xff]
    %v443 = vld [vmem:[#allocation8 + $0x9b0] sm:$0xf]
    %v444 = vld [vmem:[#allocation8 + $0x9b4] sm:$0xff]
    %v445 = vld [vmem:[#allocation8 + $0x9bc] sm:$0xff]
    %v446 = vld [vmem:[#allocation8 + $0x9c4] sm:$0xff]
    %v447 = vld [vmem:[#allocation8 + $0x9cc] sm:$0xff]
    %v448 = vld [vmem:[#allocation8 + $0x9d4] sm:$0xf]
    %v449 = vld [vmem:[#allocation8 + $0x9d8] sm:$0xff]
    %v450 = vld [vmem:[#allocation8 + $0x9e0] sm:$0xff]
    %v451 = vld [vmem:[#allocation8 + $0x9e8] sm:$0xff]
    %v452 = vld [vmem:[#allocation8 + $0x9f0] sm:$0xff]
    %v453 = vld [vmem:[#allocation8 + $0x9f8] sm:$0xf]
    %v454 = vld [vmem:[#allocation8 + $0x9fc] sm:$0xff]
    %v455 = vld [vmem:[#allocation8 + $0xa04] sm:$0xff]
    %v456 = vld [vmem:[#allocation8 + $0xa0c] sm:$0xff]
    %v457 = vld [vmem:[#allocation8 + $0xa14] sm:$0xff]
    %v458 = vld [vmem:[#allocation8 + $0xa1c] sm:$0xf]
    %v459 = vld [vmem:[#allocation8 + $0xa20] sm:$0xff]
    %v460 = vld [vmem:[#allocation8 + $0xa28] sm:$0xff]
    %v461 = vld [vmem:[#allocation8 + $0xa30] sm:$0xff]
    %v462 = vld [vmem:[#allocation8 + $0xa38] sm:$0xff]
    %v463 = vld [vmem:[#allocation8 + $0xa40] sm:$0xf]
    %v464 = vld [vmem:[#allocation8 + $0xa44] sm:$0xff]
    %v465 = vld [vmem:[#allocation8 + $0xa4c] sm:$0xff]
    %v466 = vld [vmem:[#allocation8 + $0xa54] sm:$0xff]
    %v467 = vld [vmem:[#allocation8 + $0xa5c] sm:$0xff]
    %v468 = vld [vmem:[#allocation8 + $0xa64] sm:$0xf]
    %v469 = vld [vmem:[#allocation8 + $0xa68] sm:$0xff]
    %v470 = vld [vmem:[#allocation8 + $0xa70] sm:$0xff]
    %v471 = vld [vmem:[#allocation8 + $0xa78] sm:$0xff]
    %v472 = vld [vmem:[#allocation8 + $0xa80] sm:$0xff]
    %v473 = vld [vmem:[#allocation8 + $0xa88] sm:$0xf]
    %v474 = vld [vmem:[#allocation8 + $0xa8c] sm:$0xff]
    %v475 = vld [vmem:[#allocation8 + $0xa94] sm:$0xff]
    %v476 = vld [vmem:[#allocation8 + $0xa9c] sm:$0xff]
    %v477 = vld [vmem:[#allocation8 + $0xaa4] sm:$0xff]
    %v478 = vld [vmem:[#allocation8 + $0xaac] sm:$0xf]
    %v479 = vld [vmem:[#allocation8 + $0xab0] sm:$0xff]
    %v480 = vld [vmem:[#allocation8 + $0xab8] sm:$0xff]
    %v481 = vld [vmem:[#allocation8 + $0xac0] sm:$0xff]
    %v482 = vld [vmem:[#allocation8 + $0xac8] sm:$0xff]
    %v483 = vld [vmem:[#allocation8 + $0xad0] sm:$0xf]
    %v484 = vld [vmem:[#allocation8 + $0xad4] sm:$0xff]
    %v485 = vld [vmem:[#allocation8 + $0xadc] sm:$0xff]
    %v486 = vld [vmem:[#allocation8 + $0xae4] sm:$0xff]
    %v487 = vld [vmem:[#allocation8 + $0xaec] sm:$0xff]
    %v488 = vld [vmem:[#allocation8 + $0xaf4] sm:$0xf]
    %v489 = vld [vmem:[#allocation8 + $0xaf8] sm:$0xff]
    %v490 = vld [vmem:[#allocation8 + $0xb00] sm:$0xff]
    %v491 = vld [vmem:[#allocation8 + $0xb08] sm:$0xff]
    %v492 = vld [vmem:[#allocation8 + $0xb10] sm:$0xff]
    %v493 = vld [vmem:[#allocation8 + $0xb18] sm:$0xf]
    %v494 = vld [vmem:[#allocation8 + $0xb1c] sm:$0xff]
    %v495 = vld [vmem:[#allocation8 + $0xb24] sm:$0xff]
    %v496 = vld [vmem:[#allocation8 + $0xb2c] sm:$0xff]
    %v497 = vld [vmem:[#allocation8 + $0xb34] sm:$0xff]
    %v498 = vld [vmem:[#allocation8 + $0xb3c] sm:$0xf]
    %v499 = vld [vmem:[#allocation8 + $0xb40] sm:$0xff]
    %v500 = vld [vmem:[#allocation8 + $0xb48] sm:$0xff]
    %v501 = vld [vmem:[#allocation8 + $0xb50] sm:$0xff]
    %v502 = vld [vmem:[#allocation8 + $0xb58] sm:$0xff]
    %v503 = vld [vmem:[#allocation8 + $0xb60] sm:$0xf]
    %v504 = vld [vmem:[#allocation8 + $0xb64] sm:$0xff]
    %v505 = vld [vmem:[#allocation8 + $0xb6c] sm:$0xff]
    %v506 = vld [vmem:[#allocation8 + $0xb74] sm:$0xff]
    %v507 = vld [vmem:[#allocation8 + $0xb7c] sm:$0xff]
    %v508 = vld [vmem:[#allocation8 + $0xb84] sm:$0xf]
    %v509 = vld [vmem:[#allocation8 + $0xb88] sm:$0xff]
    %v510 = vld [vmem:[#allocation8 + $0xb90] sm:$0xff]
    %v511 = vld [vmem:[#allocation8 + $0xb98] sm:$0xff]
    %v512 = vld [vmem:[#allocation8 + $0xba0] sm:$0xff]
    %v513 = vld [vmem:[#allocation8 + $0xba8] sm:$0xf]
    %v514 = vld [vmem:[#allocation8 + $0xbac] sm:$0xff]
    %v515 = vld [vmem:[#allocation8 + $0xbb4] sm:$0xff]
    %v516 = vld [vmem:[#allocation8 + $0xbbc] sm:$0xff]
    %v517 = vld [vmem:[#allocation8 + $0xbc4] sm:$0xff]
    %v518 = vld [vmem:[#allocation8 + $0xbcc] sm:$0xf]
    %v519 = vld [vmem:[#allocation8 + $0xbd0] sm:$0xff]
    %v520 = vld [vmem:[#allocation8 + $0xbd8] sm:$0xff]
    %v521 = vld [vmem:[#allocation8 + $0xbe0] sm:$0xff]
    %v522 = vld [vmem:[#allocation8 + $0xbe8] sm:$0xff]
    %v523 = vld [vmem:[#allocation8 + $0xbf0] sm:$0xf]
    %v524 = vld [vmem:[#allocation8 + $0xbf4] sm:$0xff]
    %v525 = vld [vmem:[#allocation8 + $0xbfc] sm:$0xff]
    %v526 = vld [vmem:[#allocation8 + $0xc04] sm:$0xff]
    %v527 = vld [vmem:[#allocation8 + $0xc0c] sm:$0xff]
    %v528 = vld [vmem:[#allocation8 + $0xc14] sm:$0xf]
    %v529 = vld [vmem:[#allocation8 + $0xc18] sm:$0xff]
    %v530 = vld [vmem:[#allocation8 + $0xc20] sm:$0xff]
    %v531 = vld [vmem:[#allocation8 + $0xc28] sm:$0xff]
    %v532 = vld [vmem:[#allocation8 + $0xc30] sm:$0xff]
    %v533 = vld [vmem:[#allocation8 + $0xc38] sm:$0xf]
    %v534 = vld [vmem:[#allocation8 + $0xc3c] sm:$0xff]
    %v535 = vld [vmem:[#allocation8 + $0xc44] sm:$0xff]
    %v536 = vld [vmem:[#allocation8 + $0xc4c] sm:$0xff]
    %v537 = vld [vmem:[#allocation8 + $0xc54] sm:$0xff]
    %v538 = vld [vmem:[#allocation8 + $0xc5c] sm:$0xf]
    %v539 = vld [vmem:[#allocation8 + $0xc60] sm:$0xff]
    %v540 = vld [vmem:[#allocation8 + $0xc68] sm:$0xff]
    %v541 = vld [vmem:[#allocation8 + $0xc70] sm:$0xff]
    %v542 = vld [vmem:[#allocation8 + $0xc78] sm:$0xff]
    %v543 = vld [vmem:[#allocation8 + $0xc80] sm:$0xf]
    %v544 = vld [vmem:[#allocation8 + $0xc84] sm:$0xff]
    %v545 = vld [vmem:[#allocation8 + $0xc8c] sm:$0xff]
    %v546 = vld [vmem:[#allocation8 + $0xc94] sm:$0xff]
    %v547 = vld [vmem:[#allocation8 + $0xc9c] sm:$0xff]
    %v548 = vld [vmem:[#allocation8 + $0xca4] sm:$0xf]
    %v549 = vld [vmem:[#allocation8 + $0xca8] sm:$0xff]
    %v550 = vld [vmem:[#allocation8 + $0xcb0] sm:$0xff]
    %v551 = vld [vmem:[#allocation8 + $0xcb8] sm:$0xff]
    %v552 = vld [vmem:[#allocation8 + $0xcc0] sm:$0xff]
    %v553 = vld [vmem:[#allocation8 + $0xcc8] sm:$0xf]
    %v554 = vld [vmem:[#allocation8 + $0xccc] sm:$0xff]
    %v555 = vld [vmem:[#allocation8 + $0xcd4] sm:$0xff]
    %v556 = vld [vmem:[#allocation8 + $0xcdc] sm:$0xff]
    %v557 = vld [vmem:[#allocation8 + $0xce4] sm:$0xff]
    %v558 = vld [vmem:[#allocation8 + $0xcec] sm:$0xf]
    %v559 = vld [vmem:[#allocation8 + $0xcf0] sm:$0xff]
    %v560 = vld [vmem:[#allocation8 + $0xcf8] sm:$0xff]
    %v561 = vld [vmem:[#allocation8 + $0xd00] sm:$0xff]
    %v562 = vld [vmem:[#allocation8 + $0xd08] sm:$0xff]
    %v563 = vld [vmem:[#allocation8 + $0xd10] sm:$0xf]
    %v564 = vld [vmem:[#allocation8 + $0xd14] sm:$0xff]
    %v565 = vld [vmem:[#allocation8 + $0xd1c] sm:$0xff]
    %v566 = vld [vmem:[#allocation8 + $0xd24] sm:$0xff]
    %v567 = vld [vmem:[#allocation8 + $0xd2c] sm:$0xff]
    %v568 = vld [vmem:[#allocation8 + $0xd34] sm:$0xf]
    %v569 = vld [vmem:[#allocation8 + $0xd38] sm:$0xff]
    %v570 = vld [vmem:[#allocation8 + $0xd40] sm:$0xff]
    %v571 = vld [vmem:[#allocation8 + $0xd48] sm:$0xff]
    %v572 = vld [vmem:[#allocation8 + $0xd50] sm:$0xff]
    %v573 = vld [vmem:[#allocation8 + $0xd58] sm:$0xf]
    %v574 = vld [vmem:[#allocation8 + $0xd5c] sm:$0xff]
    %v575 = vld [vmem:[#allocation8 + $0xd64] sm:$0xff]
    %v576 = vld [vmem:[#allocation8 + $0xd6c] sm:$0xff]
    %v577 = vld [vmem:[#allocation8 + $0xd74] sm:$0xff]
    %v578 = vld [vmem:[#allocation8 + $0xd7c] sm:$0xf]
    %v579 = vld [vmem:[#allocation8 + $0xd80] sm:$0xff]
    %v580 = vld [vmem:[#allocation8 + $0xd88] sm:$0xff]
    %v581 = vld [vmem:[#allocation8 + $0xd90] sm:$0xff]
    %v582 = vld [vmem:[#allocation8 + $0xd98] sm:$0xff]
    %v583 = vld [vmem:[#allocation8 + $0xda0] sm:$0xf]
    %v584 = vld [vmem:[#allocation8 + $0xda4] sm:$0xff]
    %v585 = vld [vmem:[#allocation8 + $0xdac] sm:$0xff]
    %v586 = vld [vmem:[#allocation8 + $0xdb4] sm:$0xff]
    %v587 = vld [vmem:[#allocation8 + $0xdbc] sm:$0xff]
    %v588 = vld [vmem:[#allocation8 + $0xdc4] sm:$0xf]
    %v589 = vld [vmem:[#allocation8 + $0xdc8] sm:$0xff]
    %v590 = vld [vmem:[#allocation8 + $0xdd0] sm:$0xff]
    %v591 = vld [vmem:[#allocation8 + $0xdd8] sm:$0xff]
    %v592 = vld [vmem:[#allocation8 + $0xde0] sm:$0xff]
    %v593 = vld [vmem:[#allocation8 + $0xde8] sm:$0xf]
    %v594 = vld [vmem:[#allocation8 + $0xdec] sm:$0xff]
    %v595 = vld [vmem:[#allocation8 + $0xdf4] sm:$0xff]
    %v596 = vld [vmem:[#allocation8 + $0xdfc] sm:$0xff]
    %v597 = vld [vmem:[#allocation8 + $0xe04] sm:$0xff]
    %v598 = vld [vmem:[#allocation8 + $0xe0c] sm:$0xf]
    %v599 = vld [vmem:[#allocation8 + $0xe10] sm:$0xff]
    %v600 = vld [vmem:[#allocation8 + $0xe18] sm:$0xff]
    %v601 = vld [vmem:[#allocation8 + $0xe20] sm:$0xff]
    %v602 = vld [vmem:[#allocation8 + $0xe28] sm:$0xff]
    %v603 = vld [vmem:[#allocation8 + $0xe30] sm:$0xf]
    %v604 = vld [vmem:[#allocation8 + $0xe34] sm:$0xff]
    %v605 = vld [vmem:[#allocation8 + $0xe3c] sm:$0xff]
    %v606 = vld [vmem:[#allocation8 + $0xe44] sm:$0xff]
    %v607 = vld [vmem:[#allocation8 + $0xe4c] sm:$0xff]
    %v608 = vld [vmem:[#allocation8 + $0xe54] sm:$0xf]
    %v609 = vld [vmem:[#allocation8 + $0xe58] sm:$0xff]
    %v610 = vld [vmem:[#allocation8 + $0xe60] sm:$0xff]
    %v611 = vld [vmem:[#allocation8 + $0xe68] sm:$0xff]
    %v612 = vld [vmem:[#allocation8 + $0xe70] sm:$0xff]
    %v613 = vld [vmem:[#allocation8 + $0xe78] sm:$0xf]
    %v614 = vld [vmem:[#allocation8 + $0xe7c] sm:$0xff]
    %v615 = vld [vmem:[#allocation8 + $0xe84] sm:$0xff]
    %v616 = vld [vmem:[#allocation8 + $0xe8c] sm:$0xff]
    %v617 = vld [vmem:[#allocation8 + $0xe94] sm:$0xff]
    %v618 = vld [vmem:[#allocation8 + $0xe9c] sm:$0xf]
    %v619 = vld [vmem:[#allocation8 + $0xea0] sm:$0xff]
    %v620 = vld [vmem:[#allocation8 + $0xea8] sm:$0xff]
    %v621 = vld [vmem:[#allocation8 + $0xeb0] sm:$0xff]
    %v622 = vld [vmem:[#allocation8 + $0xeb8] sm:$0xff]
    %v623 = vld [vmem:[#allocation8 + $0xec0] sm:$0xf]
    %v624 = vld [vmem:[#allocation8 + $0xec4] sm:$0xff]
    %v625 = vld [vmem:[#allocation8 + $0xecc] sm:$0xff]
    %v626 = vld [vmem:[#allocation8 + $0xed4] sm:$0xff]
    %v627 = vld [vmem:[#allocation8 + $0xedc] sm:$0xff]
    %v628 = vld [vmem:[#allocation8 + $0xee4] sm:$0xf]
    %v629 = vld [vmem:[#allocation8 + $0xee8] sm:$0xff]
    %v630 = vld [vmem:[#allocation8 + $0xef0] sm:$0xff]
    %v631 = vld [vmem:[#allocation8 + $0xef8] sm:$0xff]
    %v632 = vld [vmem:[#allocation8 + $0xf00] sm:$0xff]
    %v633 = vld [vmem:[#allocation8 + $0xf08] sm:$0xf]
    %v634 = vld [vmem:[#allocation8 + $0xf0c] sm:$0xff]
    %v635 = vld [vmem:[#allocation8 + $0xf14] sm:$0xff]
    %v636 = vld [vmem:[#allocation8 + $0xf1c] sm:$0xff]
    %v637 = vld [vmem:[#allocation8 + $0xf24] sm:$0xff]
    %v638 = vld [vmem:[#allocation8 + $0xf2c] sm:$0xf]
    %v639 = vld [vmem:[#allocation8 + $0xf30] sm:$0xff]
    %v640 = vld [vmem:[#allocation8 + $0xf38] sm:$0xff]
    %v641 = vld [vmem:[#allocation8 + $0xf40] sm:$0xff]
    %v642 = vld [vmem:[#allocation8 + $0xf48] sm:$0xff]
    %v643 = vld [vmem:[#allocation8 + $0xf50] sm:$0xf]
    %v644 = vld [vmem:[#allocation8 + $0xf54] sm:$0xff]
    %v645 = vld [vmem:[#allocation8 + $0xf5c] sm:$0xff]
    %v646 = vld [vmem:[#allocation8 + $0xf64] sm:$0xff]
    %v647 = vld [vmem:[#allocation8 + $0xf6c] sm:$0xff]
    %v648 = vld [vmem:[#allocation8 + $0xf74] sm:$0xf]
    %v649 = vld [vmem:[#allocation8 + $0xf78] sm:$0xff]
    %v650 = vld [vmem:[#allocation8 + $0xf80] sm:$0xff]
    %v651 = vld [vmem:[#allocation8 + $0xf88] sm:$0xff]
    %v652 = vld [vmem:[#allocation8 + $0xf90] sm:$0xff]
    %v653 = vld [vmem:[#allocation8 + $0xf98] sm:$0xf]
    %v654 = vld [vmem:[#allocation8 + $0xf9c] sm:$0xff]
    %v655 = vld [vmem:[#allocation8 + $0xfa4] sm:$0xff]
    %v656 = vld [vmem:[#allocation8 + $0xfac] sm:$0xff]
    %v657 = vld [vmem:[#allocation8 + $0xfb4] sm:$0xff]
    %v658 = vld [vmem:[#allocation8 + $0xfbc] sm:$0xf]
    %v659 = vld [vmem:[#allocation8 + $0xfc0] sm:$0xff]
    %v660 = vld [vmem:[#allocation8 + $0xfc8] sm:$0xff]
    %v661 = vld [vmem:[#allocation8 + $0xfd0] sm:$0xff]
    %v662 = vld [vmem:[#allocation8 + $0xfd8] sm:$0xff]
    %v663 = vld [vmem:[#allocation8 + $0xfe0] sm:$0xf]
    %v664 = vld [vmem:[#allocation8 + $0xfe4] sm:$0xff]
    %v665 = vld [vmem:[#allocation8 + $0xfec] sm:$0xff]
    %v666 = vld [vmem:[#allocation8 + $0xff4] sm:$0xff]
    %v667 = vld [vmem:[#allocation8 + $0xffc] sm:$0xff]
    %v668 = vld [vmem:[#allocation8 + $0x1004] sm:$0xf]
    %v669 = vld [vmem:[#allocation8 + $0x1008] sm:$0xff]
    %v670 = vld [vmem:[#allocation8 + $0x1010] sm:$0xff]
    %v671 = vld [vmem:[#allocation8 + $0x1018] sm:$0xff]
    %v672 = vld [vmem:[#allocation8 + $0x1020] sm:$0xff]
    %v673 = vld [vmem:[#allocation8 + $0x1028] sm:$0xf]
    %v674 = vld [vmem:[#allocation8 + $0x102c] sm:$0xff]
    %v675 = vld [vmem:[#allocation8 + $0x1034] sm:$0xff]
    %v676 = vld [vmem:[#allocation8 + $0x103c] sm:$0xff]
    %v677 = vld [vmem:[#allocation8 + $0x1044] sm:$0xff]
    %v678 = vld [vmem:[#allocation8 + $0x104c] sm:$0xf]
    %v679 = vld [vmem:[#allocation8 + $0x1050] sm:$0xff]
    %v680 = vld [vmem:[#allocation8 + $0x1058] sm:$0xff]
    %v681 = vld [vmem:[#allocation8 + $0x1060] sm:$0xff]
    %v682 = vld [vmem:[#allocation8 + $0x1068] sm:$0xff]
    %v683 = vld [vmem:[#allocation8 + $0x1070] sm:$0xf]
    %v684 = vld [vmem:[#allocation8 + $0x1074] sm:$0xff]
    %v685 = vld [vmem:[#allocation8 + $0x107c] sm:$0xff]
    %v686 = vld [vmem:[#allocation8 + $0x1084] sm:$0xff]
    %v687 = vld [vmem:[#allocation8 + $0x108c] sm:$0xff]
    %v688 = vld [vmem:[#allocation8 + $0x1094] sm:$0xf]
    %v689 = vld [vmem:[#allocation8 + $0x1098] sm:$0xff]
    %v690 = vld [vmem:[#allocation8 + $0x10a0] sm:$0xff]
    %v691 = vld [vmem:[#allocation8 + $0x10a8] sm:$0xff]
    %v692 = vld [vmem:[#allocation8 + $0x10b0] sm:$0xff]
    %v693 = vld [vmem:[#allocation8 + $0x10b8] sm:$0xf]
    %v694 = vld [vmem:[#allocation8 + $0x10bc] sm:$0xff]
    %v695 = vld [vmem:[#allocation8 + $0x10c4] sm:$0xff]
    %v696 = vld [vmem:[#allocation8 + $0x10cc] sm:$0xff]
    %v697 = vld [vmem:[#allocation8 + $0x10d4] sm:$0xff]
    %v698 = vld [vmem:[#allocation8 + $0x10dc] sm:$0xf]
    %v699 = vld [vmem:[#allocation8 + $0x10e0] sm:$0xff]
    %v700 = vld [vmem:[#allocation8 + $0x10e8] sm:$0xff]
    %v701 = vld [vmem:[#allocation8 + $0x10f0] sm:$0xff]
    %v702 = vld [vmem:[#allocation8 + $0x10f8] sm:$0xff]
    %v703 = vld [vmem:[#allocation8 + $0x1100] sm:$0xf]
    %v704 = vld [vmem:[#allocation8 + $0x1104] sm:$0xff]
    %v705 = vld [vmem:[#allocation8 + $0x110c] sm:$0xff]
    %v706 = vld [vmem:[#allocation8 + $0x1114] sm:$0xff]
    %v707 = vld [vmem:[#allocation8 + $0x111c] sm:$0xff]
    %v708 = vld [vmem:[#allocation8 + $0x1124] sm:$0xf]
    %v709 = vld [vmem:[#allocation8 + $0x1128] sm:$0xff]
    %v710 = vld [vmem:[#allocation8 + $0x1130] sm:$0xff]
    %v711 = vld [vmem:[#allocation8 + $0x1138] sm:$0xff]
    %v712 = vld [vmem:[#allocation8 + $0x1140] sm:$0xff]
    %v713 = vld [vmem:[#allocation8 + $0x1148] sm:$0xf]
    %v714 = vld [vmem:[#allocation8 + $0x114c] sm:$0xff]
    %v715 = vld [vmem:[#allocation8 + $0x1154] sm:$0xff]
    %v716 = vld [vmem:[#allocation8 + $0x115c] sm:$0xff]
    %v717 = vld [vmem:[#allocation8 + $0x1164] sm:$0xff]
    %v718 = vld [vmem:[#allocation8 + $0x116c] sm:$0xf]
    %v719 = vld [vmem:[#allocation8 + $0x1170] sm:$0xff]
    %v720 = vld [vmem:[#allocation8 + $0x1178] sm:$0xff]
    %v721 = vld [vmem:[#allocation8 + $0x1180] sm:$0xff]
    %v722 = vld [vmem:[#allocation8 + $0x1188] sm:$0xff]
    %v723 = vld [vmem:[#allocation8 + $0x1190] sm:$0xf]
    %v724 = vld [vmem:[#allocation8 + $0x1194] sm:$0xff]
    %v725 = vld [vmem:[#allocation8 + $0x119c] sm:$0xff]
    %v726 = vld [vmem:[#allocation8 + $0x11a4] sm:$0xff]
    %v727 = vld [vmem:[#allocation8 + $0x11ac] sm:$0xff]
    %v728 = vld [vmem:[#allocation8 + $0x11b4] sm:$0xf]
    %v729 = vld [vmem:[#allocation8 + $0x11b8] sm:$0xff]
    %v730 = vld [vmem:[#allocation8 + $0x11c0] sm:$0xff]
    %v731 = vld [vmem:[#allocation8 + $0x11c8] sm:$0xff]
    %v732 = vld [vmem:[#allocation8 + $0x11d0] sm:$0xff]
    %v733 = vld [vmem:[#allocation8 + $0x11d8] sm:$0xf]
    %v734 = vld [vmem:[#allocation8 + $0x11dc] sm:$0xff]
    %v735 = vld [vmem:[#allocation8 + $0x11e4] sm:$0xff]
    %v736 = vld [vmem:[#allocation8 + $0x11ec] sm:$0xff]
    %v737 = vld [vmem:[#allocation8 + $0x11f4] sm:$0xff]
    %v738 = vld [vmem:[#allocation8 + $0x11fc] sm:$0xf]
    %v739 = vld [vmem:[#allocation8 + $0x1200] sm:$0xff]
    %v740 = vld [vmem:[#allocation8 + $0x1208] sm:$0xff]
    %v741 = vld [vmem:[#allocation8 + $0x1210] sm:$0xff]
    %v742 = vld [vmem:[#allocation8 + $0x1218] sm:$0xff]
    %v743 = vld [vmem:[#allocation8 + $0x1220] sm:$0xf]
    %v744 = vld [vmem:[#allocation8 + $0x1224] sm:$0xff]
    %v745 = vld [vmem:[#allocation8 + $0x122c] sm:$0xff]
    %v746 = vld [vmem:[#allocation8 + $0x1234] sm:$0xff]
    %v747 = vld [vmem:[#allocation8 + $0x123c] sm:$0xff]
    %v748 = vld [vmem:[#allocation8 + $0x1244] sm:$0xf]
    %v749 = vld [vmem:[#allocation8 + $0x1248] sm:$0xff]
    %v750 = vld [vmem:[#allocation8 + $0x1250] sm:$0xff]
    %v751 = vld [vmem:[#allocation8 + $0x1258] sm:$0xff]
    %v752 = vld [vmem:[#allocation8 + $0x1260] sm:$0xff]
    %v753 = vld [vmem:[#allocation8 + $0x1268] sm:$0xf]
    %v754 = vld [vmem:[#allocation8 + $0x126c] sm:$0xff]
    %v755 = vld [vmem:[#allocation8 + $0x1274] sm:$0xff]
    %v756 = vld [vmem:[#allocation8 + $0x127c] sm:$0xff]
    %v757 = vld [vmem:[#allocation8 + $0x1284] sm:$0xff]
    %v758 = vld [vmem:[#allocation8 + $0x128c] sm:$0xf]
    %v759 = vld [vmem:[#allocation8 + $0x1290] sm:$0xff]
    %v760 = vld [vmem:[#allocation8 + $0x1298] sm:$0xff]
    %v761 = vld [vmem:[#allocation8 + $0x12a0] sm:$0xff]
    %v762 = vld [vmem:[#allocation8 + $0x12a8] sm:$0xff]
    %v763 = vld [vmem:[#allocation8 + $0x12b0] sm:$0xf]
    %v764 = vld [vmem:[#allocation8 + $0x12b4] sm:$0xff]
    %v765 = vld [vmem:[#allocation8 + $0x12bc] sm:$0xff]
    %v766 = vld [vmem:[#allocation8 + $0x12c4] sm:$0xff]
    %v767 = vld [vmem:[#allocation8 + $0x12cc] sm:$0xff]
    %v768 = vld [vmem:[#allocation8 + $0x12d4] sm:$0xf]
    %v769 = vld [vmem:[#allocation8 + $0x12d8] sm:$0xff]
    %v770 = vld [vmem:[#allocation8 + $0x12e0] sm:$0xff]
    %v771 = vld [vmem:[#allocation8 + $0x12e8] sm:$0xff]
    %v772 = vld [vmem:[#allocation8 + $0x12f0] sm:$0xff]
    %v773 = vld [vmem:[#allocation8 + $0x12f8] sm:$0xf]
    %v774 = vld [vmem:[#allocation8 + $0x12fc] sm:$0xff]
    %v775 = vld [vmem:[#allocation8 + $0x1304] sm:$0xff]
    %v776 = vld [vmem:[#allocation8 + $0x130c] sm:$0xff]
    %v777 = vld [vmem:[#allocation8 + $0x1314] sm:$0xff]
    %v778 = vld [vmem:[#allocation8 + $0x131c] sm:$0xf]
    %v779 = vld [vmem:[#allocation8 + $0x1320] sm:$0xff]
    %v780 = vld [vmem:[#allocation8 + $0x1328] sm:$0xff]
    %v781 = vld [vmem:[#allocation8 + $0x1330] sm:$0xff]
    %v782 = vld [vmem:[#allocation8 + $0x1338] sm:$0xff]
    %v783 = vld [vmem:[#allocation8 + $0x1340] sm:$0xf]
    %v784 = vld [vmem:[#allocation8 + $0x1344] sm:$0xff]
    %v785 = vld [vmem:[#allocation8 + $0x134c] sm:$0xff]
    %v786 = vld [vmem:[#allocation8 + $0x1354] sm:$0xff]
    %v787 = vld [vmem:[#allocation8 + $0x135c] sm:$0xff]
    %v788 = vld [vmem:[#allocation8 + $0x1364] sm:$0xf]
    %v789 = vld [vmem:[#allocation8 + $0x1368] sm:$0xff]
    %v790 = vld [vmem:[#allocation8 + $0x1370] sm:$0xff]
    %v791 = vld [vmem:[#allocation8 + $0x1378] sm:$0xff]
    %v792 = vld [vmem:[#allocation8 + $0x1380] sm:$0xff]
    %v793 = vld [vmem:[#allocation8 + $0x1388] sm:$0xf]
    %v794 = vld [vmem:[#allocation8 + $0x138c] sm:$0xff]
    %v795 = vld [vmem:[#allocation8 + $0x1394] sm:$0xff]
    %v796 = vld [vmem:[#allocation8 + $0x139c] sm:$0xff]
    %v797 = vld [vmem:[#allocation8 + $0x13a4] sm:$0xff]
    %v798 = vld [vmem:[#allocation8 + $0x13ac] sm:$0xf]
    %v799 = vld [vmem:[#allocation8 + $0x13b0] sm:$0xff]
    %v800 = vld [vmem:[#allocation8 + $0x13b8] sm:$0xff]
    %v801 = vld [vmem:[#allocation8 + $0x13c0] sm:$0xff]
    %v802 = vld [vmem:[#allocation8 + $0x13c8] sm:$0xff]
    %v803 = vld [vmem:[#allocation8 + $0x13d0] sm:$0xf]
    %v804 = vld [vmem:[#allocation8 + $0x13d4] sm:$0xff]
    %v805 = vld [vmem:[#allocation8 + $0x13dc] sm:$0xff]
    %v806 = vld [vmem:[#allocation8 + $0x13e4] sm:$0xff]
    %v807 = vld [vmem:[#allocation8 + $0x13ec] sm:$0xff]
    %v808 = vld [vmem:[#allocation8 + $0x13f4] sm:$0xf]
    %v809 = vld [vmem:[#allocation8 + $0x13f8] sm:$0xff]
    %v810 = vld [vmem:[#allocation8 + $0x1400] sm:$0xff]
    %v811 = vld [vmem:[#allocation8 + $0x1408] sm:$0xff]
    %v812 = vld [vmem:[#allocation8 + $0x1410] sm:$0xff]
    %v813 = vld [vmem:[#allocation8 + $0x1418] sm:$0xf]
    %v814 = vld [vmem:[#allocation8 + $0x141c] sm:$0xff]
    %v815 = vld [vmem:[#allocation8 + $0x1424] sm:$0xff]
    %v816 = vld [vmem:[#allocation8 + $0x142c] sm:$0xff]
    %v817 = vld [vmem:[#allocation8 + $0x1434] sm:$0xff]
    %v818 = vld [vmem:[#allocation8 + $0x143c] sm:$0xf]
    %v1539 = vunpack.c.l.b16 %v99
    %v1540 = vunpack.c.h.b16 %v99
    %v1541 = vunpack.c.l.b16 %v100
    %v1542 = vunpack.c.h.b16 %v100
    %v1543 = vunpack.c.l.b16 %v101
    %v1544 = vunpack.c.h.b16 %v101
    %v1545 = vunpack.c.l.b16 %v102
    %v1546 = vunpack.c.h.b16 %v102
    %v1547 = vunpack.c.l.b16 %v103
    %v1548 = vunpack.c.l.b16 %v104
    %v1549 = vunpack.c.h.b16 %v104
    %v1550 = vunpack.c.l.b16 %v105
    %v1551 = vunpack.c.h.b16 %v105
    %v1552 = vunpack.c.l.b16 %v106
    %v1553 = vunpack.c.h.b16 %v106
    %v1554 = vunpack.c.l.b16 %v107
    %v1555 = vunpack.c.h.b16 %v107
    %v1556 = vunpack.c.l.b16 %v108
    %v1557 = vunpack.c.l.b16 %v109
    %v1558 = vunpack.c.h.b16 %v109
    %v1559 = vunpack.c.l.b16 %v110
    %v1560 = vunpack.c.h.b16 %v110
    %v1561 = vunpack.c.l.b16 %v111
    %v1562 = vunpack.c.h.b16 %v111
    %v1563 = vunpack.c.l.b16 %v112
    %v1564 = vunpack.c.h.b16 %v112
    %v1565 = vunpack.c.l.b16 %v113
    %v1566 = vunpack.c.l.b16 %v114
    %v1567 = vunpack.c.h.b16 %v114
    %v1568 = vunpack.c.l.b16 %v115
    %v1569 = vunpack.c.h.b16 %v115
    %v1570 = vunpack.c.l.b16 %v116
    %v1571 = vunpack.c.h.b16 %v116
    %v1572 = vunpack.c.l.b16 %v117
    %v1573 = vunpack.c.h.b16 %v117
    %v1574 = vunpack.c.l.b16 %v118
    %v1575 = vunpack.c.l.b16 %v119
    %v1576 = vunpack.c.h.b16 %v119
    %v1577 = vunpack.c.l.b16 %v120
    %v1578 = vunpack.c.h.b16 %v120
    %v1579 = vunpack.c.l.b16 %v121
    %v1580 = vunpack.c.h.b16 %v121
    %v1581 = vunpack.c.l.b16 %v122
    %v1582 = vunpack.c.h.b16 %v122
    %v1583 = vunpack.c.l.b16 %v123
    %v1584 = vunpack.c.l.b16 %v124
    %v1585 = vunpack.c.h.b16 %v124
    %v1586 = vunpack.c.l.b16 %v125
    %v1587 = vunpack.c.h.b16 %v125
    %v1588 = vunpack.c.l.b16 %v126
    %v1589 = vunpack.c.h.b16 %v126
    %v1590 = vunpack.c.l.b16 %v127
    %v1591 = vunpack.c.h.b16 %v127
    %v1592 = vunpack.c.l.b16 %v128
    %v1593 = vunpack.c.l.b16 %v129
    %v1594 = vunpack.c.h.b16 %v129
    %v1595 = vunpack.c.l.b16 %v130
    %v1596 = vunpack.c.h.b16 %v130
    %v1597 = vunpack.c.l.b16 %v131
    %v1598 = vunpack.c.h.b16 %v131
    %v1599 = vunpack.c.l.b16 %v132
    %v1600 = vunpack.c.h.b16 %v132
    %v1601 = vunpack.c.l.b16 %v133
    %v1602 = vunpack.c.l.b16 %v134
    %v1603 = vunpack.c.h.b16 %v134
    %v1604 = vunpack.c.l.b16 %v135
    %v1605 = vunpack.c.h.b16 %v135
    %v1606 = vunpack.c.l.b16 %v136
    %v1607 = vunpack.c.h.b16 %v136
    %v1608 = vunpack.c.l.b16 %v137
    %v1609 = vunpack.c.h.b16 %v137
    %v1610 = vunpack.c.l.b16 %v138
    %v1611 = vunpack.c.l.b16 %v139
    %v1612 = vunpack.c.h.b16 %v139
    %v1613 = vunpack.c.l.b16 %v140
    %v1614 = vunpack.c.h.b16 %v140
    %v1615 = vunpack.c.l.b16 %v141
    %v1616 = vunpack.c.h.b16 %v141
    %v1617 = vunpack.c.l.b16 %v142
    %v1618 = vunpack.c.h.b16 %v142
    %v1619 = vunpack.c.l.b16 %v143
    %v1620 = vunpack.c.l.b16 %v144
    %v1621 = vunpack.c.h.b16 %v144
    %v1622 = vunpack.c.l.b16 %v145
    %v1623 = vunpack.c.h.b16 %v145
    %v1624 = vunpack.c.l.b16 %v146
    %v1625 = vunpack.c.h.b16 %v146
    %v1626 = vunpack.c.l.b16 %v147
    %v1627 = vunpack.c.h.b16 %v147
    %v1628 = vunpack.c.l.b16 %v148
    %v1629 = vunpack.c.l.b16 %v149
    %v1630 = vunpack.c.h.b16 %v149
    %v1631 = vunpack.c.l.b16 %v150
    %v1632 = vunpack.c.h.b16 %v150
    %v1633 = vunpack.c.l.b16 %v151
    %v1634 = vunpack.c.h.b16 %v151
    %v1635 = vunpack.c.l.b16 %v152
    %v1636 = vunpack.c.h.b16 %v152
    %v1637 = vunpack.c.l.b16 %v153
    %v1638 = vunpack.c.l.b16 %v154
    %v1639 = vunpack.c.h.b16 %v154
    %v1640 = vunpack.c.l.b16 %v155
    %v1641 = vunpack.c.h.b16 %v155
    %v1642 = vunpack.c.l.b16 %v156
    %v1643 = vunpack.c.h.b16 %v156
    %v1644 = vunpack.c.l.b16 %v157
    %v1645 = vunpack.c.h.b16 %v157
    %v1646 = vunpack.c.l.b16 %v158
    %v1647 = vunpack.c.l.b16 %v159
    %v1648 = vunpack.c.h.b16 %v159
    %v1649 = vunpack.c.l.b16 %v160
    %v1650 = vunpack.c.h.b16 %v160
    %v1651 = vunpack.c.l.b16 %v161
    %v1652 = vunpack.c.h.b16 %v161
    %v1653 = vunpack.c.l.b16 %v162
    %v1654 = vunpack.c.h.b16 %v162
    %v1655 = vunpack.c.l.b16 %v163
    %v1656 = vunpack.c.l.b16 %v164
    %v1657 = vunpack.c.h.b16 %v164
    %v1658 = vunpack.c.l.b16 %v165
    %v1659 = vunpack.c.h.b16 %v165
    %v1660 = vunpack.c.l.b16 %v166
    %v1661 = vunpack.c.h.b16 %v166
    %v1662 = vunpack.c.l.b16 %v167
    %v1663 = vunpack.c.h.b16 %v167
    %v1664 = vunpack.c.l.b16 %v168
    %v1665 = vunpack.c.l.b16 %v169
    %v1666 = vunpack.c.h.b16 %v169
    %v1667 = vunpack.c.l.b16 %v170
    %v1668 = vunpack.c.h.b16 %v170
    %v1669 = vunpack.c.l.b16 %v171
    %v1670 = vunpack.c.h.b16 %v171
    %v1671 = vunpack.c.l.b16 %v172
    %v1672 = vunpack.c.h.b16 %v172
    %v1673 = vunpack.c.l.b16 %v173
    %v1674 = vunpack.c.l.b16 %v174
    %v1675 = vunpack.c.h.b16 %v174
    %v1676 = vunpack.c.l.b16 %v175
    %v1677 = vunpack.c.h.b16 %v175
    %v1678 = vunpack.c.l.b16 %v176
    %v1679 = vunpack.c.h.b16 %v176
    %v1680 = vunpack.c.l.b16 %v177
    %v1681 = vunpack.c.h.b16 %v177
    %v1682 = vunpack.c.l.b16 %v178
    %v1683 = vunpack.c.l.b16 %v179
    %v1684 = vunpack.c.h.b16 %v179
    %v1685 = vunpack.c.l.b16 %v180
    %v1686 = vunpack.c.h.b16 %v180
    %v1687 = vunpack.c.l.b16 %v181
    %v1688 = vunpack.c.h.b16 %v181
    %v1689 = vunpack.c.l.b16 %v182
    %v1690 = vunpack.c.h.b16 %v182
    %v1691 = vunpack.c.l.b16 %v183
    %v1692 = vunpack.c.l.b16 %v184
    %v1693 = vunpack.c.h.b16 %v184
    %v1694 = vunpack.c.l.b16 %v185
    %v1695 = vunpack.c.h.b16 %v185
    %v1696 = vunpack.c.l.b16 %v186
    %v1697 = vunpack.c.h.b16 %v186
    %v1698 = vunpack.c.l.b16 %v187
    %v1699 = vunpack.c.h.b16 %v187
    %v1700 = vunpack.c.l.b16 %v188
    %v1701 = vunpack.c.l.b16 %v189
    %v1702 = vunpack.c.h.b16 %v189
    %v1703 = vunpack.c.l.b16 %v190
    %v1704 = vunpack.c.h.b16 %v190
    %v1705 = vunpack.c.l.b16 %v191
    %v1706 = vunpack.c.h.b16 %v191
    %v1707 = vunpack.c.l.b16 %v192
    %v1708 = vunpack.c.h.b16 %v192
    %v1709 = vunpack.c.l.b16 %v193
    %v1710 = vunpack.c.l.b16 %v194
    %v1711 = vunpack.c.h.b16 %v194
    %v1712 = vunpack.c.l.b16 %v195
    %v1713 = vunpack.c.h.b16 %v195
    %v1714 = vunpack.c.l.b16 %v196
    %v1715 = vunpack.c.h.b16 %v196
    %v1716 = vunpack.c.l.b16 %v197
    %v1717 = vunpack.c.h.b16 %v197
    %v1718 = vunpack.c.l.b16 %v198
    %v1719 = vunpack.c.l.b16 %v199
    %v1720 = vunpack.c.h.b16 %v199
    %v1721 = vunpack.c.l.b16 %v200
    %v1722 = vunpack.c.h.b16 %v200
    %v1723 = vunpack.c.l.b16 %v201
    %v1724 = vunpack.c.h.b16 %v201
    %v1725 = vunpack.c.l.b16 %v202
    %v1726 = vunpack.c.h.b16 %v202
    %v1727 = vunpack.c.l.b16 %v203
    %v1728 = vunpack.c.l.b16 %v204
    %v1729 = vunpack.c.h.b16 %v204
    %v1730 = vunpack.c.l.b16 %v205
    %v1731 = vunpack.c.h.b16 %v205
    %v1732 = vunpack.c.l.b16 %v206
    %v1733 = vunpack.c.h.b16 %v206
    %v1734 = vunpack.c.l.b16 %v207
    %v1735 = vunpack.c.h.b16 %v207
    %v1736 = vunpack.c.l.b16 %v208
    %v1737 = vunpack.c.l.b16 %v209
    %v1738 = vunpack.c.h.b16 %v209
    %v1739 = vunpack.c.l.b16 %v210
    %v1740 = vunpack.c.h.b16 %v210
    %v1741 = vunpack.c.l.b16 %v211
    %v1742 = vunpack.c.h.b16 %v211
    %v1743 = vunpack.c.l.b16 %v212
    %v1744 = vunpack.c.h.b16 %v212
    %v1745 = vunpack.c.l.b16 %v213
    %v1746 = vunpack.c.l.b16 %v214
    %v1747 = vunpack.c.h.b16 %v214
    %v1748 = vunpack.c.l.b16 %v215
    %v1749 = vunpack.c.h.b16 %v215
    %v1750 = vunpack.c.l.b16 %v216
    %v1751 = vunpack.c.h.b16 %v216
    %v1752 = vunpack.c.l.b16 %v217
    %v1753 = vunpack.c.h.b16 %v217
    %v1754 = vunpack.c.l.b16 %v218
    %v1755 = vunpack.c.l.b16 %v219
    %v1756 = vunpack.c.h.b16 %v219
    %v1757 = vunpack.c.l.b16 %v220
    %v1758 = vunpack.c.h.b16 %v220
    %v1759 = vunpack.c.l.b16 %v221
    %v1760 = vunpack.c.h.b16 %v221
    %v1761 = vunpack.c.l.b16 %v222
    %v1762 = vunpack.c.h.b16 %v222
    %v1763 = vunpack.c.l.b16 %v223
    %v1764 = vunpack.c.l.b16 %v224
    %v1765 = vunpack.c.h.b16 %v224
    %v1766 = vunpack.c.l.b16 %v225
    %v1767 = vunpack.c.h.b16 %v225
    %v1768 = vunpack.c.l.b16 %v226
    %v1769 = vunpack.c.h.b16 %v226
    %v1770 = vunpack.c.l.b16 %v227
    %v1771 = vunpack.c.h.b16 %v227
    %v1772 = vunpack.c.l.b16 %v228
    %v1773 = vunpack.c.l.b16 %v229
    %v1774 = vunpack.c.h.b16 %v229
    %v1775 = vunpack.c.l.b16 %v230
    %v1776 = vunpack.c.h.b16 %v230
    %v1777 = vunpack.c.l.b16 %v231
    %v1778 = vunpack.c.h.b16 %v231
    %v1779 = vunpack.c.l.b16 %v232
    %v1780 = vunpack.c.h.b16 %v232
    %v1781 = vunpack.c.l.b16 %v233
    %v1782 = vunpack.c.l.b16 %v234
    %v1783 = vunpack.c.h.b16 %v234
    %v1784 = vunpack.c.l.b16 %v235
    %v1785 = vunpack.c.h.b16 %v235
    %v1786 = vunpack.c.l.b16 %v236
    %v1787 = vunpack.c.h.b16 %v236
    %v1788 = vunpack.c.l.b16 %v237
    %v1789 = vunpack.c.h.b16 %v237
    %v1790 = vunpack.c.l.b16 %v238
    %v1791 = vunpack.c.l.b16 %v239
    %v1792 = vunpack.c.h.b16 %v239
    %v1793 = vunpack.c.l.b16 %v240
    %v1794 = vunpack.c.h.b16 %v240
    %v1795 = vunpack.c.l.b16 %v241
    %v1796 = vunpack.c.h.b16 %v241
    %v1797 = vunpack.c.l.b16 %v242
    %v1798 = vunpack.c.h.b16 %v242
    %v1799 = vunpack.c.l.b16 %v243
    %v1800 = vunpack.c.l.b16 %v244
    %v1801 = vunpack.c.h.b16 %v244
    %v1802 = vunpack.c.l.b16 %v245
    %v1803 = vunpack.c.h.b16 %v245
    %v1804 = vunpack.c.l.b16 %v246
    %v1805 = vunpack.c.h.b16 %v246
    %v1806 = vunpack.c.l.b16 %v247
    %v1807 = vunpack.c.h.b16 %v247
    %v1808 = vunpack.c.l.b16 %v248
    %v1809 = vunpack.c.l.b16 %v249
    %v1810 = vunpack.c.h.b16 %v249
    %v1811 = vunpack.c.l.b16 %v250
    %v1812 = vunpack.c.h.b16 %v250
    %v1813 = vunpack.c.l.b16 %v251
    %v1814 = vunpack.c.h.b16 %v251
    %v1815 = vunpack.c.l.b16 %v252
    %v1816 = vunpack.c.h.b16 %v252
    %v1817 = vunpack.c.l.b16 %v253
    %v1818 = vunpack.c.l.b16 %v254
    %v1819 = vunpack.c.h.b16 %v254
    %v1820 = vunpack.c.l.b16 %v255
    %v1821 = vunpack.c.h.b16 %v255
    %v1822 = vunpack.c.l.b16 %v256
    %v1823 = vunpack.c.h.b16 %v256
    %v1824 = vunpack.c.l.b16 %v257
    %v1825 = vunpack.c.h.b16 %v257
    %v1826 = vunpack.c.l.b16 %v258
    %v1827 = vunpack.c.l.b16 %v259
    %v1828 = vunpack.c.h.b16 %v259
    %v1829 = vunpack.c.l.b16 %v260
    %v1830 = vunpack.c.h.b16 %v260
    %v1831 = vunpack.c.l.b16 %v261
    %v1832 = vunpack.c.h.b16 %v261
    %v1833 = vunpack.c.l.b16 %v262
    %v1834 = vunpack.c.h.b16 %v262
    %v1835 = vunpack.c.l.b16 %v263
    %v1836 = vunpack.c.l.b16 %v264
    %v1837 = vunpack.c.h.b16 %v264
    %v1838 = vunpack.c.l.b16 %v265
    %v1839 = vunpack.c.h.b16 %v265
    %v1840 = vunpack.c.l.b16 %v266
    %v1841 = vunpack.c.h.b16 %v266
    %v1842 = vunpack.c.l.b16 %v267
    %v1843 = vunpack.c.h.b16 %v267
    %v1844 = vunpack.c.l.b16 %v268
    %v1845 = vunpack.c.l.b16 %v269
    %v1846 = vunpack.c.h.b16 %v269
    %v1847 = vunpack.c.l.b16 %v270
    %v1848 = vunpack.c.h.b16 %v270
    %v1849 = vunpack.c.l.b16 %v271
    %v1850 = vunpack.c.h.b16 %v271
    %v1851 = vunpack.c.l.b16 %v272
    %v1852 = vunpack.c.h.b16 %v272
    %v1853 = vunpack.c.l.b16 %v273
    %v1854 = vunpack.c.l.b16 %v274
    %v1855 = vunpack.c.h.b16 %v274
    %v1856 = vunpack.c.l.b16 %v275
    %v1857 = vunpack.c.h.b16 %v275
    %v1858 = vunpack.c.l.b16 %v276
    %v1859 = vunpack.c.h.b16 %v276
    %v1860 = vunpack.c.l.b16 %v277
    %v1861 = vunpack.c.h.b16 %v277
    %v1862 = vunpack.c.l.b16 %v278
    %v1863 = vunpack.c.l.b16 %v279
    %v1864 = vunpack.c.h.b16 %v279
    %v1865 = vunpack.c.l.b16 %v280
    %v1866 = vunpack.c.h.b16 %v280
    %v1867 = vunpack.c.l.b16 %v281
    %v1868 = vunpack.c.h.b16 %v281
    %v1869 = vunpack.c.l.b16 %v282
    %v1870 = vunpack.c.h.b16 %v282
    %v1871 = vunpack.c.l.b16 %v283
    %v1872 = vunpack.c.l.b16 %v284
    %v1873 = vunpack.c.h.b16 %v284
    %v1874 = vunpack.c.l.b16 %v285
    %v1875 = vunpack.c.h.b16 %v285
    %v1876 = vunpack.c.l.b16 %v286
    %v1877 = vunpack.c.h.b16 %v286
    %v1878 = vunpack.c.l.b16 %v287
    %v1879 = vunpack.c.h.b16 %v287
    %v1880 = vunpack.c.l.b16 %v288
    %v1881 = vunpack.c.l.b16 %v289
    %v1882 = vunpack.c.h.b16 %v289
    %v1883 = vunpack.c.l.b16 %v290
    %v1884 = vunpack.c.h.b16 %v290
    %v1885 = vunpack.c.l.b16 %v291
    %v1886 = vunpack.c.h.b16 %v291
    %v1887 = vunpack.c.l.b16 %v292
    %v1888 = vunpack.c.h.b16 %v292
    %v1889 = vunpack.c.l.b16 %v293
    %v1890 = vunpack.c.l.b16 %v294
    %v1891 = vunpack.c.h.b16 %v294
    %v1892 = vunpack.c.l.b16 %v295
    %v1893 = vunpack.c.h.b16 %v295
    %v1894 = vunpack.c.l.b16 %v296
    %v1895 = vunpack.c.h.b16 %v296
    %v1896 = vunpack.c.l.b16 %v297
    %v1897 = vunpack.c.h.b16 %v297
    %v1898 = vunpack.c.l.b16 %v298
    %v1899 = vunpack.c.l.b16 %v299
    %v1900 = vunpack.c.h.b16 %v299
    %v1901 = vunpack.c.l.b16 %v300
    %v1902 = vunpack.c.h.b16 %v300
    %v1903 = vunpack.c.l.b16 %v301
    %v1904 = vunpack.c.h.b16 %v301
    %v1905 = vunpack.c.l.b16 %v302
    %v1906 = vunpack.c.h.b16 %v302
    %v1907 = vunpack.c.l.b16 %v303
    %v1908 = vunpack.c.l.b16 %v304
    %v1909 = vunpack.c.h.b16 %v304
    %v1910 = vunpack.c.l.b16 %v305
    %v1911 = vunpack.c.h.b16 %v305
    %v1912 = vunpack.c.l.b16 %v306
    %v1913 = vunpack.c.h.b16 %v306
    %v1914 = vunpack.c.l.b16 %v307
    %v1915 = vunpack.c.h.b16 %v307
    %v1916 = vunpack.c.l.b16 %v308
    %v1917 = vunpack.c.l.b16 %v309
    %v1918 = vunpack.c.h.b16 %v309
    %v1919 = vunpack.c.l.b16 %v310
    %v1920 = vunpack.c.h.b16 %v310
    %v1921 = vunpack.c.l.b16 %v311
    %v1922 = vunpack.c.h.b16 %v311
    %v1923 = vunpack.c.l.b16 %v312
    %v1924 = vunpack.c.h.b16 %v312
    %v1925 = vunpack.c.l.b16 %v313
    %v1926 = vunpack.c.l.b16 %v314
    %v1927 = vunpack.c.h.b16 %v314
    %v1928 = vunpack.c.l.b16 %v315
    %v1929 = vunpack.c.h.b16 %v315
    %v1930 = vunpack.c.l.b16 %v316
    %v1931 = vunpack.c.h.b16 %v316
    %v1932 = vunpack.c.l.b16 %v317
    %v1933 = vunpack.c.h.b16 %v317
    %v1934 = vunpack.c.l.b16 %v318
    %v1935 = vunpack.c.l.b16 %v319
    %v1936 = vunpack.c.h.b16 %v319
    %v1937 = vunpack.c.l.b16 %v320
    %v1938 = vunpack.c.h.b16 %v320
    %v1939 = vunpack.c.l.b16 %v321
    %v1940 = vunpack.c.h.b16 %v321
    %v1941 = vunpack.c.l.b16 %v322
    %v1942 = vunpack.c.h.b16 %v322
    %v1943 = vunpack.c.l.b16 %v323
    %v1944 = vunpack.c.l.b16 %v324
    %v1945 = vunpack.c.h.b16 %v324
    %v1946 = vunpack.c.l.b16 %v325
    %v1947 = vunpack.c.h.b16 %v325
    %v1948 = vunpack.c.l.b16 %v326
    %v1949 = vunpack.c.h.b16 %v326
    %v1950 = vunpack.c.l.b16 %v327
    %v1951 = vunpack.c.h.b16 %v327
    %v1952 = vunpack.c.l.b16 %v328
    %v1953 = vunpack.c.l.b16 %v329
    %v1954 = vunpack.c.h.b16 %v329
    %v1955 = vunpack.c.l.b16 %v330
    %v1956 = vunpack.c.h.b16 %v330
    %v1957 = vunpack.c.l.b16 %v331
    %v1958 = vunpack.c.h.b16 %v331
    %v1959 = vunpack.c.l.b16 %v332
    %v1960 = vunpack.c.h.b16 %v332
    %v1961 = vunpack.c.l.b16 %v333
    %v1962 = vunpack.c.l.b16 %v334
    %v1963 = vunpack.c.h.b16 %v334
    %v1964 = vunpack.c.l.b16 %v335
    %v1965 = vunpack.c.h.b16 %v335
    %v1966 = vunpack.c.l.b16 %v336
    %v1967 = vunpack.c.h.b16 %v336
    %v1968 = vunpack.c.l.b16 %v337
    %v1969 = vunpack.c.h.b16 %v337
    %v1970 = vunpack.c.l.b16 %v338
    %v1971 = vunpack.c.l.b16 %v339
    %v1972 = vunpack.c.h.b16 %v339
    %v1973 = vunpack.c.l.b16 %v340
    %v1974 = vunpack.c.h.b16 %v340
    %v1975 = vunpack.c.l.b16 %v341
    %v1976 = vunpack.c.h.b16 %v341
    %v1977 = vunpack.c.l.b16 %v342
    %v1978 = vunpack.c.h.b16 %v342
    %v1979 = vunpack.c.l.b16 %v343
    %v1980 = vunpack.c.l.b16 %v344
    %v1981 = vunpack.c.h.b16 %v344
    %v1982 = vunpack.c.l.b16 %v345
    %v1983 = vunpack.c.h.b16 %v345
    %v1984 = vunpack.c.l.b16 %v346
    %v1985 = vunpack.c.h.b16 %v346
    %v1986 = vunpack.c.l.b16 %v347
    %v1987 = vunpack.c.h.b16 %v347
    %v1988 = vunpack.c.l.b16 %v348
    %v1989 = vunpack.c.l.b16 %v349
    %v1990 = vunpack.c.h.b16 %v349
    %v1991 = vunpack.c.l.b16 %v350
    %v1992 = vunpack.c.h.b16 %v350
    %v1993 = vunpack.c.l.b16 %v351
    %v1994 = vunpack.c.h.b16 %v351
    %v1995 = vunpack.c.l.b16 %v352
    %v1996 = vunpack.c.h.b16 %v352
    %v1997 = vunpack.c.l.b16 %v353
    %v1998 = vunpack.c.l.b16 %v354
    %v1999 = vunpack.c.h.b16 %v354
    %v2000 = vunpack.c.l.b16 %v355
    %v2001 = vunpack.c.h.b16 %v355
    %v2002 = vunpack.c.l.b16 %v356
    %v2003 = vunpack.c.h.b16 %v356
    %v2004 = vunpack.c.l.b16 %v357
    %v2005 = vunpack.c.h.b16 %v357
    %v2006 = vunpack.c.l.b16 %v358
    %v2007 = vunpack.c.l.b16 %v359
    %v2008 = vunpack.c.h.b16 %v359
    %v2009 = vunpack.c.l.b16 %v360
    %v2010 = vunpack.c.h.b16 %v360
    %v2011 = vunpack.c.l.b16 %v361
    %v2012 = vunpack.c.h.b16 %v361
    %v2013 = vunpack.c.l.b16 %v362
    %v2014 = vunpack.c.h.b16 %v362
    %v2015 = vunpack.c.l.b16 %v363
    %v2016 = vunpack.c.l.b16 %v364
    %v2017 = vunpack.c.h.b16 %v364
    %v2018 = vunpack.c.l.b16 %v365
    %v2019 = vunpack.c.h.b16 %v365
    %v2020 = vunpack.c.l.b16 %v366
    %v2021 = vunpack.c.h.b16 %v366
    %v2022 = vunpack.c.l.b16 %v367
    %v2023 = vunpack.c.h.b16 %v367
    %v2024 = vunpack.c.l.b16 %v368
    %v2025 = vunpack.c.l.b16 %v369
    %v2026 = vunpack.c.h.b16 %v369
    %v2027 = vunpack.c.l.b16 %v370
    %v2028 = vunpack.c.h.b16 %v370
    %v2029 = vunpack.c.l.b16 %v371
    %v2030 = vunpack.c.h.b16 %v371
    %v2031 = vunpack.c.l.b16 %v372
    %v2032 = vunpack.c.h.b16 %v372
    %v2033 = vunpack.c.l.b16 %v373
    %v2034 = vunpack.c.l.b16 %v374
    %v2035 = vunpack.c.h.b16 %v374
    %v2036 = vunpack.c.l.b16 %v375
    %v2037 = vunpack.c.h.b16 %v375
    %v2038 = vunpack.c.l.b16 %v376
    %v2039 = vunpack.c.h.b16 %v376
    %v2040 = vunpack.c.l.b16 %v377
    %v2041 = vunpack.c.h.b16 %v377
    %v2042 = vunpack.c.l.b16 %v378
    %v2043 = vunpack.c.l.b16 %v379
    %v2044 = vunpack.c.h.b16 %v379
    %v2045 = vunpack.c.l.b16 %v380
    %v2046 = vunpack.c.h.b16 %v380
    %v2047 = vunpack.c.l.b16 %v381
    %v2048 = vunpack.c.h.b16 %v381
    %v2049 = vunpack.c.l.b16 %v382
    %v2050 = vunpack.c.h.b16 %v382
    %v2051 = vunpack.c.l.b16 %v383
    %v2052 = vunpack.c.l.b16 %v384
    %v2053 = vunpack.c.h.b16 %v384
    %v2054 = vunpack.c.l.b16 %v385
    %v2055 = vunpack.c.h.b16 %v385
    %v2056 = vunpack.c.l.b16 %v386
    %v2057 = vunpack.c.h.b16 %v386
    %v2058 = vunpack.c.l.b16 %v387
    %v2059 = vunpack.c.h.b16 %v387
    %v2060 = vunpack.c.l.b16 %v388
    %v2061 = vunpack.c.l.b16 %v389
    %v2062 = vunpack.c.h.b16 %v389
    %v2063 = vunpack.c.l.b16 %v390
    %v2064 = vunpack.c.h.b16 %v390
    %v2065 = vunpack.c.l.b16 %v391
    %v2066 = vunpack.c.h.b16 %v391
    %v2067 = vunpack.c.l.b16 %v392
    %v2068 = vunpack.c.h.b16 %v392
    %v2069 = vunpack.c.l.b16 %v393
    %v2070 = vunpack.c.l.b16 %v394
    %v2071 = vunpack.c.h.b16 %v394
    %v2072 = vunpack.c.l.b16 %v395
    %v2073 = vunpack.c.h.b16 %v395
    %v2074 = vunpack.c.l.b16 %v396
    %v2075 = vunpack.c.h.b16 %v396
    %v2076 = vunpack.c.l.b16 %v397
    %v2077 = vunpack.c.h.b16 %v397
    %v2078 = vunpack.c.l.b16 %v398
    %v2079 = vunpack.c.l.b16 %v399
    %v2080 = vunpack.c.h.b16 %v399
    %v2081 = vunpack.c.l.b16 %v400
    %v2082 = vunpack.c.h.b16 %v400
    %v2083 = vunpack.c.l.b16 %v401
    %v2084 = vunpack.c.h.b16 %v401
    %v2085 = vunpack.c.l.b16 %v402
    %v2086 = vunpack.c.h.b16 %v402
    %v2087 = vunpack.c.l.b16 %v403
    %v2088 = vunpack.c.l.b16 %v404
    %v2089 = vunpack.c.h.b16 %v404
    %v2090 = vunpack.c.l.b16 %v405
    %v2091 = vunpack.c.h.b16 %v405
    %v2092 = vunpack.c.l.b16 %v406
    %v2093 = vunpack.c.h.b16 %v406
    %v2094 = vunpack.c.l.b16 %v407
    %v2095 = vunpack.c.h.b16 %v407
    %v2096 = vunpack.c.l.b16 %v408
    %v2097 = vunpack.c.l.b16 %v409
    %v2098 = vunpack.c.h.b16 %v409
    %v2099 = vunpack.c.l.b16 %v410
    %v2100 = vunpack.c.h.b16 %v410
    %v2101 = vunpack.c.l.b16 %v411
    %v2102 = vunpack.c.h.b16 %v411
    %v2103 = vunpack.c.l.b16 %v412
    %v2104 = vunpack.c.h.b16 %v412
    %v2105 = vunpack.c.l.b16 %v413
    %v2106 = vunpack.c.l.b16 %v414
    %v2107 = vunpack.c.h.b16 %v414
    %v2108 = vunpack.c.l.b16 %v415
    %v2109 = vunpack.c.h.b16 %v415
    %v2110 = vunpack.c.l.b16 %v416
    %v2111 = vunpack.c.h.b16 %v416
    %v2112 = vunpack.c.l.b16 %v417
    %v2113 = vunpack.c.h.b16 %v417
    %v2114 = vunpack.c.l.b16 %v418
    %v2115 = vunpack.c.l.b16 %v419
    %v2116 = vunpack.c.h.b16 %v419
    %v2117 = vunpack.c.l.b16 %v420
    %v2118 = vunpack.c.h.b16 %v420
    %v2119 = vunpack.c.l.b16 %v421
    %v2120 = vunpack.c.h.b16 %v421
    %v2121 = vunpack.c.l.b16 %v422
    %v2122 = vunpack.c.h.b16 %v422
    %v2123 = vunpack.c.l.b16 %v423
    %v2124 = vunpack.c.l.b16 %v424
    %v2125 = vunpack.c.h.b16 %v424
    %v2126 = vunpack.c.l.b16 %v425
    %v2127 = vunpack.c.h.b16 %v425
    %v2128 = vunpack.c.l.b16 %v426
    %v2129 = vunpack.c.h.b16 %v426
    %v2130 = vunpack.c.l.b16 %v427
    %v2131 = vunpack.c.h.b16 %v427
    %v2132 = vunpack.c.l.b16 %v428
    %v2133 = vunpack.c.l.b16 %v429
    %v2134 = vunpack.c.h.b16 %v429
    %v2135 = vunpack.c.l.b16 %v430
    %v2136 = vunpack.c.h.b16 %v430
    %v2137 = vunpack.c.l.b16 %v431
    %v2138 = vunpack.c.h.b16 %v431
    %v2139 = vunpack.c.l.b16 %v432
    %v2140 = vunpack.c.h.b16 %v432
    %v2141 = vunpack.c.l.b16 %v433
    %v2142 = vunpack.c.l.b16 %v434
    %v2143 = vunpack.c.h.b16 %v434
    %v2144 = vunpack.c.l.b16 %v435
    %v2145 = vunpack.c.h.b16 %v435
    %v2146 = vunpack.c.l.b16 %v436
    %v2147 = vunpack.c.h.b16 %v436
    %v2148 = vunpack.c.l.b16 %v437
    %v2149 = vunpack.c.h.b16 %v437
    %v2150 = vunpack.c.l.b16 %v438
    %v2151 = vunpack.c.l.b16 %v439
    %v2152 = vunpack.c.h.b16 %v439
    %v2153 = vunpack.c.l.b16 %v440
    %v2154 = vunpack.c.h.b16 %v440
    %v2155 = vunpack.c.l.b16 %v441
    %v2156 = vunpack.c.h.b16 %v441
    %v2157 = vunpack.c.l.b16 %v442
    %v2158 = vunpack.c.h.b16 %v442
    %v2159 = vunpack.c.l.b16 %v443
    %v2160 = vunpack.c.l.b16 %v444
    %v2161 = vunpack.c.h.b16 %v444
    %v2162 = vunpack.c.l.b16 %v445
    %v2163 = vunpack.c.h.b16 %v445
    %v2164 = vunpack.c.l.b16 %v446
    %v2165 = vunpack.c.h.b16 %v446
    %v2166 = vunpack.c.l.b16 %v447
    %v2167 = vunpack.c.h.b16 %v447
    %v2168 = vunpack.c.l.b16 %v448
    %v2169 = vunpack.c.l.b16 %v449
    %v2170 = vunpack.c.h.b16 %v449
    %v2171 = vunpack.c.l.b16 %v450
    %v2172 = vunpack.c.h.b16 %v450
    %v2173 = vunpack.c.l.b16 %v451
    %v2174 = vunpack.c.h.b16 %v451
    %v2175 = vunpack.c.l.b16 %v452
    %v2176 = vunpack.c.h.b16 %v452
    %v2177 = vunpack.c.l.b16 %v453
    %v2178 = vunpack.c.l.b16 %v454
    %v2179 = vunpack.c.h.b16 %v454
    %v2180 = vunpack.c.l.b16 %v455
    %v2181 = vunpack.c.h.b16 %v455
    %v2182 = vunpack.c.l.b16 %v456
    %v2183 = vunpack.c.h.b16 %v456
    %v2184 = vunpack.c.l.b16 %v457
    %v2185 = vunpack.c.h.b16 %v457
    %v2186 = vunpack.c.l.b16 %v458
    %v2187 = vunpack.c.l.b16 %v459
    %v2188 = vunpack.c.h.b16 %v459
    %v2189 = vunpack.c.l.b16 %v460
    %v2190 = vunpack.c.h.b16 %v460
    %v2191 = vunpack.c.l.b16 %v461
    %v2192 = vunpack.c.h.b16 %v461
    %v2193 = vunpack.c.l.b16 %v462
    %v2194 = vunpack.c.h.b16 %v462
    %v2195 = vunpack.c.l.b16 %v463
    %v2196 = vunpack.c.l.b16 %v464
    %v2197 = vunpack.c.h.b16 %v464
    %v2198 = vunpack.c.l.b16 %v465
    %v2199 = vunpack.c.h.b16 %v465
    %v2200 = vunpack.c.l.b16 %v466
    %v2201 = vunpack.c.h.b16 %v466
    %v2202 = vunpack.c.l.b16 %v467
    %v2203 = vunpack.c.h.b16 %v467
    %v2204 = vunpack.c.l.b16 %v468
    %v2205 = vunpack.c.l.b16 %v469
    %v2206 = vunpack.c.h.b16 %v469
    %v2207 = vunpack.c.l.b16 %v470
    %v2208 = vunpack.c.h.b16 %v470
    %v2209 = vunpack.c.l.b16 %v471
    %v2210 = vunpack.c.h.b16 %v471
    %v2211 = vunpack.c.l.b16 %v472
    %v2212 = vunpack.c.h.b16 %v472
    %v2213 = vunpack.c.l.b16 %v473
    %v2214 = vunpack.c.l.b16 %v474
    %v2215 = vunpack.c.h.b16 %v474
    %v2216 = vunpack.c.l.b16 %v475
    %v2217 = vunpack.c.h.b16 %v475
    %v2218 = vunpack.c.l.b16 %v476
    %v2219 = vunpack.c.h.b16 %v476
    %v2220 = vunpack.c.l.b16 %v477
    %v2221 = vunpack.c.h.b16 %v477
    %v2222 = vunpack.c.l.b16 %v478
    %v2223 = vunpack.c.l.b16 %v479
    %v2224 = vunpack.c.h.b16 %v479
    %v2225 = vunpack.c.l.b16 %v480
    %v2226 = vunpack.c.h.b16 %v480
    %v2227 = vunpack.c.l.b16 %v481
    %v2228 = vunpack.c.h.b16 %v481
    %v2229 = vunpack.c.l.b16 %v482
    %v2230 = vunpack.c.h.b16 %v482
    %v2231 = vunpack.c.l.b16 %v483
    %v2232 = vunpack.c.l.b16 %v484
    %v2233 = vunpack.c.h.b16 %v484
    %v2234 = vunpack.c.l.b16 %v485
    %v2235 = vunpack.c.h.b16 %v485
    %v2236 = vunpack.c.l.b16 %v486
    %v2237 = vunpack.c.h.b16 %v486
    %v2238 = vunpack.c.l.b16 %v487
    %v2239 = vunpack.c.h.b16 %v487
    %v2240 = vunpack.c.l.b16 %v488
    %v2241 = vunpack.c.l.b16 %v489
    %v2242 = vunpack.c.h.b16 %v489
    %v2243 = vunpack.c.l.b16 %v490
    %v2244 = vunpack.c.h.b16 %v490
    %v2245 = vunpack.c.l.b16 %v491
    %v2246 = vunpack.c.h.b16 %v491
    %v2247 = vunpack.c.l.b16 %v492
    %v2248 = vunpack.c.h.b16 %v492
    %v2249 = vunpack.c.l.b16 %v493
    %v2250 = vunpack.c.l.b16 %v494
    %v2251 = vunpack.c.h.b16 %v494
    %v2252 = vunpack.c.l.b16 %v495
    %v2253 = vunpack.c.h.b16 %v495
    %v2254 = vunpack.c.l.b16 %v496
    %v2255 = vunpack.c.h.b16 %v496
    %v2256 = vunpack.c.l.b16 %v497
    %v2257 = vunpack.c.h.b16 %v497
    %v2258 = vunpack.c.l.b16 %v498
    %v2259 = vunpack.c.l.b16 %v499
    %v2260 = vunpack.c.h.b16 %v499
    %v2261 = vunpack.c.l.b16 %v500
    %v2262 = vunpack.c.h.b16 %v500
    %v2263 = vunpack.c.l.b16 %v501
    %v2264 = vunpack.c.h.b16 %v501
    %v2265 = vunpack.c.l.b16 %v502
    %v2266 = vunpack.c.h.b16 %v502
    %v2267 = vunpack.c.l.b16 %v503
    %v2268 = vunpack.c.l.b16 %v504
    %v2269 = vunpack.c.h.b16 %v504
    %v2270 = vunpack.c.l.b16 %v505
    %v2271 = vunpack.c.h.b16 %v505
    %v2272 = vunpack.c.l.b16 %v506
    %v2273 = vunpack.c.h.b16 %v506
    %v2274 = vunpack.c.l.b16 %v507
    %v2275 = vunpack.c.h.b16 %v507
    %v2276 = vunpack.c.l.b16 %v508
    %v2277 = vunpack.c.l.b16 %v509
    %v2278 = vunpack.c.h.b16 %v509
    %v2279 = vunpack.c.l.b16 %v510
    %v2280 = vunpack.c.h.b16 %v510
    %v2281 = vunpack.c.l.b16 %v511
    %v2282 = vunpack.c.h.b16 %v511
    %v2283 = vunpack.c.l.b16 %v512
    %v2284 = vunpack.c.h.b16 %v512
    %v2285 = vunpack.c.l.b16 %v513
    %v2286 = vunpack.c.l.b16 %v514
    %v2287 = vunpack.c.h.b16 %v514
    %v2288 = vunpack.c.l.b16 %v515
    %v2289 = vunpack.c.h.b16 %v515
    %v2290 = vunpack.c.l.b16 %v516
    %v2291 = vunpack.c.h.b16 %v516
    %v2292 = vunpack.c.l.b16 %v517
    %v2293 = vunpack.c.h.b16 %v517
    %v2294 = vunpack.c.l.b16 %v518
    %v2295 = vunpack.c.l.b16 %v519
    %v2296 = vunpack.c.h.b16 %v519
    %v2297 = vunpack.c.l.b16 %v520
    %v2298 = vunpack.c.h.b16 %v520
    %v2299 = vunpack.c.l.b16 %v521
    %v2300 = vunpack.c.h.b16 %v521
    %v2301 = vunpack.c.l.b16 %v522
    %v2302 = vunpack.c.h.b16 %v522
    %v2303 = vunpack.c.l.b16 %v523
    %v2304 = vunpack.c.l.b16 %v524
    %v2305 = vunpack.c.h.b16 %v524
    %v2306 = vunpack.c.l.b16 %v525
    %v2307 = vunpack.c.h.b16 %v525
    %v2308 = vunpack.c.l.b16 %v526
    %v2309 = vunpack.c.h.b16 %v526
    %v2310 = vunpack.c.l.b16 %v527
    %v2311 = vunpack.c.h.b16 %v527
    %v2312 = vunpack.c.l.b16 %v528
    %v2313 = vunpack.c.l.b16 %v529
    %v2314 = vunpack.c.h.b16 %v529
    %v2315 = vunpack.c.l.b16 %v530
    %v2316 = vunpack.c.h.b16 %v530
    %v2317 = vunpack.c.l.b16 %v531
    %v2318 = vunpack.c.h.b16 %v531
    %v2319 = vunpack.c.l.b16 %v532
    %v2320 = vunpack.c.h.b16 %v532
    %v2321 = vunpack.c.l.b16 %v533
    %v2322 = vunpack.c.l.b16 %v534
    %v2323 = vunpack.c.h.b16 %v534
    %v2324 = vunpack.c.l.b16 %v535
    %v2325 = vunpack.c.h.b16 %v535
    %v2326 = vunpack.c.l.b16 %v536
    %v2327 = vunpack.c.h.b16 %v536
    %v2328 = vunpack.c.l.b16 %v537
    %v2329 = vunpack.c.h.b16 %v537
    %v2330 = vunpack.c.l.b16 %v538
    %v2331 = vunpack.c.l.b16 %v539
    %v2332 = vunpack.c.h.b16 %v539
    %v2333 = vunpack.c.l.b16 %v540
    %v2334 = vunpack.c.h.b16 %v540
    %v2335 = vunpack.c.l.b16 %v541
    %v2336 = vunpack.c.h.b16 %v541
    %v2337 = vunpack.c.l.b16 %v542
    %v2338 = vunpack.c.h.b16 %v542
    %v2339 = vunpack.c.l.b16 %v543
    %v2340 = vunpack.c.l.b16 %v544
    %v2341 = vunpack.c.h.b16 %v544
    %v2342 = vunpack.c.l.b16 %v545
    %v2343 = vunpack.c.h.b16 %v545
    %v2344 = vunpack.c.l.b16 %v546
    %v2345 = vunpack.c.h.b16 %v546
    %v2346 = vunpack.c.l.b16 %v547
    %v2347 = vunpack.c.h.b16 %v547
    %v2348 = vunpack.c.l.b16 %v548
    %v2349 = vunpack.c.l.b16 %v549
    %v2350 = vunpack.c.h.b16 %v549
    %v2351 = vunpack.c.l.b16 %v550
    %v2352 = vunpack.c.h.b16 %v550
    %v2353 = vunpack.c.l.b16 %v551
    %v2354 = vunpack.c.h.b16 %v551
    %v2355 = vunpack.c.l.b16 %v552
    %v2356 = vunpack.c.h.b16 %v552
    %v2357 = vunpack.c.l.b16 %v553
    %v2358 = vunpack.c.l.b16 %v554
    %v2359 = vunpack.c.h.b16 %v554
    %v2360 = vunpack.c.l.b16 %v555
    %v2361 = vunpack.c.h.b16 %v555
    %v2362 = vunpack.c.l.b16 %v556
    %v2363 = vunpack.c.h.b16 %v556
    %v2364 = vunpack.c.l.b16 %v557
    %v2365 = vunpack.c.h.b16 %v557
    %v2366 = vunpack.c.l.b16 %v558
    %v2367 = vunpack.c.l.b16 %v559
    %v2368 = vunpack.c.h.b16 %v559
    %v2369 = vunpack.c.l.b16 %v560
    %v2370 = vunpack.c.h.b16 %v560
    %v2371 = vunpack.c.l.b16 %v561
    %v2372 = vunpack.c.h.b16 %v561
    %v2373 = vunpack.c.l.b16 %v562
    %v2374 = vunpack.c.h.b16 %v562
    %v2375 = vunpack.c.l.b16 %v563
    %v2376 = vunpack.c.l.b16 %v564
    %v2377 = vunpack.c.h.b16 %v564
    %v2378 = vunpack.c.l.b16 %v565
    %v2379 = vunpack.c.h.b16 %v565
    %v2380 = vunpack.c.l.b16 %v566
    %v2381 = vunpack.c.h.b16 %v566
    %v2382 = vunpack.c.l.b16 %v567
    %v2383 = vunpack.c.h.b16 %v567
    %v2384 = vunpack.c.l.b16 %v568
    %v2385 = vunpack.c.l.b16 %v569
    %v2386 = vunpack.c.h.b16 %v569
    %v2387 = vunpack.c.l.b16 %v570
    %v2388 = vunpack.c.h.b16 %v570
    %v2389 = vunpack.c.l.b16 %v571
    %v2390 = vunpack.c.h.b16 %v571
    %v2391 = vunpack.c.l.b16 %v572
    %v2392 = vunpack.c.h.b16 %v572
    %v2393 = vunpack.c.l.b16 %v573
    %v2394 = vunpack.c.l.b16 %v574
    %v2395 = vunpack.c.h.b16 %v574
    %v2396 = vunpack.c.l.b16 %v575
    %v2397 = vunpack.c.h.b16 %v575
    %v2398 = vunpack.c.l.b16 %v576
    %v2399 = vunpack.c.h.b16 %v576
    %v2400 = vunpack.c.l.b16 %v577
    %v2401 = vunpack.c.h.b16 %v577
    %v2402 = vunpack.c.l.b16 %v578
    %v2403 = vunpack.c.l.b16 %v579
    %v2404 = vunpack.c.h.b16 %v579
    %v2405 = vunpack.c.l.b16 %v580
    %v2406 = vunpack.c.h.b16 %v580
    %v2407 = vunpack.c.l.b16 %v581
    %v2408 = vunpack.c.h.b16 %v581
    %v2409 = vunpack.c.l.b16 %v582
    %v2410 = vunpack.c.h.b16 %v582
    %v2411 = vunpack.c.l.b16 %v583
    %v2412 = vunpack.c.l.b16 %v584
    %v2413 = vunpack.c.h.b16 %v584
    %v2414 = vunpack.c.l.b16 %v585
    %v2415 = vunpack.c.h.b16 %v585
    %v2416 = vunpack.c.l.b16 %v586
    %v2417 = vunpack.c.h.b16 %v586
    %v2418 = vunpack.c.l.b16 %v587
    %v2419 = vunpack.c.h.b16 %v587
    %v2420 = vunpack.c.l.b16 %v588
    %v2421 = vunpack.c.l.b16 %v589
    %v2422 = vunpack.c.h.b16 %v589
    %v2423 = vunpack.c.l.b16 %v590
    %v2424 = vunpack.c.h.b16 %v590
    %v2425 = vunpack.c.l.b16 %v591
    %v2426 = vunpack.c.h.b16 %v591
    %v2427 = vunpack.c.l.b16 %v592
    %v2428 = vunpack.c.h.b16 %v592
    %v2429 = vunpack.c.l.b16 %v593
    %v2430 = vunpack.c.l.b16 %v594
    %v2431 = vunpack.c.h.b16 %v594
    %v2432 = vunpack.c.l.b16 %v595
    %v2433 = vunpack.c.h.b16 %v595
    %v2434 = vunpack.c.l.b16 %v596
    %v2435 = vunpack.c.h.b16 %v596
    %v2436 = vunpack.c.l.b16 %v597
    %v2437 = vunpack.c.h.b16 %v597
    %v2438 = vunpack.c.l.b16 %v598
    %v2439 = vunpack.c.l.b16 %v599
    %v2440 = vunpack.c.h.b16 %v599
    %v2441 = vunpack.c.l.b16 %v600
    %v2442 = vunpack.c.h.b16 %v600
    %v2443 = vunpack.c.l.b16 %v601
    %v2444 = vunpack.c.h.b16 %v601
    %v2445 = vunpack.c.l.b16 %v602
    %v2446 = vunpack.c.h.b16 %v602
    %v2447 = vunpack.c.l.b16 %v603
    %v2448 = vunpack.c.l.b16 %v604
    %v2449 = vunpack.c.h.b16 %v604
    %v2450 = vunpack.c.l.b16 %v605
    %v2451 = vunpack.c.h.b16 %v605
    %v2452 = vunpack.c.l.b16 %v606
    %v2453 = vunpack.c.h.b16 %v606
    %v2454 = vunpack.c.l.b16 %v607
    %v2455 = vunpack.c.h.b16 %v607
    %v2456 = vunpack.c.l.b16 %v608
    %v2457 = vunpack.c.l.b16 %v609
    %v2458 = vunpack.c.h.b16 %v609
    %v2459 = vunpack.c.l.b16 %v610
    %v2460 = vunpack.c.h.b16 %v610
    %v2461 = vunpack.c.l.b16 %v611
    %v2462 = vunpack.c.h.b16 %v611
    %v2463 = vunpack.c.l.b16 %v612
    %v2464 = vunpack.c.h.b16 %v612
    %v2465 = vunpack.c.l.b16 %v613
    %v2466 = vunpack.c.l.b16 %v614
    %v2467 = vunpack.c.h.b16 %v614
    %v2468 = vunpack.c.l.b16 %v615
    %v2469 = vunpack.c.h.b16 %v615
    %v2470 = vunpack.c.l.b16 %v616
    %v2471 = vunpack.c.h.b16 %v616
    %v2472 = vunpack.c.l.b16 %v617
    %v2473 = vunpack.c.h.b16 %v617
    %v2474 = vunpack.c.l.b16 %v618
    %v2475 = vunpack.c.l.b16 %v619
    %v2476 = vunpack.c.h.b16 %v619
    %v2477 = vunpack.c.l.b16 %v620
    %v2478 = vunpack.c.h.b16 %v620
    %v2479 = vunpack.c.l.b16 %v621
    %v2480 = vunpack.c.h.b16 %v621
    %v2481 = vunpack.c.l.b16 %v622
    %v2482 = vunpack.c.h.b16 %v622
    %v2483 = vunpack.c.l.b16 %v623
    %v2484 = vunpack.c.l.b16 %v624
    %v2485 = vunpack.c.h.b16 %v624
    %v2486 = vunpack.c.l.b16 %v625
    %v2487 = vunpack.c.h.b16 %v625
    %v2488 = vunpack.c.l.b16 %v626
    %v2489 = vunpack.c.h.b16 %v626
    %v2490 = vunpack.c.l.b16 %v627
    %v2491 = vunpack.c.h.b16 %v627
    %v2492 = vunpack.c.l.b16 %v628
    %v2493 = vunpack.c.l.b16 %v629
    %v2494 = vunpack.c.h.b16 %v629
    %v2495 = vunpack.c.l.b16 %v630
    %v2496 = vunpack.c.h.b16 %v630
    %v2497 = vunpack.c.l.b16 %v631
    %v2498 = vunpack.c.h.b16 %v631
    %v2499 = vunpack.c.l.b16 %v632
    %v2500 = vunpack.c.h.b16 %v632
    %v2501 = vunpack.c.l.b16 %v633
    %v2502 = vunpack.c.l.b16 %v634
    %v2503 = vunpack.c.h.b16 %v634
    %v2504 = vunpack.c.l.b16 %v635
    %v2505 = vunpack.c.h.b16 %v635
    %v2506 = vunpack.c.l.b16 %v636
    %v2507 = vunpack.c.h.b16 %v636
    %v2508 = vunpack.c.l.b16 %v637
    %v2509 = vunpack.c.h.b16 %v637
    %v2510 = vunpack.c.l.b16 %v638
    %v2511 = vunpack.c.l.b16 %v639
    %v2512 = vunpack.c.h.b16 %v639
    %v2513 = vunpack.c.l.b16 %v640
    %v2514 = vunpack.c.h.b16 %v640
    %v2515 = vunpack.c.l.b16 %v641
    %v2516 = vunpack.c.h.b16 %v641
    %v2517 = vunpack.c.l.b16 %v642
    %v2518 = vunpack.c.h.b16 %v642
    %v2519 = vunpack.c.l.b16 %v643
    %v2520 = vunpack.c.l.b16 %v644
    %v2521 = vunpack.c.h.b16 %v644
    %v2522 = vunpack.c.l.b16 %v645
    %v2523 = vunpack.c.h.b16 %v645
    %v2524 = vunpack.c.l.b16 %v646
    %v2525 = vunpack.c.h.b16 %v646
    %v2526 = vunpack.c.l.b16 %v647
    %v2527 = vunpack.c.h.b16 %v647
    %v2528 = vunpack.c.l.b16 %v648
    %v2529 = vunpack.c.l.b16 %v649
    %v2530 = vunpack.c.h.b16 %v649
    %v2531 = vunpack.c.l.b16 %v650
    %v2532 = vunpack.c.h.b16 %v650
    %v2533 = vunpack.c.l.b16 %v651
    %v2534 = vunpack.c.h.b16 %v651
    %v2535 = vunpack.c.l.b16 %v652
    %v2536 = vunpack.c.h.b16 %v652
    %v2537 = vunpack.c.l.b16 %v653
    %v2538 = vunpack.c.l.b16 %v654
    %v2539 = vunpack.c.h.b16 %v654
    %v2540 = vunpack.c.l.b16 %v655
    %v2541 = vunpack.c.h.b16 %v655
    %v2542 = vunpack.c.l.b16 %v656
    %v2543 = vunpack.c.h.b16 %v656
    %v2544 = vunpack.c.l.b16 %v657
    %v2545 = vunpack.c.h.b16 %v657
    %v2546 = vunpack.c.l.b16 %v658
    %v2547 = vunpack.c.l.b16 %v659
    %v2548 = vunpack.c.h.b16 %v659
    %v2549 = vunpack.c.l.b16 %v660
    %v2550 = vunpack.c.h.b16 %v660
    %v2551 = vunpack.c.l.b16 %v661
    %v2552 = vunpack.c.h.b16 %v661
    %v2553 = vunpack.c.l.b16 %v662
    %v2554 = vunpack.c.h.b16 %v662
    %v2555 = vunpack.c.l.b16 %v663
    %v2556 = vunpack.c.l.b16 %v664
    %v2557 = vunpack.c.h.b16 %v664
    %v2558 = vunpack.c.l.b16 %v665
    %v2559 = vunpack.c.h.b16 %v665
    %v2560 = vunpack.c.l.b16 %v666
    %v2561 = vunpack.c.h.b16 %v666
    %v2562 = vunpack.c.l.b16 %v667
    %v2563 = vunpack.c.h.b16 %v667
    %v2564 = vunpack.c.l.b16 %v668
    %v2565 = vunpack.c.l.b16 %v669
    %v2566 = vunpack.c.h.b16 %v669
    %v2567 = vunpack.c.l.b16 %v670
    %v2568 = vunpack.c.h.b16 %v670
    %v2569 = vunpack.c.l.b16 %v671
    %v2570 = vunpack.c.h.b16 %v671
    %v2571 = vunpack.c.l.b16 %v672
    %v2572 = vunpack.c.h.b16 %v672
    %v2573 = vunpack.c.l.b16 %v673
    %v2574 = vunpack.c.l.b16 %v674
    %v2575 = vunpack.c.h.b16 %v674
    %v2576 = vunpack.c.l.b16 %v675
    %v2577 = vunpack.c.h.b16 %v675
    %v2578 = vunpack.c.l.b16 %v676
    %v2579 = vunpack.c.h.b16 %v676
    %v2580 = vunpack.c.l.b16 %v677
    %v2581 = vunpack.c.h.b16 %v677
    %v2582 = vunpack.c.l.b16 %v678
    %v2583 = vunpack.c.l.b16 %v679
    %v2584 = vunpack.c.h.b16 %v679
    %v2585 = vunpack.c.l.b16 %v680
    %v2586 = vunpack.c.h.b16 %v680
    %v2587 = vunpack.c.l.b16 %v681
    %v2588 = vunpack.c.h.b16 %v681
    %v2589 = vunpack.c.l.b16 %v682
    %v2590 = vunpack.c.h.b16 %v682
    %v2591 = vunpack.c.l.b16 %v683
    %v2592 = vunpack.c.l.b16 %v684
    %v2593 = vunpack.c.h.b16 %v684
    %v2594 = vunpack.c.l.b16 %v685
    %v2595 = vunpack.c.h.b16 %v685
    %v2596 = vunpack.c.l.b16 %v686
    %v2597 = vunpack.c.h.b16 %v686
    %v2598 = vunpack.c.l.b16 %v687
    %v2599 = vunpack.c.h.b16 %v687
    %v2600 = vunpack.c.l.b16 %v688
    %v2601 = vunpack.c.l.b16 %v689
    %v2602 = vunpack.c.h.b16 %v689
    %v2603 = vunpack.c.l.b16 %v690
    %v2604 = vunpack.c.h.b16 %v690
    %v2605 = vunpack.c.l.b16 %v691
    %v2606 = vunpack.c.h.b16 %v691
    %v2607 = vunpack.c.l.b16 %v692
    %v2608 = vunpack.c.h.b16 %v692
    %v2609 = vunpack.c.l.b16 %v693
    %v2610 = vunpack.c.l.b16 %v694
    %v2611 = vunpack.c.h.b16 %v694
    %v2612 = vunpack.c.l.b16 %v695
    %v2613 = vunpack.c.h.b16 %v695
    %v2614 = vunpack.c.l.b16 %v696
    %v2615 = vunpack.c.h.b16 %v696
    %v2616 = vunpack.c.l.b16 %v697
    %v2617 = vunpack.c.h.b16 %v697
    %v2618 = vunpack.c.l.b16 %v698
    %v2619 = vunpack.c.l.b16 %v699
    %v2620 = vunpack.c.h.b16 %v699
    %v2621 = vunpack.c.l.b16 %v700
    %v2622 = vunpack.c.h.b16 %v700
    %v2623 = vunpack.c.l.b16 %v701
    %v2624 = vunpack.c.h.b16 %v701
    %v2625 = vunpack.c.l.b16 %v702
    %v2626 = vunpack.c.h.b16 %v702
    %v2627 = vunpack.c.l.b16 %v703
    %v2628 = vunpack.c.l.b16 %v704
    %v2629 = vunpack.c.h.b16 %v704
    %v2630 = vunpack.c.l.b16 %v705
    %v2631 = vunpack.c.h.b16 %v705
    %v2632 = vunpack.c.l.b16 %v706
    %v2633 = vunpack.c.h.b16 %v706
    %v2634 = vunpack.c.l.b16 %v707
    %v2635 = vunpack.c.h.b16 %v707
    %v2636 = vunpack.c.l.b16 %v708
    %v2637 = vunpack.c.l.b16 %v709
    %v2638 = vunpack.c.h.b16 %v709
    %v2639 = vunpack.c.l.b16 %v710
    %v2640 = vunpack.c.h.b16 %v710
    %v2641 = vunpack.c.l.b16 %v711
    %v2642 = vunpack.c.h.b16 %v711
    %v2643 = vunpack.c.l.b16 %v712
    %v2644 = vunpack.c.h.b16 %v712
    %v2645 = vunpack.c.l.b16 %v713
    %v2646 = vunpack.c.l.b16 %v714
    %v2647 = vunpack.c.h.b16 %v714
    %v2648 = vunpack.c.l.b16 %v715
    %v2649 = vunpack.c.h.b16 %v715
    %v2650 = vunpack.c.l.b16 %v716
    %v2651 = vunpack.c.h.b16 %v716
    %v2652 = vunpack.c.l.b16 %v717
    %v2653 = vunpack.c.h.b16 %v717
    %v2654 = vunpack.c.l.b16 %v718
    %v2655 = vunpack.c.l.b16 %v719
    %v2656 = vunpack.c.h.b16 %v719
    %v2657 = vunpack.c.l.b16 %v720
    %v2658 = vunpack.c.h.b16 %v720
    %v2659 = vunpack.c.l.b16 %v721
    %v2660 = vunpack.c.h.b16 %v721
    %v2661 = vunpack.c.l.b16 %v722
    %v2662 = vunpack.c.h.b16 %v722
    %v2663 = vunpack.c.l.b16 %v723
    %v2664 = vunpack.c.l.b16 %v724
    %v2665 = vunpack.c.h.b16 %v724
    %v2666 = vunpack.c.l.b16 %v725
    %v2667 = vunpack.c.h.b16 %v725
    %v2668 = vunpack.c.l.b16 %v726
    %v2669 = vunpack.c.h.b16 %v726
    %v2670 = vunpack.c.l.b16 %v727
    %v2671 = vunpack.c.h.b16 %v727
    %v2672 = vunpack.c.l.b16 %v728
    %v2673 = vunpack.c.l.b16 %v729
    %v2674 = vunpack.c.h.b16 %v729
    %v2675 = vunpack.c.l.b16 %v730
    %v2676 = vunpack.c.h.b16 %v730
    %v2677 = vunpack.c.l.b16 %v731
    %v2678 = vunpack.c.h.b16 %v731
    %v2679 = vunpack.c.l.b16 %v732
    %v2680 = vunpack.c.h.b16 %v732
    %v2681 = vunpack.c.l.b16 %v733
    %v2682 = vunpack.c.l.b16 %v734
    %v2683 = vunpack.c.h.b16 %v734
    %v2684 = vunpack.c.l.b16 %v735
    %v2685 = vunpack.c.h.b16 %v735
    %v2686 = vunpack.c.l.b16 %v736
    %v2687 = vunpack.c.h.b16 %v736
    %v2688 = vunpack.c.l.b16 %v737
    %v2689 = vunpack.c.h.b16 %v737
    %v2690 = vunpack.c.l.b16 %v738
    %v2691 = vunpack.c.l.b16 %v739
    %v2692 = vunpack.c.h.b16 %v739
    %v2693 = vunpack.c.l.b16 %v740
    %v2694 = vunpack.c.h.b16 %v740
    %v2695 = vunpack.c.l.b16 %v741
    %v2696 = vunpack.c.h.b16 %v741
    %v2697 = vunpack.c.l.b16 %v742
    %v2698 = vunpack.c.h.b16 %v742
    %v2699 = vunpack.c.l.b16 %v743
    %v2700 = vunpack.c.l.b16 %v744
    %v2701 = vunpack.c.h.b16 %v744
    %v2702 = vunpack.c.l.b16 %v745
    %v2703 = vunpack.c.h.b16 %v745
    %v2704 = vunpack.c.l.b16 %v746
    %v2705 = vunpack.c.h.b16 %v746
    %v2706 = vunpack.c.l.b16 %v747
    %v2707 = vunpack.c.h.b16 %v747
    %v2708 = vunpack.c.l.b16 %v748
    %v2709 = vunpack.c.l.b16 %v749
    %v2710 = vunpack.c.h.b16 %v749
    %v2711 = vunpack.c.l.b16 %v750
    %v2712 = vunpack.c.h.b16 %v750
    %v2713 = vunpack.c.l.b16 %v751
    %v2714 = vunpack.c.h.b16 %v751
    %v2715 = vunpack.c.l.b16 %v752
    %v2716 = vunpack.c.h.b16 %v752
    %v2717 = vunpack.c.l.b16 %v753
    %v2718 = vunpack.c.l.b16 %v754
    %v2719 = vunpack.c.h.b16 %v754
    %v2720 = vunpack.c.l.b16 %v755
    %v2721 = vunpack.c.h.b16 %v755
    %v2722 = vunpack.c.l.b16 %v756
    %v2723 = vunpack.c.h.b16 %v756
    %v2724 = vunpack.c.l.b16 %v757
    %v2725 = vunpack.c.h.b16 %v757
    %v2726 = vunpack.c.l.b16 %v758
    %v2727 = vunpack.c.l.b16 %v759
    %v2728 = vunpack.c.h.b16 %v759
    %v2729 = vunpack.c.l.b16 %v760
    %v2730 = vunpack.c.h.b16 %v760
    %v2731 = vunpack.c.l.b16 %v761
    %v2732 = vunpack.c.h.b16 %v761
    %v2733 = vunpack.c.l.b16 %v762
    %v2734 = vunpack.c.h.b16 %v762
    %v2735 = vunpack.c.l.b16 %v763
    %v2736 = vunpack.c.l.b16 %v764
    %v2737 = vunpack.c.h.b16 %v764
    %v2738 = vunpack.c.l.b16 %v765
    %v2739 = vunpack.c.h.b16 %v765
    %v2740 = vunpack.c.l.b16 %v766
    %v2741 = vunpack.c.h.b16 %v766
    %v2742 = vunpack.c.l.b16 %v767
    %v2743 = vunpack.c.h.b16 %v767
    %v2744 = vunpack.c.l.b16 %v768
    %v2745 = vunpack.c.l.b16 %v769
    %v2746 = vunpack.c.h.b16 %v769
    %v2747 = vunpack.c.l.b16 %v770
    %v2748 = vunpack.c.h.b16 %v770
    %v2749 = vunpack.c.l.b16 %v771
    %v2750 = vunpack.c.h.b16 %v771
    %v2751 = vunpack.c.l.b16 %v772
    %v2752 = vunpack.c.h.b16 %v772
    %v2753 = vunpack.c.l.b16 %v773
    %v2754 = vunpack.c.l.b16 %v774
    %v2755 = vunpack.c.h.b16 %v774
    %v2756 = vunpack.c.l.b16 %v775
    %v2757 = vunpack.c.h.b16 %v775
    %v2758 = vunpack.c.l.b16 %v776
    %v2759 = vunpack.c.h.b16 %v776
    %v2760 = vunpack.c.l.b16 %v777
    %v2761 = vunpack.c.h.b16 %v777
    %v2762 = vunpack.c.l.b16 %v778
    %v2763 = vunpack.c.l.b16 %v779
    %v2764 = vunpack.c.h.b16 %v779
    %v2765 = vunpack.c.l.b16 %v780
    %v2766 = vunpack.c.h.b16 %v780
    %v2767 = vunpack.c.l.b16 %v781
    %v2768 = vunpack.c.h.b16 %v781
    %v2769 = vunpack.c.l.b16 %v782
    %v2770 = vunpack.c.h.b16 %v782
    %v2771 = vunpack.c.l.b16 %v783
    %v2772 = vunpack.c.l.b16 %v784
    %v2773 = vunpack.c.h.b16 %v784
    %v2774 = vunpack.c.l.b16 %v785
    %v2775 = vunpack.c.h.b16 %v785
    %v2776 = vunpack.c.l.b16 %v786
    %v2777 = vunpack.c.h.b16 %v786
    %v2778 = vunpack.c.l.b16 %v787
    %v2779 = vunpack.c.h.b16 %v787
    %v2780 = vunpack.c.l.b16 %v788
    %v2781 = vunpack.c.l.b16 %v789
    %v2782 = vunpack.c.h.b16 %v789
    %v2783 = vunpack.c.l.b16 %v790
    %v2784 = vunpack.c.h.b16 %v790
    %v2785 = vunpack.c.l.b16 %v791
    %v2786 = vunpack.c.h.b16 %v791
    %v2787 = vunpack.c.l.b16 %v792
    %v2788 = vunpack.c.h.b16 %v792
    %v2789 = vunpack.c.l.b16 %v793
    %v2790 = vunpack.c.l.b16 %v794
    %v2791 = vunpack.c.h.b16 %v794
    %v2792 = vunpack.c.l.b16 %v795
    %v2793 = vunpack.c.h.b16 %v795
    %v2794 = vunpack.c.l.b16 %v796
    %v2795 = vunpack.c.h.b16 %v796
    %v2796 = vunpack.c.l.b16 %v797
    %v2797 = vunpack.c.h.b16 %v797
    %v2798 = vunpack.c.l.b16 %v798
    %v2799 = vunpack.c.l.b16 %v799
    %v2800 = vunpack.c.h.b16 %v799
    %v2801 = vunpack.c.l.b16 %v800
    %v2802 = vunpack.c.h.b16 %v800
    %v2803 = vunpack.c.l.b16 %v801
    %v2804 = vunpack.c.h.b16 %v801
    %v2805 = vunpack.c.l.b16 %v802
    %v2806 = vunpack.c.h.b16 %v802
    %v2807 = vunpack.c.l.b16 %v803
    %v2808 = vunpack.c.l.b16 %v804
    %v2809 = vunpack.c.h.b16 %v804
    %v2810 = vunpack.c.l.b16 %v805
    %v2811 = vunpack.c.h.b16 %v805
    %v2812 = vunpack.c.l.b16 %v806
    %v2813 = vunpack.c.h.b16 %v806
    %v2814 = vunpack.c.l.b16 %v807
    %v2815 = vunpack.c.h.b16 %v807
    %v2816 = vunpack.c.l.b16 %v808
    %v2817 = vunpack.c.l.b16 %v809
    %v2818 = vunpack.c.h.b16 %v809
    %v2819 = vunpack.c.l.b16 %v810
    %v2820 = vunpack.c.h.b16 %v810
    %v2821 = vunpack.c.l.b16 %v811
    %v2822 = vunpack.c.h.b16 %v811
    %v2823 = vunpack.c.l.b16 %v812
    %v2824 = vunpack.c.h.b16 %v812
    %v2825 = vunpack.c.l.b16 %v813
    %v2826 = vunpack.c.l.b16 %v814
    %v2827 = vunpack.c.h.b16 %v814
    %v2828 = vunpack.c.l.b16 %v815
    %v2829 = vunpack.c.h.b16 %v815
    %v2830 = vunpack.c.l.b16 %v816
    %v2831 = vunpack.c.h.b16 %v816
    %v2832 = vunpack.c.l.b16 %v817
    %v2833 = vunpack.c.h.b16 %v817
    %v2834 = vunpack.c.l.b16 %v818
    %v2835 = vpack.c.b16 %v1548, %v1539
    %v2836 = vpack.c.b16 %v1549, %v1540
    %v2837 = vpack.c.b16 %v1550, %v1541
    %v2838 = vpack.c.b16 %v1551, %v1542
    %v2839 = vpack.c.b16 %v1552, %v1543
    %v2840 = vpack.c.b16 %v1553, %v1544
    %v2841 = vpack.c.b16 %v1554, %v1545
    %v2842 = vpack.c.b16 %v1555, %v1546
    %v2843 = vpack.c.b16 %v1556, %v1547
    %v2844 = vpack.c.b16 %v1566, %v1557
    %v2845 = vpack.c.b16 %v1567, %v1558
    %v2846 = vpack.c.b16 %v1568, %v1559
    %v2847 = vpack.c.b16 %v1569, %v1560
    %v2848 = vpack.c.b16 %v1570, %v1561
    %v2849 = vpack.c.b16 %v1571, %v1562
    %v2850 = vpack.c.b16 %v1572, %v1563
    %v2851 = vpack.c.b16 %v1573, %v1564
    %v2852 = vpack.c.b16 %v1574, %v1565
    %v2853 = vpack.c.b16 %v1584, %v1575
    %v2854 = vpack.c.b16 %v1585, %v1576
    %v2855 = vpack.c.b16 %v1586, %v1577
    %v2856 = vpack.c.b16 %v1587, %v1578
    %v2857 = vpack.c.b16 %v1588, %v1579
    %v2858 = vpack.c.b16 %v1589, %v1580
    %v2859 = vpack.c.b16 %v1590, %v1581
    %v2860 = vpack.c.b16 %v1591, %v1582
    %v2861 = vpack.c.b16 %v1592, %v1583
    %v2862 = vpack.c.b16 %v1602, %v1593
    %v2863 = vpack.c.b16 %v1603, %v1594
    %v2864 = vpack.c.b16 %v1604, %v1595
    %v2865 = vpack.c.b16 %v1605, %v1596
    %v2866 = vpack.c.b16 %v1606, %v1597
    %v2867 = vpack.c.b16 %v1607, %v1598
    %v2868 = vpack.c.b16 %v1608, %v1599
    %v2869 = vpack.c.b16 %v1609, %v1600
    %v2870 = vpack.c.b16 %v1610, %v1601
    %v2871 = vpack.c.b16 %v1620, %v1611
    %v2872 = vpack.c.b16 %v1621, %v1612
    %v2873 = vpack.c.b16 %v1622, %v1613
    %v2874 = vpack.c.b16 %v1623, %v1614
    %v2875 = vpack.c.b16 %v1624, %v1615
    %v2876 = vpack.c.b16 %v1625, %v1616
    %v2877 = vpack.c.b16 %v1626, %v1617
    %v2878 = vpack.c.b16 %v1627, %v1618
    %v2879 = vpack.c.b16 %v1628, %v1619
    %v2880 = vpack.c.b16 %v1638, %v1629
    %v2881 = vpack.c.b16 %v1639, %v1630
    %v2882 = vpack.c.b16 %v1640, %v1631
    %v2883 = vpack.c.b16 %v1641, %v1632
    %v2884 = vpack.c.b16 %v1642, %v1633
    %v2885 = vpack.c.b16 %v1643, %v1634
    %v2886 = vpack.c.b16 %v1644, %v1635
    %v2887 = vpack.c.b16 %v1645, %v1636
    %v2888 = vpack.c.b16 %v1646, %v1637
    %v2889 = vpack.c.b16 %v1656, %v1647
    %v2890 = vpack.c.b16 %v1657, %v1648
    %v2891 = vpack.c.b16 %v1658, %v1649
    %v2892 = vpack.c.b16 %v1659, %v1650
    %v2893 = vpack.c.b16 %v1660, %v1651
    %v2894 = vpack.c.b16 %v1661, %v1652
    %v2895 = vpack.c.b16 %v1662, %v1653
    %v2896 = vpack.c.b16 %v1663, %v1654
    %v2897 = vpack.c.b16 %v1664, %v1655
    %v2898 = vpack.c.b16 %v1674, %v1665
    %v2899 = vpack.c.b16 %v1675, %v1666
    %v2900 = vpack.c.b16 %v1676, %v1667
    %v2901 = vpack.c.b16 %v1677, %v1668
    %v2902 = vpack.c.b16 %v1678, %v1669
    %v2903 = vpack.c.b16 %v1679, %v1670
    %v2904 = vpack.c.b16 %v1680, %v1671
    %v2905 = vpack.c.b16 %v1681, %v1672
    %v2906 = vpack.c.b16 %v1682, %v1673
    %v2907 = vpack.c.b16 %v1692, %v1683
    %v2908 = vpack.c.b16 %v1693, %v1684
    %v2909 = vpack.c.b16 %v1694, %v1685
    %v2910 = vpack.c.b16 %v1695, %v1686
    %v2911 = vpack.c.b16 %v1696, %v1687
    %v2912 = vpack.c.b16 %v1697, %v1688
    %v2913 = vpack.c.b16 %v1698, %v1689
    %v2914 = vpack.c.b16 %v1699, %v1690
    %v2915 = vpack.c.b16 %v1700, %v1691
    %v2916 = vpack.c.b16 %v1710, %v1701
    %v2917 = vpack.c.b16 %v1711, %v1702
    %v2918 = vpack.c.b16 %v1712, %v1703
    %v2919 = vpack.c.b16 %v1713, %v1704
    %v2920 = vpack.c.b16 %v1714, %v1705
    %v2921 = vpack.c.b16 %v1715, %v1706
    %v2922 = vpack.c.b16 %v1716, %v1707
    %v2923 = vpack.c.b16 %v1717, %v1708
    %v2924 = vpack.c.b16 %v1718, %v1709
    %v2925 = vpack.c.b16 %v1728, %v1719
    %v2926 = vpack.c.b16 %v1729, %v1720
    %v2927 = vpack.c.b16 %v1730, %v1721
    %v2928 = vpack.c.b16 %v1731, %v1722
    %v2929 = vpack.c.b16 %v1732, %v1723
    %v2930 = vpack.c.b16 %v1733, %v1724
    %v2931 = vpack.c.b16 %v1734, %v1725
    %v2932 = vpack.c.b16 %v1735, %v1726
    %v2933 = vpack.c.b16 %v1736, %v1727
    %v2934 = vpack.c.b16 %v1746, %v1737
    %v2935 = vpack.c.b16 %v1747, %v1738
    %v2936 = vpack.c.b16 %v1748, %v1739
    %v2937 = vpack.c.b16 %v1749, %v1740
    %v2938 = vpack.c.b16 %v1750, %v1741
    %v2939 = vpack.c.b16 %v1751, %v1742
    %v2940 = vpack.c.b16 %v1752, %v1743
    %v2941 = vpack.c.b16 %v1753, %v1744
    %v2942 = vpack.c.b16 %v1754, %v1745
    %v2943 = vpack.c.b16 %v1764, %v1755
    %v2944 = vpack.c.b16 %v1765, %v1756
    %v2945 = vpack.c.b16 %v1766, %v1757
    %v2946 = vpack.c.b16 %v1767, %v1758
    %v2947 = vpack.c.b16 %v1768, %v1759
    %v2948 = vpack.c.b16 %v1769, %v1760
    %v2949 = vpack.c.b16 %v1770, %v1761
    %v2950 = vpack.c.b16 %v1771, %v1762
    %v2951 = vpack.c.b16 %v1772, %v1763
    %v2952 = vpack.c.b16 %v1782, %v1773
    %v2953 = vpack.c.b16 %v1783, %v1774
    %v2954 = vpack.c.b16 %v1784, %v1775
    %v2955 = vpack.c.b16 %v1785, %v1776
    %v2956 = vpack.c.b16 %v1786, %v1777
    %v2957 = vpack.c.b16 %v1787, %v1778
    %v2958 = vpack.c.b16 %v1788, %v1779
    %v2959 = vpack.c.b16 %v1789, %v1780
    %v2960 = vpack.c.b16 %v1790, %v1781
    %v2961 = vpack.c.b16 %v1800, %v1791
    %v2962 = vpack.c.b16 %v1801, %v1792
    %v2963 = vpack.c.b16 %v1802, %v1793
    %v2964 = vpack.c.b16 %v1803, %v1794
    %v2965 = vpack.c.b16 %v1804, %v1795
    %v2966 = vpack.c.b16 %v1805, %v1796
    %v2967 = vpack.c.b16 %v1806, %v1797
    %v2968 = vpack.c.b16 %v1807, %v1798
    %v2969 = vpack.c.b16 %v1808, %v1799
    %v2970 = vpack.c.b16 %v1818, %v1809
    %v2971 = vpack.c.b16 %v1819, %v1810
    %v2972 = vpack.c.b16 %v1820, %v1811
    %v2973 = vpack.c.b16 %v1821, %v1812
    %v2974 = vpack.c.b16 %v1822, %v1813
    %v2975 = vpack.c.b16 %v1823, %v1814
    %v2976 = vpack.c.b16 %v1824, %v1815
    %v2977 = vpack.c.b16 %v1825, %v1816
    %v2978 = vpack.c.b16 %v1826, %v1817
    %v2979 = vpack.c.b16 %v1836, %v1827
    %v2980 = vpack.c.b16 %v1837, %v1828
    %v2981 = vpack.c.b16 %v1838, %v1829
    %v2982 = vpack.c.b16 %v1839, %v1830
    %v2983 = vpack.c.b16 %v1840, %v1831
    %v2984 = vpack.c.b16 %v1841, %v1832
    %v2985 = vpack.c.b16 %v1842, %v1833
    %v2986 = vpack.c.b16 %v1843, %v1834
    %v2987 = vpack.c.b16 %v1844, %v1835
    %v2988 = vpack.c.b16 %v1854, %v1845
    %v2989 = vpack.c.b16 %v1855, %v1846
    %v2990 = vpack.c.b16 %v1856, %v1847
    %v2991 = vpack.c.b16 %v1857, %v1848
    %v2992 = vpack.c.b16 %v1858, %v1849
    %v2993 = vpack.c.b16 %v1859, %v1850
    %v2994 = vpack.c.b16 %v1860, %v1851
    %v2995 = vpack.c.b16 %v1861, %v1852
    %v2996 = vpack.c.b16 %v1862, %v1853
    %v2997 = vpack.c.b16 %v1872, %v1863
    %v2998 = vpack.c.b16 %v1873, %v1864
    %v2999 = vpack.c.b16 %v1874, %v1865
    %v3000 = vpack.c.b16 %v1875, %v1866
    %v3001 = vpack.c.b16 %v1876, %v1867
    %v3002 = vpack.c.b16 %v1877, %v1868
    %v3003 = vpack.c.b16 %v1878, %v1869
    %v3004 = vpack.c.b16 %v1879, %v1870
    %v3005 = vpack.c.b16 %v1880, %v1871
    %v3006 = vpack.c.b16 %v1890, %v1881
    %v3007 = vpack.c.b16 %v1891, %v1882
    %v3008 = vpack.c.b16 %v1892, %v1883
    %v3009 = vpack.c.b16 %v1893, %v1884
    %v3010 = vpack.c.b16 %v1894, %v1885
    %v3011 = vpack.c.b16 %v1895, %v1886
    %v3012 = vpack.c.b16 %v1896, %v1887
    %v3013 = vpack.c.b16 %v1897, %v1888
    %v3014 = vpack.c.b16 %v1898, %v1889
    %v3015 = vpack.c.b16 %v1908, %v1899
    %v3016 = vpack.c.b16 %v1909, %v1900
    %v3017 = vpack.c.b16 %v1910, %v1901
    %v3018 = vpack.c.b16 %v1911, %v1902
    %v3019 = vpack.c.b16 %v1912, %v1903
    %v3020 = vpack.c.b16 %v1913, %v1904
    %v3021 = vpack.c.b16 %v1914, %v1905
    %v3022 = vpack.c.b16 %v1915, %v1906
    %v3023 = vpack.c.b16 %v1916, %v1907
    %v3024 = vpack.c.b16 %v1926, %v1917
    %v3025 = vpack.c.b16 %v1927, %v1918
    %v3026 = vpack.c.b16 %v1928, %v1919
    %v3027 = vpack.c.b16 %v1929, %v1920
    %v3028 = vpack.c.b16 %v1930, %v1921
    %v3029 = vpack.c.b16 %v1931, %v1922
    %v3030 = vpack.c.b16 %v1932, %v1923
    %v3031 = vpack.c.b16 %v1933, %v1924
    %v3032 = vpack.c.b16 %v1934, %v1925
    %v3033 = vpack.c.b16 %v1944, %v1935
    %v3034 = vpack.c.b16 %v1945, %v1936
    %v3035 = vpack.c.b16 %v1946, %v1937
    %v3036 = vpack.c.b16 %v1947, %v1938
    %v3037 = vpack.c.b16 %v1948, %v1939
    %v3038 = vpack.c.b16 %v1949, %v1940
    %v3039 = vpack.c.b16 %v1950, %v1941
    %v3040 = vpack.c.b16 %v1951, %v1942
    %v3041 = vpack.c.b16 %v1952, %v1943
    %v3042 = vpack.c.b16 %v1962, %v1953
    %v3043 = vpack.c.b16 %v1963, %v1954
    %v3044 = vpack.c.b16 %v1964, %v1955
    %v3045 = vpack.c.b16 %v1965, %v1956
    %v3046 = vpack.c.b16 %v1966, %v1957
    %v3047 = vpack.c.b16 %v1967, %v1958
    %v3048 = vpack.c.b16 %v1968, %v1959
    %v3049 = vpack.c.b16 %v1969, %v1960
    %v3050 = vpack.c.b16 %v1970, %v1961
    %v3051 = vpack.c.b16 %v1980, %v1971
    %v3052 = vpack.c.b16 %v1981, %v1972
    %v3053 = vpack.c.b16 %v1982, %v1973
    %v3054 = vpack.c.b16 %v1983, %v1974
    %v3055 = vpack.c.b16 %v1984, %v1975
    %v3056 = vpack.c.b16 %v1985, %v1976
    %v3057 = vpack.c.b16 %v1986, %v1977
    %v3058 = vpack.c.b16 %v1987, %v1978
    %v3059 = vpack.c.b16 %v1988, %v1979
    %v3060 = vpack.c.b16 %v1998, %v1989
    %v3061 = vpack.c.b16 %v1999, %v1990
    %v3062 = vpack.c.b16 %v2000, %v1991
    %v3063 = vpack.c.b16 %v2001, %v1992
    %v3064 = vpack.c.b16 %v2002, %v1993
    %v3065 = vpack.c.b16 %v2003, %v1994
    %v3066 = vpack.c.b16 %v2004, %v1995
    %v3067 = vpack.c.b16 %v2005, %v1996
    %v3068 = vpack.c.b16 %v2006, %v1997
    %v3069 = vpack.c.b16 %v2016, %v2007
    %v3070 = vpack.c.b16 %v2017, %v2008
    %v3071 = vpack.c.b16 %v2018, %v2009
    %v3072 = vpack.c.b16 %v2019, %v2010
    %v3073 = vpack.c.b16 %v2020, %v2011
    %v3074 = vpack.c.b16 %v2021, %v2012
    %v3075 = vpack.c.b16 %v2022, %v2013
    %v3076 = vpack.c.b16 %v2023, %v2014
    %v3077 = vpack.c.b16 %v2024, %v2015
    %v3078 = vpack.c.b16 %v2034, %v2025
    %v3079 = vpack.c.b16 %v2035, %v2026
    %v3080 = vpack.c.b16 %v2036, %v2027
    %v3081 = vpack.c.b16 %v2037, %v2028
    %v3082 = vpack.c.b16 %v2038, %v2029
    %v3083 = vpack.c.b16 %v2039, %v2030
    %v3084 = vpack.c.b16 %v2040, %v2031
    %v3085 = vpack.c.b16 %v2041, %v2032
    %v3086 = vpack.c.b16 %v2042, %v2033
    %v3087 = vpack.c.b16 %v2052, %v2043
    %v3088 = vpack.c.b16 %v2053, %v2044
    %v3089 = vpack.c.b16 %v2054, %v2045
    %v3090 = vpack.c.b16 %v2055, %v2046
    %v3091 = vpack.c.b16 %v2056, %v2047
    %v3092 = vpack.c.b16 %v2057, %v2048
    %v3093 = vpack.c.b16 %v2058, %v2049
    %v3094 = vpack.c.b16 %v2059, %v2050
    %v3095 = vpack.c.b16 %v2060, %v2051
    %v3096 = vpack.c.b16 %v2070, %v2061
    %v3097 = vpack.c.b16 %v2071, %v2062
    %v3098 = vpack.c.b16 %v2072, %v2063
    %v3099 = vpack.c.b16 %v2073, %v2064
    %v3100 = vpack.c.b16 %v2074, %v2065
    %v3101 = vpack.c.b16 %v2075, %v2066
    %v3102 = vpack.c.b16 %v2076, %v2067
    %v3103 = vpack.c.b16 %v2077, %v2068
    %v3104 = vpack.c.b16 %v2078, %v2069
    %v3105 = vpack.c.b16 %v2088, %v2079
    %v3106 = vpack.c.b16 %v2089, %v2080
    %v3107 = vpack.c.b16 %v2090, %v2081
    %v3108 = vpack.c.b16 %v2091, %v2082
    %v3109 = vpack.c.b16 %v2092, %v2083
    %v3110 = vpack.c.b16 %v2093, %v2084
    %v3111 = vpack.c.b16 %v2094, %v2085
    %v3112 = vpack.c.b16 %v2095, %v2086
    %v3113 = vpack.c.b16 %v2096, %v2087
    %v3114 = vpack.c.b16 %v2106, %v2097
    %v3115 = vpack.c.b16 %v2107, %v2098
    %v3116 = vpack.c.b16 %v2108, %v2099
    %v3117 = vpack.c.b16 %v2109, %v2100
    %v3118 = vpack.c.b16 %v2110, %v2101
    %v3119 = vpack.c.b16 %v2111, %v2102
    %v3120 = vpack.c.b16 %v2112, %v2103
    %v3121 = vpack.c.b16 %v2113, %v2104
    %v3122 = vpack.c.b16 %v2114, %v2105
    %v3123 = vpack.c.b16 %v2124, %v2115
    %v3124 = vpack.c.b16 %v2125, %v2116
    %v3125 = vpack.c.b16 %v2126, %v2117
    %v3126 = vpack.c.b16 %v2127, %v2118
    %v3127 = vpack.c.b16 %v2128, %v2119
    %v3128 = vpack.c.b16 %v2129, %v2120
    %v3129 = vpack.c.b16 %v2130, %v2121
    %v3130 = vpack.c.b16 %v2131, %v2122
    %v3131 = vpack.c.b16 %v2132, %v2123
    %v3132 = vpack.c.b16 %v2142, %v2133
    %v3133 = vpack.c.b16 %v2143, %v2134
    %v3134 = vpack.c.b16 %v2144, %v2135
    %v3135 = vpack.c.b16 %v2145, %v2136
    %v3136 = vpack.c.b16 %v2146, %v2137
    %v3137 = vpack.c.b16 %v2147, %v2138
    %v3138 = vpack.c.b16 %v2148, %v2139
    %v3139 = vpack.c.b16 %v2149, %v2140
    %v3140 = vpack.c.b16 %v2150, %v2141
    %v3141 = vpack.c.b16 %v2160, %v2151
    %v3142 = vpack.c.b16 %v2161, %v2152
    %v3143 = vpack.c.b16 %v2162, %v2153
    %v3144 = vpack.c.b16 %v2163, %v2154
    %v3145 = vpack.c.b16 %v2164, %v2155
    %v3146 = vpack.c.b16 %v2165, %v2156
    %v3147 = vpack.c.b16 %v2166, %v2157
    %v3148 = vpack.c.b16 %v2167, %v2158
    %v3149 = vpack.c.b16 %v2168, %v2159
    %v3150 = vpack.c.b16 %v2178, %v2169
    %v3151 = vpack.c.b16 %v2179, %v2170
    %v3152 = vpack.c.b16 %v2180, %v2171
    %v3153 = vpack.c.b16 %v2181, %v2172
    %v3154 = vpack.c.b16 %v2182, %v2173
    %v3155 = vpack.c.b16 %v2183, %v2174
    %v3156 = vpack.c.b16 %v2184, %v2175
    %v3157 = vpack.c.b16 %v2185, %v2176
    %v3158 = vpack.c.b16 %v2186, %v2177
    %v3159 = vpack.c.b16 %v2196, %v2187
    %v3160 = vpack.c.b16 %v2197, %v2188
    %v3161 = vpack.c.b16 %v2198, %v2189
    %v3162 = vpack.c.b16 %v2199, %v2190
    %v3163 = vpack.c.b16 %v2200, %v2191
    %v3164 = vpack.c.b16 %v2201, %v2192
    %v3165 = vpack.c.b16 %v2202, %v2193
    %v3166 = vpack.c.b16 %v2203, %v2194
    %v3167 = vpack.c.b16 %v2204, %v2195
    %v3168 = vpack.c.b16 %v2214, %v2205
    %v3169 = vpack.c.b16 %v2215, %v2206
    %v3170 = vpack.c.b16 %v2216, %v2207
    %v3171 = vpack.c.b16 %v2217, %v2208
    %v3172 = vpack.c.b16 %v2218, %v2209
    %v3173 = vpack.c.b16 %v2219, %v2210
    %v3174 = vpack.c.b16 %v2220, %v2211
    %v3175 = vpack.c.b16 %v2221, %v2212
    %v3176 = vpack.c.b16 %v2222, %v2213
    %v3177 = vpack.c.b16 %v2232, %v2223
    %v3178 = vpack.c.b16 %v2233, %v2224
    %v3179 = vpack.c.b16 %v2234, %v2225
    %v3180 = vpack.c.b16 %v2235, %v2226
    %v3181 = vpack.c.b16 %v2236, %v2227
    %v3182 = vpack.c.b16 %v2237, %v2228
    %v3183 = vpack.c.b16 %v2238, %v2229
    %v3184 = vpack.c.b16 %v2239, %v2230
    %v3185 = vpack.c.b16 %v2240, %v2231
    %v3186 = vpack.c.b16 %v2250, %v2241
    %v3187 = vpack.c.b16 %v2251, %v2242
    %v3188 = vpack.c.b16 %v2252, %v2243
    %v3189 = vpack.c.b16 %v2253, %v2244
    %v3190 = vpack.c.b16 %v2254, %v2245
    %v3191 = vpack.c.b16 %v2255, %v2246
    %v3192 = vpack.c.b16 %v2256, %v2247
    %v3193 = vpack.c.b16 %v2257, %v2248
    %v3194 = vpack.c.b16 %v2258, %v2249
    %v3195 = vpack.c.b16 %v2268, %v2259
    %v3196 = vpack.c.b16 %v2269, %v2260
    %v3197 = vpack.c.b16 %v2270, %v2261
    %v3198 = vpack.c.b16 %v2271, %v2262
    %v3199 = vpack.c.b16 %v2272, %v2263
    %v3200 = vpack.c.b16 %v2273, %v2264
    %v3201 = vpack.c.b16 %v2274, %v2265
    %v3202 = vpack.c.b16 %v2275, %v2266
    %v3203 = vpack.c.b16 %v2276, %v2267
    %v3204 = vpack.c.b16 %v2286, %v2277
    %v3205 = vpack.c.b16 %v2287, %v2278
    %v3206 = vpack.c.b16 %v2288, %v2279
    %v3207 = vpack.c.b16 %v2289, %v2280
    %v3208 = vpack.c.b16 %v2290, %v2281
    %v3209 = vpack.c.b16 %v2291, %v2282
    %v3210 = vpack.c.b16 %v2292, %v2283
    %v3211 = vpack.c.b16 %v2293, %v2284
    %v3212 = vpack.c.b16 %v2294, %v2285
    %v3213 = vpack.c.b16 %v2304, %v2295
    %v3214 = vpack.c.b16 %v2305, %v2296
    %v3215 = vpack.c.b16 %v2306, %v2297
    %v3216 = vpack.c.b16 %v2307, %v2298
    %v3217 = vpack.c.b16 %v2308, %v2299
    %v3218 = vpack.c.b16 %v2309, %v2300
    %v3219 = vpack.c.b16 %v2310, %v2301
    %v3220 = vpack.c.b16 %v2311, %v2302
    %v3221 = vpack.c.b16 %v2312, %v2303
    %v3222 = vpack.c.b16 %v2322, %v2313
    %v3223 = vpack.c.b16 %v2323, %v2314
    %v3224 = vpack.c.b16 %v2324, %v2315
    %v3225 = vpack.c.b16 %v2325, %v2316
    %v3226 = vpack.c.b16 %v2326, %v2317
    %v3227 = vpack.c.b16 %v2327, %v2318
    %v3228 = vpack.c.b16 %v2328, %v2319
    %v3229 = vpack.c.b16 %v2329, %v2320
    %v3230 = vpack.c.b16 %v2330, %v2321
    %v3231 = vpack.c.b16 %v2340, %v2331
    %v3232 = vpack.c.b16 %v2341, %v2332
    %v3233 = vpack.c.b16 %v2342, %v2333
    %v3234 = vpack.c.b16 %v2343, %v2334
    %v3235 = vpack.c.b16 %v2344, %v2335
    %v3236 = vpack.c.b16 %v2345, %v2336
    %v3237 = vpack.c.b16 %v2346, %v2337
    %v3238 = vpack.c.b16 %v2347, %v2338
    %v3239 = vpack.c.b16 %v2348, %v2339
    %v3240 = vpack.c.b16 %v2358, %v2349
    %v3241 = vpack.c.b16 %v2359, %v2350
    %v3242 = vpack.c.b16 %v2360, %v2351
    %v3243 = vpack.c.b16 %v2361, %v2352
    %v3244 = vpack.c.b16 %v2362, %v2353
    %v3245 = vpack.c.b16 %v2363, %v2354
    %v3246 = vpack.c.b16 %v2364, %v2355
    %v3247 = vpack.c.b16 %v2365, %v2356
    %v3248 = vpack.c.b16 %v2366, %v2357
    %v3249 = vpack.c.b16 %v2376, %v2367
    %v3250 = vpack.c.b16 %v2377, %v2368
    %v3251 = vpack.c.b16 %v2378, %v2369
    %v3252 = vpack.c.b16 %v2379, %v2370
    %v3253 = vpack.c.b16 %v2380, %v2371
    %v3254 = vpack.c.b16 %v2381, %v2372
    %v3255 = vpack.c.b16 %v2382, %v2373
    %v3256 = vpack.c.b16 %v2383, %v2374
    %v3257 = vpack.c.b16 %v2384, %v2375
    %v3258 = vpack.c.b16 %v2394, %v2385
    %v3259 = vpack.c.b16 %v2395, %v2386
    %v3260 = vpack.c.b16 %v2396, %v2387
    %v3261 = vpack.c.b16 %v2397, %v2388
    %v3262 = vpack.c.b16 %v2398, %v2389
    %v3263 = vpack.c.b16 %v2399, %v2390
    %v3264 = vpack.c.b16 %v2400, %v2391
    %v3265 = vpack.c.b16 %v2401, %v2392
    %v3266 = vpack.c.b16 %v2402, %v2393
    %v3267 = vpack.c.b16 %v2412, %v2403
    %v3268 = vpack.c.b16 %v2413, %v2404
    %v3269 = vpack.c.b16 %v2414, %v2405
    %v3270 = vpack.c.b16 %v2415, %v2406
    %v3271 = vpack.c.b16 %v2416, %v2407
    %v3272 = vpack.c.b16 %v2417, %v2408
    %v3273 = vpack.c.b16 %v2418, %v2409
    %v3274 = vpack.c.b16 %v2419, %v2410
    %v3275 = vpack.c.b16 %v2420, %v2411
    %v3276 = vpack.c.b16 %v2430, %v2421
    %v3277 = vpack.c.b16 %v2431, %v2422
    %v3278 = vpack.c.b16 %v2432, %v2423
    %v3279 = vpack.c.b16 %v2433, %v2424
    %v3280 = vpack.c.b16 %v2434, %v2425
    %v3281 = vpack.c.b16 %v2435, %v2426
    %v3282 = vpack.c.b16 %v2436, %v2427
    %v3283 = vpack.c.b16 %v2437, %v2428
    %v3284 = vpack.c.b16 %v2438, %v2429
    %v3285 = vpack.c.b16 %v2448, %v2439
    %v3286 = vpack.c.b16 %v2449, %v2440
    %v3287 = vpack.c.b16 %v2450, %v2441
    %v3288 = vpack.c.b16 %v2451, %v2442
    %v3289 = vpack.c.b16 %v2452, %v2443
    %v3290 = vpack.c.b16 %v2453, %v2444
    %v3291 = vpack.c.b16 %v2454, %v2445
    %v3292 = vpack.c.b16 %v2455, %v2446
    %v3293 = vpack.c.b16 %v2456, %v2447
    %v3294 = vpack.c.b16 %v2466, %v2457
    %v3295 = vpack.c.b16 %v2467, %v2458
    %v3296 = vpack.c.b16 %v2468, %v2459
    %v3297 = vpack.c.b16 %v2469, %v2460
    %v3298 = vpack.c.b16 %v2470, %v2461
    %v3299 = vpack.c.b16 %v2471, %v2462
    %v3300 = vpack.c.b16 %v2472, %v2463
    %v3301 = vpack.c.b16 %v2473, %v2464
    %v3302 = vpack.c.b16 %v2474, %v2465
    %v3303 = vpack.c.b16 %v2484, %v2475
    %v3304 = vpack.c.b16 %v2485, %v2476
    %v3305 = vpack.c.b16 %v2486, %v2477
    %v3306 = vpack.c.b16 %v2487, %v2478
    %v3307 = vpack.c.b16 %v2488, %v2479
    %v3308 = vpack.c.b16 %v2489, %v2480
    %v3309 = vpack.c.b16 %v2490, %v2481
    %v3310 = vpack.c.b16 %v2491, %v2482
    %v3311 = vpack.c.b16 %v2492, %v2483
    %v3312 = vpack.c.b16 %v2502, %v2493
    %v3313 = vpack.c.b16 %v2503, %v2494
    %v3314 = vpack.c.b16 %v2504, %v2495
    %v3315 = vpack.c.b16 %v2505, %v2496
    %v3316 = vpack.c.b16 %v2506, %v2497
    %v3317 = vpack.c.b16 %v2507, %v2498
    %v3318 = vpack.c.b16 %v2508, %v2499
    %v3319 = vpack.c.b16 %v2509, %v2500
    %v3320 = vpack.c.b16 %v2510, %v2501
    %v3321 = vpack.c.b16 %v2520, %v2511
    %v3322 = vpack.c.b16 %v2521, %v2512
    %v3323 = vpack.c.b16 %v2522, %v2513
    %v3324 = vpack.c.b16 %v2523, %v2514
    %v3325 = vpack.c.b16 %v2524, %v2515
    %v3326 = vpack.c.b16 %v2525, %v2516
    %v3327 = vpack.c.b16 %v2526, %v2517
    %v3328 = vpack.c.b16 %v2527, %v2518
    %v3329 = vpack.c.b16 %v2528, %v2519
    %v3330 = vpack.c.b16 %v2538, %v2529
    %v3331 = vpack.c.b16 %v2539, %v2530
    %v3332 = vpack.c.b16 %v2540, %v2531
    %v3333 = vpack.c.b16 %v2541, %v2532
    %v3334 = vpack.c.b16 %v2542, %v2533
    %v3335 = vpack.c.b16 %v2543, %v2534
    %v3336 = vpack.c.b16 %v2544, %v2535
    %v3337 = vpack.c.b16 %v2545, %v2536
    %v3338 = vpack.c.b16 %v2546, %v2537
    %v3339 = vpack.c.b16 %v2556, %v2547
    %v3340 = vpack.c.b16 %v2557, %v2548
    %v3341 = vpack.c.b16 %v2558, %v2549
    %v3342 = vpack.c.b16 %v2559, %v2550
    %v3343 = vpack.c.b16 %v2560, %v2551
    %v3344 = vpack.c.b16 %v2561, %v2552
    %v3345 = vpack.c.b16 %v2562, %v2553
    %v3346 = vpack.c.b16 %v2563, %v2554
    %v3347 = vpack.c.b16 %v2564, %v2555
    %v3348 = vpack.c.b16 %v2574, %v2565
    %v3349 = vpack.c.b16 %v2575, %v2566
    %v3350 = vpack.c.b16 %v2576, %v2567
    %v3351 = vpack.c.b16 %v2577, %v2568
    %v3352 = vpack.c.b16 %v2578, %v2569
    %v3353 = vpack.c.b16 %v2579, %v2570
    %v3354 = vpack.c.b16 %v2580, %v2571
    %v3355 = vpack.c.b16 %v2581, %v2572
    %v3356 = vpack.c.b16 %v2582, %v2573
    %v3357 = vpack.c.b16 %v2592, %v2583
    %v3358 = vpack.c.b16 %v2593, %v2584
    %v3359 = vpack.c.b16 %v2594, %v2585
    %v3360 = vpack.c.b16 %v2595, %v2586
    %v3361 = vpack.c.b16 %v2596, %v2587
    %v3362 = vpack.c.b16 %v2597, %v2588
    %v3363 = vpack.c.b16 %v2598, %v2589
    %v3364 = vpack.c.b16 %v2599, %v2590
    %v3365 = vpack.c.b16 %v2600, %v2591
    %v3366 = vpack.c.b16 %v2610, %v2601
    %v3367 = vpack.c.b16 %v2611, %v2602
    %v3368 = vpack.c.b16 %v2612, %v2603
    %v3369 = vpack.c.b16 %v2613, %v2604
    %v3370 = vpack.c.b16 %v2614, %v2605
    %v3371 = vpack.c.b16 %v2615, %v2606
    %v3372 = vpack.c.b16 %v2616, %v2607
    %v3373 = vpack.c.b16 %v2617, %v2608
    %v3374 = vpack.c.b16 %v2618, %v2609
    %v3375 = vpack.c.b16 %v2628, %v2619
    %v3376 = vpack.c.b16 %v2629, %v2620
    %v3377 = vpack.c.b16 %v2630, %v2621
    %v3378 = vpack.c.b16 %v2631, %v2622
    %v3379 = vpack.c.b16 %v2632, %v2623
    %v3380 = vpack.c.b16 %v2633, %v2624
    %v3381 = vpack.c.b16 %v2634, %v2625
    %v3382 = vpack.c.b16 %v2635, %v2626
    %v3383 = vpack.c.b16 %v2636, %v2627
    %v3384 = vpack.c.b16 %v2646, %v2637
    %v3385 = vpack.c.b16 %v2647, %v2638
    %v3386 = vpack.c.b16 %v2648, %v2639
    %v3387 = vpack.c.b16 %v2649, %v2640
    %v3388 = vpack.c.b16 %v2650, %v2641
    %v3389 = vpack.c.b16 %v2651, %v2642
    %v3390 = vpack.c.b16 %v2652, %v2643
    %v3391 = vpack.c.b16 %v2653, %v2644
    %v3392 = vpack.c.b16 %v2654, %v2645
    %v3393 = vpack.c.b16 %v2664, %v2655
    %v3394 = vpack.c.b16 %v2665, %v2656
    %v3395 = vpack.c.b16 %v2666, %v2657
    %v3396 = vpack.c.b16 %v2667, %v2658
    %v3397 = vpack.c.b16 %v2668, %v2659
    %v3398 = vpack.c.b16 %v2669, %v2660
    %v3399 = vpack.c.b16 %v2670, %v2661
    %v3400 = vpack.c.b16 %v2671, %v2662
    %v3401 = vpack.c.b16 %v2672, %v2663
    %v3402 = vpack.c.b16 %v2682, %v2673
    %v3403 = vpack.c.b16 %v2683, %v2674
    %v3404 = vpack.c.b16 %v2684, %v2675
    %v3405 = vpack.c.b16 %v2685, %v2676
    %v3406 = vpack.c.b16 %v2686, %v2677
    %v3407 = vpack.c.b16 %v2687, %v2678
    %v3408 = vpack.c.b16 %v2688, %v2679
    %v3409 = vpack.c.b16 %v2689, %v2680
    %v3410 = vpack.c.b16 %v2690, %v2681
    %v3411 = vpack.c.b16 %v2700, %v2691
    %v3412 = vpack.c.b16 %v2701, %v2692
    %v3413 = vpack.c.b16 %v2702, %v2693
    %v3414 = vpack.c.b16 %v2703, %v2694
    %v3415 = vpack.c.b16 %v2704, %v2695
    %v3416 = vpack.c.b16 %v2705, %v2696
    %v3417 = vpack.c.b16 %v2706, %v2697
    %v3418 = vpack.c.b16 %v2707, %v2698
    %v3419 = vpack.c.b16 %v2708, %v2699
    %v3420 = vpack.c.b16 %v2718, %v2709
    %v3421 = vpack.c.b16 %v2719, %v2710
    %v3422 = vpack.c.b16 %v2720, %v2711
    %v3423 = vpack.c.b16 %v2721, %v2712
    %v3424 = vpack.c.b16 %v2722, %v2713
    %v3425 = vpack.c.b16 %v2723, %v2714
    %v3426 = vpack.c.b16 %v2724, %v2715
    %v3427 = vpack.c.b16 %v2725, %v2716
    %v3428 = vpack.c.b16 %v2726, %v2717
    %v3429 = vpack.c.b16 %v2736, %v2727
    %v3430 = vpack.c.b16 %v2737, %v2728
    %v3431 = vpack.c.b16 %v2738, %v2729
    %v3432 = vpack.c.b16 %v2739, %v2730
    %v3433 = vpack.c.b16 %v2740, %v2731
    %v3434 = vpack.c.b16 %v2741, %v2732
    %v3435 = vpack.c.b16 %v2742, %v2733
    %v3436 = vpack.c.b16 %v2743, %v2734
    %v3437 = vpack.c.b16 %v2744, %v2735
    %v3438 = vpack.c.b16 %v2754, %v2745
    %v3439 = vpack.c.b16 %v2755, %v2746
    %v3440 = vpack.c.b16 %v2756, %v2747
    %v3441 = vpack.c.b16 %v2757, %v2748
    %v3442 = vpack.c.b16 %v2758, %v2749
    %v3443 = vpack.c.b16 %v2759, %v2750
    %v3444 = vpack.c.b16 %v2760, %v2751
    %v3445 = vpack.c.b16 %v2761, %v2752
    %v3446 = vpack.c.b16 %v2762, %v2753
    %v3447 = vpack.c.b16 %v2772, %v2763
    %v3448 = vpack.c.b16 %v2773, %v2764
    %v3449 = vpack.c.b16 %v2774, %v2765
    %v3450 = vpack.c.b16 %v2775, %v2766
    %v3451 = vpack.c.b16 %v2776, %v2767
    %v3452 = vpack.c.b16 %v2777, %v2768
    %v3453 = vpack.c.b16 %v2778, %v2769
    %v3454 = vpack.c.b16 %v2779, %v2770
    %v3455 = vpack.c.b16 %v2780, %v2771
    %v3456 = vpack.c.b16 %v2790, %v2781
    %v3457 = vpack.c.b16 %v2791, %v2782
    %v3458 = vpack.c.b16 %v2792, %v2783
    %v3459 = vpack.c.b16 %v2793, %v2784
    %v3460 = vpack.c.b16 %v2794, %v2785
    %v3461 = vpack.c.b16 %v2795, %v2786
    %v3462 = vpack.c.b16 %v2796, %v2787
    %v3463 = vpack.c.b16 %v2797, %v2788
    %v3464 = vpack.c.b16 %v2798, %v2789
    %v3465 = vpack.c.b16 %v2808, %v2799
    %v3466 = vpack.c.b16 %v2809, %v2800
    %v3467 = vpack.c.b16 %v2810, %v2801
    %v3468 = vpack.c.b16 %v2811, %v2802
    %v3469 = vpack.c.b16 %v2812, %v2803
    %v3470 = vpack.c.b16 %v2813, %v2804
    %v3471 = vpack.c.b16 %v2814, %v2805
    %v3472 = vpack.c.b16 %v2815, %v2806
    %v3473 = vpack.c.b16 %v2816, %v2807
    %v3474 = vpack.c.b16 %v2826, %v2817
    %v3475 = vpack.c.b16 %v2827, %v2818
    %v3476 = vpack.c.b16 %v2828, %v2819
    %v3477 = vpack.c.b16 %v2829, %v2820
    %v3478 = vpack.c.b16 %v2830, %v2821
    %v3479 = vpack.c.b16 %v2831, %v2822
    %v3480 = vpack.c.b16 %v2832, %v2823
    %v3481 = vpack.c.b16 %v2833, %v2824
    %v3482 = vpack.c.b16 %v2834, %v2825
    %4131 = vmatprep.subr.bf16.mxu0 %v2836
    %4132 = vmatpush1.bf16.msra.mxu0 %v2835
    %4133 = vmatprep.subr.bf16.mxu0 %v2845
    %4134 = vmatpush1.bf16.msra.mxu0 %v2844
    %4135 = vmatprep.subr.bf16.mxu0 %v2854
    %4136 = vmatpush1.bf16.msra.mxu0 %v2853
    %4137 = vmatprep.subr.bf16.mxu0 %v2863
    %4138 = vmatpush1.bf16.msra.mxu0 %v2862
    %4139 = vmatprep.subr.bf16.mxu0 %v2872
    %4140 = vmatpush1.bf16.msra.mxu0 %v2871
    %4141 = vmatprep.subr.bf16.mxu0 %v2881
    %4142 = vmatpush1.bf16.msra.mxu0 %v2880
    %4143 = vmatprep.subr.bf16.mxu0 %v2890
    %4144 = vmatpush1.bf16.msra.mxu0 %v2889
    %4145 = vmatprep.subr.bf16.mxu0 %v2899
    %4146 = vmatpush1.bf16.msra.mxu0 %v2898
    %4147 = vmatprep.subr.bf16.mxu0 %v2908
    %4148 = vmatpush1.bf16.msra.mxu0 %v2907
    %4149 = vmatprep.subr.bf16.mxu0 %v2917
    %4150 = vmatpush1.bf16.msra.mxu0 %v2916
    %4151 = vmatprep.subr.bf16.mxu0 %v2926
    %4152 = vmatpush1.bf16.msra.mxu0 %v2925
    %4153 = vmatprep.subr.bf16.mxu0 %v2935
    %4154 = vmatpush1.bf16.msra.mxu0 %v2934
    %4155 = vmatprep.subr.bf16.mxu0 %v2944
    %4156 = vmatpush1.bf16.msra.mxu0 %v2943
    %4157 = vmatprep.subr.bf16.mxu0 %v2953
    %4158 = vmatpush1.bf16.msra.mxu0 %v2952
    %4159 = vmatprep.subr.bf16.mxu0 %v2962
    %4160 = vmatpush1.bf16.msra.mxu0 %v2961
    %4161 = vmatprep.subr.bf16.mxu0 %v2971
    %4162 = vmatpush1.bf16.msra.mxu0 %v2970
    %4163 = vmatprep.mubr.bf16.mxu0 %v91
    %4164 = vmatmul.mubr.bf16.gmra.mrb[0].mxu0 %v90
    %v4165 = vpop.f32.mrb[0].mxu0
    %v4166 = vadd.f32 0.0, %v4165
    %v4167 = vpop.f32.mrb[0].mxu0
    %v4168 = vadd.f32 0.0, %v4167
    %v4169 = vpop.f32.mrb[0].mxu0
    %v4170 = vpop.f32.mrb[0].mxu0
    %4171 = vdwg.mxu0
    %4172 = vmatprep.subr.bf16.mxu0 %v2980
    %4173 = vmatpush1.bf16.msra.mxu0 %v2979
    %4174 = vmatprep.subr.bf16.mxu0 %v2989
    %4175 = vmatpush1.bf16.msra.mxu0 %v2988
    %4176 = vmatprep.subr.bf16.mxu0 %v2998
    %4177 = vmatpush1.bf16.msra.mxu0 %v2997
    %4178 = vmatprep.subr.bf16.mxu0 %v3007
    %4179 = vmatpush1.bf16.msra.mxu0 %v3006
    %4180 = vmatprep.subr.bf16.mxu0 %v3016
    %4181 = vmatpush1.bf16.msra.mxu0 %v3015
    %4182 = vmatprep.subr.bf16.mxu0 %v3025
    %4183 = vmatpush1.bf16.msra.mxu0 %v3024
    %4184 = vmatprep.subr.bf16.mxu0 %v3034
    %4185 = vmatpush1.bf16.msra.mxu0 %v3033
    %4186 = vmatprep.subr.bf16.mxu0 %v3043
    %4187 = vmatpush1.bf16.msra.mxu0 %v3042
    %4188 = vmatprep.subr.bf16.mxu0 %v3052
    %4189 = vmatpush1.bf16.msra.mxu0 %v3051
    %4190 = vmatprep.subr.bf16.mxu0 %v3061
    %4191 = vmatpush1.bf16.msra.mxu0 %v3060
    %4192 = vmatprep.subr.bf16.mxu0 %v3070
    %4193 = vmatpush1.bf16.msra.mxu0 %v3069
    %4194 = vmatprep.subr.bf16.mxu0 %v3079
    %4195 = vmatpush1.bf16.msra.mxu0 %v3078
    %4196 = vmatprep.subr.bf16.mxu0 %v3088
    %4197 = vmatpush1.bf16.msra.mxu0 %v3087
    %4198 = vmatprep.subr.bf16.mxu0 %v3097
    %4199 = vmatpush1.bf16.msra.mxu0 %v3096
    %4200 = vmatprep.subr.bf16.mxu0 %v3106
    %4201 = vmatpush1.bf16.msra.mxu0 %v3105
    %4202 = vmatprep.subr.bf16.mxu0 %v3115
    %4203 = vmatpush1.bf16.msra.mxu0 %v3114
    %4204 = vmatprep.mubr.bf16.mxu0 %v93
    %4205 = vmatmul.mubr.bf16.gmra.mrb[0].mxu0 %v92
    %v4206 = vpop.f32.mrb[0].mxu0
    %v4207 = vadd.f32 %v4166, %v4206
    %v4208 = vpop.f32.mrb[0].mxu0
    %v4209 = vadd.f32 %v4168, %v4208
    %v4210 = vpop.f32.mrb[0].mxu0
    %v4211 = vpop.f32.mrb[0].mxu0
    %4212 = vdwg.mxu0
    %4213 = vmatprep.subr.bf16.mxu0 %v3124
    %4214 = vmatpush1.bf16.msra.mxu0 %v3123
    %4215 = vmatprep.subr.bf16.mxu0 %v3133
    %4216 = vmatpush1.bf16.msra.mxu0 %v3132
    %4217 = vmatprep.subr.bf16.mxu0 %v3142
    %4218 = vmatpush1.bf16.msra.mxu0 %v3141
    %4219 = vmatprep.subr.bf16.mxu0 %v3151
    %4220 = vmatpush1.bf16.msra.mxu0 %v3150
    %4221 = vmatprep.subr.bf16.mxu0 %v3160
    %4222 = vmatpush1.bf16.msra.mxu0 %v3159
    %4223 = vmatprep.subr.bf16.mxu0 %v3169
    %4224 = vmatpush1.bf16.msra.mxu0 %v3168
    %4225 = vmatprep.subr.bf16.mxu0 %v3178
    %4226 = vmatpush1.bf16.msra.mxu0 %v3177
    %4227 = vmatprep.subr.bf16.mxu0 %v3187
    %4228 = vmatpush1.bf16.msra.mxu0 %v3186
    %4229 = vmatprep.subr.bf16.mxu0 %v3196
    %4230 = vmatpush1.bf16.msra.mxu0 %v3195
    %4231 = vmatprep.subr.bf16.mxu0 %v3205
    %4232 = vmatpush1.bf16.msra.mxu0 %v3204
    %4233 = vmatprep.subr.bf16.mxu0 %v3214
    %4234 = vmatpush1.bf16.msra.mxu0 %v3213
    %4235 = vmatprep.subr.bf16.mxu0 %v3223
    %4236 = vmatpush1.bf16.msra.mxu0 %v3222
    %4237 = vmatprep.subr.bf16.mxu0 %v3232
    %4238 = vmatpush1.bf16.msra.mxu0 %v3231
    %4239 = vmatprep.subr.bf16.mxu0 %v3241
    %4240 = vmatpush1.bf16.msra.mxu0 %v3240
    %4241 = vmatprep.subr.bf16.mxu0 %v3250
    %4242 = vmatpush1.bf16.msra.mxu0 %v3249
    %4243 = vmatprep.subr.bf16.mxu0 %v3259
    %4244 = vmatpush1.bf16.msra.mxu0 %v3258
    %4245 = vmatprep.mubr.bf16.mxu0 %v95
    %4246 = vmatmul.mubr.bf16.gmra.mrb[0].mxu0 %v94
    %v4247 = vpop.f32.mrb[0].mxu0
    %v4248 = vadd.f32 %v4207, %v4247
    %v4249 = vpop.f32.mrb[0].mxu0
    %v4250 = vadd.f32 %v4209, %v4249
    %v4251 = vpop.f32.mrb[0].mxu0
    %v4252 = vpop.f32.mrb[0].mxu0
    %4253 = vdwg.mxu0
    %4254 = vmatprep.subr.bf16.mxu0 %v3268
    %4255 = vmatpush1.bf16.msra.mxu0 %v3267
    %4256 = vmatprep.subr.bf16.mxu0 %v3277
    %4257 = vmatpush1.bf16.msra.mxu0 %v3276
    %4258 = vmatprep.subr.bf16.mxu0 %v3286
    %4259 = vmatpush1.bf16.msra.mxu0 %v3285
    %4260 = vmatprep.subr.bf16.mxu0 %v3295
    %4261 = vmatpush1.bf16.msra.mxu0 %v3294
    %4262 = vmatprep.subr.bf16.mxu0 %v3304
    %4263 = vmatpush1.bf16.msra.mxu0 %v3303
    %4264 = vmatprep.subr.bf16.mxu0 %v3313
    %4265 = vmatpush1.bf16.msra.mxu0 %v3312
    %4266 = vmatprep.subr.bf16.mxu0 %v3322
    %4267 = vmatpush1.bf16.msra.mxu0 %v3321
    %4268 = vmatprep.subr.bf16.mxu0 %v3331
    %4269 = vmatpush1.bf16.msra.mxu0 %v3330
    %4270 = vmatprep.subr.bf16.mxu0 %v3340
    %4271 = vmatpush1.bf16.msra.mxu0 %v3339
    %4272 = vmatprep.subr.bf16.mxu0 %v3349
    %4273 = vmatpush1.bf16.msra.mxu0 %v3348
    %4274 = vmatprep.subr.bf16.mxu0 %v3358
    %4275 = vmatpush1.bf16.msra.mxu0 %v3357
    %4276 = vmatprep.subr.bf16.mxu0 %v3367
    %4277 = vmatpush1.bf16.msra.mxu0 %v3366
    %4278 = vmatprep.subr.bf16.mxu0 %v3376
    %4279 = vmatpush1.bf16.msra.mxu0 %v3375
    %4280 = vmatprep.subr.bf16.mxu0 %v3385
    %4281 = vmatpush1.bf16.msra.mxu0 %v3384
    %4282 = vmatprep.subr.bf16.mxu0 %v3394
    %4283 = vmatpush1.bf16.msra.mxu0 %v3393
    %4284 = vmatprep.subr.bf16.mxu0 %v3403
    %4285 = vmatpush1.bf16.msra.mxu0 %v3402
    %4286 = vmatprep.mubr.bf16.mxu0 %v97
    %4287 = vmatmul.mubr.bf16.gmra.mrb[0].mxu0 %v96
    %v4288 = vpop.f32.mrb[0].mxu0
    %v4289 = vadd.f32 %v4248, %v4288
    %v4290 = vpop.f32.mrb[0].mxu0
    %v4291 = vadd.f32 %v4250, %v4290
    %v4292 = vpop.f32.mrb[0].mxu0
    %v4293 = vpop.f32.mrb[0].mxu0
    %4294 = vdwg.mxu0
    %4295 = vmatprep.subr.bf16.mxu0 %v3412
    %4296 = vmatpush1.bf16.msra.mxu0 %v3411
    %4297 = vmatprep.subr.bf16.mxu0 %v3421
    %4298 = vmatpush1.bf16.msra.mxu0 %v3420
    %4299 = vmatprep.subr.bf16.mxu0 %v3430
    %4300 = vmatpush1.bf16.msra.mxu0 %v3429
    %4301 = vmatprep.subr.bf16.mxu0 %v3439
    %4302 = vmatpush1.bf16.msra.mxu0 %v3438
    %4303 = vmatprep.subr.bf16.mxu0 %v3448
    %4304 = vmatpush1.bf16.msra.mxu0 %v3447
    %4305 = vmatprep.subr.bf16.mxu0 %v3457
    %4306 = vmatpush1.bf16.msra.mxu0 %v3456
    %4307 = vmatprep.subr.bf16.mxu0 %v3466
    %4308 = vmatpush1.bf16.msra.mxu0 %v3465
    %4309 = vmatprep.subr.bf16.mxu0 %v3475
    %4310 = vmatpush1.bf16.msra.mxu0 %v3474
    %4311 = vmatprep.subr.bf16.mxu0 0
    %4312 = vmatpush1.bf16.msra.mxu0 0
    %4313 = vmatprep.subr.bf16.mxu0 0
    %4314 = vmatpush1.bf16.msra.mxu0 0
    %4315 = vmatprep.subr.bf16.mxu0 0
    %4316 = vmatpush1.bf16.msra.mxu0 0
    %4317 = vmatprep.subr.bf16.mxu0 0
    %4318 = vmatpush1.bf16.msra.mxu0 0
    %4319 = vmatprep.subr.bf16.mxu0 0
    %4320 = vmatpush1.bf16.msra.mxu0 0
    %4321 = vmatprep.subr.bf16.mxu0 0
    %4322 = vmatpush1.bf16.msra.mxu0 0
    %4323 = vmatprep.subr.bf16.mxu0 0
    %4324 = vmatpush1.bf16.msra.mxu0 0
    %4325 = vmatprep.subr.bf16.mxu0 0
    %4326 = vmatpush1.bf16.msra.mxu0 0
    %4327 = vmatprep.mubr.bf16.mxu0 0
    %4328 = vmatmul.mubr.bf16.gmra.mrb[0].mxu0 %v98
    %v4329 = vpop.f32.mrb[0].mxu0
    %v4330 = vadd.f32 %v4289, %v4329
    %v4331 = vpop.f32.mrb[0].mxu0
    %v4332 = vadd.f32 %v4291, %v4331
    %v4333 = vpop.f32.mrb[0].mxu0
    %v4334 = vpop.f32.mrb[0].mxu0
    %4335 = vdwg.mxu0
    %4336 = vmatprep.subr.bf16.mxu0 %v2838
    %4337 = vmatpush1.bf16.msra.mxu0 %v2837
    %4338 = vmatprep.subr.bf16.mxu0 %v2847
    %4339 = vmatpush1.bf16.msra.mxu0 %v2846
    %4340 = vmatprep.subr.bf16.mxu0 %v2856
    %4341 = vmatpush1.bf16.msra.mxu0 %v2855
    %4342 = vmatprep.subr.bf16.mxu0 %v2865
    %4343 = vmatpush1.bf16.msra.mxu0 %v2864
    %4344 = vmatprep.subr.bf16.mxu0 %v2874
    %4345 = vmatpush1.bf16.msra.mxu0 %v2873
    %4346 = vmatprep.subr.bf16.mxu0 %v2883
    %4347 = vmatpush1.bf16.msra.mxu0 %v2882
    %4348 = vmatprep.subr.bf16.mxu0 %v2892
    %4349 = vmatpush1.bf16.msra.mxu0 %v2891
    %4350 = vmatprep.subr.bf16.mxu0 %v2901
    %4351 = vmatpush1.bf16.msra.mxu0 %v2900
    %4352 = vmatprep.subr.bf16.mxu0 %v2910
    %4353 = vmatpush1.bf16.msra.mxu0 %v2909
    %4354 = vmatprep.subr.bf16.mxu0 %v2919
    %4355 = vmatpush1.bf16.msra.mxu0 %v2918
    %4356 = vmatprep.subr.bf16.mxu0 %v2928
    %4357 = vmatpush1.bf16.msra.mxu0 %v2927
    %4358 = vmatprep.subr.bf16.mxu0 %v2937
    %4359 = vmatpush1.bf16.msra.mxu0 %v2936
    %4360 = vmatprep.subr.bf16.mxu0 %v2946
    %4361 = vmatpush1.bf16.msra.mxu0 %v2945
    %4362 = vmatprep.subr.bf16.mxu0 %v2955
    %4363 = vmatpush1.bf16.msra.mxu0 %v2954
    %4364 = vmatprep.subr.bf16.mxu0 %v2964
    %4365 = vmatpush1.bf16.msra.mxu0 %v2963
    %4366 = vmatprep.subr.bf16.mxu0 %v2973
    %4367 = vmatpush1.bf16.msra.mxu0 %v2972
    %4368 = vmatprep.mubr.bf16.mxu0 %v91
    %4369 = vmatmul.mubr.bf16.gmra.mrb[0].mxu0 %v90
    %v4370 = vpop.f32.mrb[0].mxu0
    %v4371 = vadd.f32 0.0, %v4370
    %v4372 = vpop.f32.mrb[0].mxu0
    %v4373 = vadd.f32 0.0, %v4372
    %v4374 = vpop.f32.mrb[0].mxu0
    %v4375 = vpop.f32.mrb[0].mxu0
    %4376 = vdwg.mxu0
    %4377 = vmatprep.subr.bf16.mxu0 %v2982
    %4378 = vmatpush1.bf16.msra.mxu0 %v2981
    %4379 = vmatprep.subr.bf16.mxu0 %v2991
    %4380 = vmatpush1.bf16.msra.mxu0 %v2990
    %4381 = vmatprep.subr.bf16.mxu0 %v3000
    %4382 = vmatpush1.bf16.msra.mxu0 %v2999
    %4383 = vmatprep.subr.bf16.mxu0 %v3009
    %4384 = vmatpush1.bf16.msra.mxu0 %v3008
    %4385 = vmatprep.subr.bf16.mxu0 %v3018
    %4386 = vmatpush1.bf16.msra.mxu0 %v3017
    %4387 = vmatprep.subr.bf16.mxu0 %v3027
    %4388 = vmatpush1.bf16.msra.mxu0 %v3026
    %4389 = vmatprep.subr.bf16.mxu0 %v3036
    %4390 = vmatpush1.bf16.msra.mxu0 %v3035
    %4391 = vmatprep.subr.bf16.mxu0 %v3045
    %4392 = vmatpush1.bf16.msra.mxu0 %v3044
    %4393 = vmatprep.subr.bf16.mxu0 %v3054
    %4394 = vmatpush1.bf16.msra.mxu0 %v3053
    %4395 = vmatprep.subr.bf16.mxu0 %v3063
    %4396 = vmatpush1.bf16.msra.mxu0 %v3062
    %4397 = vmatprep.subr.bf16.mxu0 %v3072
    %4398 = vmatpush1.bf16.msra.mxu0 %v3071
    %4399 = vmatprep.subr.bf16.mxu0 %v3081
    %4400 = vmatpush1.bf16.msra.mxu0 %v3080
    %4401 = vmatprep.subr.bf16.mxu0 %v3090
    %4402 = vmatpush1.bf16.msra.mxu0 %v3089
    %4403 = vmatprep.subr.bf16.mxu0 %v3099
    %4404 = vmatpush1.bf16.msra.mxu0 %v3098
    %4405 = vmatprep.subr.bf16.mxu0 %v3108
    %4406 = vmatpush1.bf16.msra.mxu0 %v3107
    %4407 = vmatprep.subr.bf16.mxu0 %v3117
    %4408 = vmatpush1.bf16.msra.mxu0 %v3116
    %4409 = vmatprep.mubr.bf16.mxu0 %v93
    %4410 = vmatmul.mubr.bf16.gmra.mrb[0].mxu0 %v92
    %v4411 = vpop.f32.mrb[0].mxu0
    %v4412 = vadd.f32 %v4371, %v4411
    %v4413 = vpop.f32.mrb[0].mxu0
    %v4414 = vadd.f32 %v4373, %v4413
    %v4415 = vpop.f32.mrb[0].mxu0
    %v4416 = vpop.f32.mrb[0].mxu0
    %4417 = vdwg.mxu0
    %4418 = vmatprep.subr.bf16.mxu0 %v3126
    %4419 = vmatpush1.bf16.msra.mxu0 %v3125
    %4420 = vmatprep.subr.bf16.mxu0 %v3135
    %4421 = vmatpush1.bf16.msra.mxu0 %v3134
    %4422 = vmatprep.subr.bf16.mxu0 %v3144
    %4423 = vmatpush1.bf16.msra.mxu0 %v3143
    %4424 = vmatprep.subr.bf16.mxu0 %v3153
    %4425 = vmatpush1.bf16.msra.mxu0 %v3152
    %4426 = vmatprep.subr.bf16.mxu0 %v3162
    %4427 = vmatpush1.bf16.msra.mxu0 %v3161
    %4428 = vmatprep.subr.bf16.mxu0 %v3171
    %4429 = vmatpush1.bf16.msra.mxu0 %v3170
    %4430 = vmatprep.subr.bf16.mxu0 %v3180
    %4431 = vmatpush1.bf16.msra.mxu0 %v3179
    %4432 = vmatprep.subr.bf16.mxu0 %v3189
    %4433 = vmatpush1.bf16.msra.mxu0 %v3188
    %4434 = vmatprep.subr.bf16.mxu0 %v3198
    %4435 = vmatpush1.bf16.msra.mxu0 %v3197
    %4436 = vmatprep.subr.bf16.mxu0 %v3207
    %4437 = vmatpush1.bf16.msra.mxu0 %v3206
    %4438 = vmatprep.subr.bf16.mxu0 %v3216
    %4439 = vmatpush1.bf16.msra.mxu0 %v3215
    %4440 = vmatprep.subr.bf16.mxu0 %v3225
    %4441 = vmatpush1.bf16.msra.mxu0 %v3224
    %4442 = vmatprep.subr.bf16.mxu0 %v3234
    %4443 = vmatpush1.bf16.msra.mxu0 %v3233
    %4444 = vmatprep.subr.bf16.mxu0 %v3243
    %4445 = vmatpush1.bf16.msra.mxu0 %v3242
    %4446 = vmatprep.subr.bf16.mxu0 %v3252
    %4447 = vmatpush1.bf16.msra.mxu0 %v3251
    %4448 = vmatprep.subr.bf16.mxu0 %v3261
    %4449 = vmatpush1.bf16.msra.mxu0 %v3260
    %4450 = vmatprep.mubr.bf16.mxu0 %v95
    %4451 = vmatmul.mubr.bf16.gmra.mrb[0].mxu0 %v94
    %v4452 = vpop.f32.mrb[0].mxu0
    %v4453 = vadd.f32 %v4412, %v4452
    %v4454 = vpop.f32.mrb[0].mxu0
    %v4455 = vadd.f32 %v4414, %v4454
    %v4456 = vpop.f32.mrb[0].mxu0
    %v4457 = vpop.f32.mrb[0].mxu0
    %4458 = vdwg.mxu0
    %4459 = vmatprep.subr.bf16.mxu0 %v3270
    %4460 = vmatpush1.bf16.msra.mxu0 %v3269
    %4461 = vmatprep.subr.bf16.mxu0 %v3279
    %4462 = vmatpush1.bf16.msra.mxu0 %v3278
    %4463 = vmatprep.subr.bf16.mxu0 %v3288
    %4464 = vmatpush1.bf16.msra.mxu0 %v3287
    %4465 = vmatprep.subr.bf16.mxu0 %v3297
    %4466 = vmatpush1.bf16.msra.mxu0 %v3296
    %4467 = vmatprep.subr.bf16.mxu0 %v3306
    %4468 = vmatpush1.bf16.msra.mxu0 %v3305
    %4469 = vmatprep.subr.bf16.mxu0 %v3315
    %4470 = vmatpush1.bf16.msra.mxu0 %v3314
    %4471 = vmatprep.subr.bf16.mxu0 %v3324
    %4472 = vmatpush1.bf16.msra.mxu0 %v3323
    %4473 = vmatprep.subr.bf16.mxu0 %v3333
    %4474 = vmatpush1.bf16.msra.mxu0 %v3332
    %4475 = vmatprep.subr.bf16.mxu0 %v3342
    %4476 = vmatpush1.bf16.msra.mxu0 %v3341
    %4477 = vmatprep.subr.bf16.mxu0 %v3351
    %4478 = vmatpush1.bf16.msra.mxu0 %v3350
    %4479 = vmatprep.subr.bf16.mxu0 %v3360
    %4480 = vmatpush1.bf16.msra.mxu0 %v3359
    %4481 = vmatprep.subr.bf16.mxu0 %v3369
    %4482 = vmatpush1.bf16.msra.mxu0 %v3368
    %4483 = vmatprep.subr.bf16.mxu0 %v3378
    %4484 = vmatpush1.bf16.msra.mxu0 %v3377
    %4485 = vmatprep.subr.bf16.mxu0 %v3387
    %4486 = vmatpush1.bf16.msra.mxu0 %v3386
    %4487 = vmatprep.subr.bf16.mxu0 %v3396
    %4488 = vmatpush1.bf16.msra.mxu0 %v3395
    %4489 = vmatprep.subr.bf16.mxu0 %v3405
    %4490 = vmatpush1.bf16.msra.mxu0 %v3404
    %4491 = vmatprep.mubr.bf16.mxu0 %v97
    %4492 = vmatmul.mubr.bf16.gmra.mrb[0].mxu0 %v96
    %v4493 = vpop.f32.mrb[0].mxu0
    %v4494 = vadd.f32 %v4453, %v4493
    %v4495 = vpop.f32.mrb[0].mxu0
    %v4496 = vadd.f32 %v4455, %v4495
    %v4497 = vpop.f32.mrb[0].mxu0
    %v4498 = vpop.f32.mrb[0].mxu0
    %4499 = vdwg.mxu0
    %4500 = vmatprep.subr.bf16.mxu0 %v3414
    %4501 = vmatpush1.bf16.msra.mxu0 %v3413
    %4502 = vmatprep.subr.bf16.mxu0 %v3423
    %4503 = vmatpush1.bf16.msra.mxu0 %v3422
    %4504 = vmatprep.subr.bf16.mxu0 %v3432
    %4505 = vmatpush1.bf16.msra.mxu0 %v3431
    %4506 = vmatprep.subr.bf16.mxu0 %v3441
    %4507 = vmatpush1.bf16.msra.mxu0 %v3440
    %4508 = vmatprep.subr.bf16.mxu0 %v3450
    %4509 = vmatpush1.bf16.msra.mxu0 %v3449
    %4510 = vmatprep.subr.bf16.mxu0 %v3459
    %4511 = vmatpush1.bf16.msra.mxu0 %v3458
    %4512 = vmatprep.subr.bf16.mxu0 %v3468
    %4513 = vmatpush1.bf16.msra.mxu0 %v3467
    %4514 = vmatprep.subr.bf16.mxu0 %v3477
    %4515 = vmatpush1.bf16.msra.mxu0 %v3476
    %4516 = vmatprep.subr.bf16.mxu0 0
    %4517 = vmatpush1.bf16.msra.mxu0 0
    %4518 = vmatprep.subr.bf16.mxu0 0
    %4519 = vmatpush1.bf16.msra.mxu0 0
    %4520 = vmatprep.subr.bf16.mxu0 0
    %4521 = vmatpush1.bf16.msra.mxu0 0
    %4522 = vmatprep.subr.bf16.mxu0 0
    %4523 = vmatpush1.bf16.msra.mxu0 0
    %4524 = vmatprep.subr.bf16.mxu0 0
    %4525 = vmatpush1.bf16.msra.mxu0 0
    %4526 = vmatprep.subr.bf16.mxu0 0
    %4527 = vmatpush1.bf16.msra.mxu0 0
    %4528 = vmatprep.subr.bf16.mxu0 0
    %4529 = vmatpush1.bf16.msra.mxu0 0
    %4530 = vmatprep.subr.bf16.mxu0 0
    %4531 = vmatpush1.bf16.msra.mxu0 0
    %4532 = vmatprep.mubr.bf16.mxu0 0
    %4533 = vmatmul.mubr.bf16.gmra.mrb[0].mxu0 %v98
    %v4534 = vpop.f32.mrb[0].mxu0
    %v4535 = vadd.f32 %v4494, %v4534
    %v4536 = vpop.f32.mrb[0].mxu0
    %v4537 = vadd.f32 %v4496, %v4536
    %v4538 = vpop.f32.mrb[0].mxu0
    %v4539 = vpop.f32.mrb[0].mxu0
    %4540 = vdwg.mxu0
    %4541 = vmatprep.subr.bf16.mxu0 %v2840
    %4542 = vmatpush1.bf16.msra.mxu0 %v2839
    %4543 = vmatprep.subr.bf16.mxu0 %v2849
    %4544 = vmatpush1.bf16.msra.mxu0 %v2848
    %4545 = vmatprep.subr.bf16.mxu0 %v2858
    %4546 = vmatpush1.bf16.msra.mxu0 %v2857
    %4547 = vmatprep.subr.bf16.mxu0 %v2867
    %4548 = vmatpush1.bf16.msra.mxu0 %v2866
    %4549 = vmatprep.subr.bf16.mxu0 %v2876
    %4550 = vmatpush1.bf16.msra.mxu0 %v2875
    %4551 = vmatprep.subr.bf16.mxu0 %v2885
    %4552 = vmatpush1.bf16.msra.mxu0 %v2884
    %4553 = vmatprep.subr.bf16.mxu0 %v2894
    %4554 = vmatpush1.bf16.msra.mxu0 %v2893
    %4555 = vmatprep.subr.bf16.mxu0 %v2903
    %4556 = vmatpush1.bf16.msra.mxu0 %v2902
    %4557 = vmatprep.subr.bf16.mxu0 %v2912
    %4558 = vmatpush1.bf16.msra.mxu0 %v2911
    %4559 = vmatprep.subr.bf16.mxu0 %v2921
    %4560 = vmatpush1.bf16.msra.mxu0 %v2920
    %4561 = vmatprep.subr.bf16.mxu0 %v2930
    %4562 = vmatpush1.bf16.msra.mxu0 %v2929
    %4563 = vmatprep.subr.bf16.mxu0 %v2939
    %4564 = vmatpush1.bf16.msra.mxu0 %v2938
    %4565 = vmatprep.subr.bf16.mxu0 %v2948
    %4566 = vmatpush1.bf16.msra.mxu0 %v2947
    %4567 = vmatprep.subr.bf16.mxu0 %v2957
    %4568 = vmatpush1.bf16.msra.mxu0 %v2956
    %4569 = vmatprep.subr.bf16.mxu0 %v2966
    %4570 = vmatpush1.bf16.msra.mxu0 %v2965
    %4571 = vmatprep.subr.bf16.mxu0 %v2975
    %4572 = vmatpush1.bf16.msra.mxu0 %v2974
    %4573 = vmatprep.mubr.bf16.mxu0 %v91
    %4574 = vmatmul.mubr.bf16.gmra.mrb[0].mxu0 %v90
    %v4575 = vpop.f32.mrb[0].mxu0
    %v4576 = vadd.f32 0.0, %v4575
    %v4577 = vpop.f32.mrb[0].mxu0
    %v4578 = vadd.f32 0.0, %v4577
    %v4579 = vpop.f32.mrb[0].mxu0
    %v4580 = vpop.f32.mrb[0].mxu0
    %4581 = vdwg.mxu0
    %4582 = vmatprep.subr.bf16.mxu0 %v2984
    %4583 = vmatpush1.bf16.msra.mxu0 %v2983
    %4584 = vmatprep.subr.bf16.mxu0 %v2993
    %4585 = vmatpush1.bf16.msra.mxu0 %v2992
    %4586 = vmatprep.subr.bf16.mxu0 %v3002
    %4587 = vmatpush1.bf16.msra.mxu0 %v3001
    %4588 = vmatprep.subr.bf16.mxu0 %v3011
    %4589 = vmatpush1.bf16.msra.mxu0 %v3010
    %4590 = vmatprep.subr.bf16.mxu0 %v3020
    %4591 = vmatpush1.bf16.msra.mxu0 %v3019
    %4592 = vmatprep.subr.bf16.mxu0 %v3029
    %4593 = vmatpush1.bf16.msra.mxu0 %v3028
    %4594 = vmatprep.subr.bf16.mxu0 %v3038
    %4595 = vmatpush1.bf16.msra.mxu0 %v3037
    %4596 = vmatprep.subr.bf16.mxu0 %v3047
    %4597 = vmatpush1.bf16.msra.mxu0 %v3046
    %4598 = vmatprep.subr.bf16.mxu0 %v3056
    %4599 = vmatpush1.bf16.msra.mxu0 %v3055
    %4600 = vmatprep.subr.bf16.mxu0 %v3065
    %4601 = vmatpush1.bf16.msra.mxu0 %v3064
    %4602 = vmatprep.subr.bf16.mxu0 %v3074
    %4603 = vmatpush1.bf16.msra.mxu0 %v3073
    %4604 = vmatprep.subr.bf16.mxu0 %v3083
    %4605 = vmatpush1.bf16.msra.mxu0 %v3082
    %4606 = vmatprep.subr.bf16.mxu0 %v3092
    %4607 = vmatpush1.bf16.msra.mxu0 %v3091
    %4608 = vmatprep.subr.bf16.mxu0 %v3101
    %4609 = vmatpush1.bf16.msra.mxu0 %v3100
    %4610 = vmatprep.subr.bf16.mxu0 %v3110
    %4611 = vmatpush1.bf16.msra.mxu0 %v3109
    %4612 = vmatprep.subr.bf16.mxu0 %v3119
    %4613 = vmatpush1.bf16.msra.mxu0 %v3118
    %4614 = vmatprep.mubr.bf16.mxu0 %v93
    %4615 = vmatmul.mubr.bf16.gmra.mrb[0].mxu0 %v92
    %v4616 = vpop.f32.mrb[0].mxu0
    %v4617 = vadd.f32 %v4576, %v4616
    %v4618 = vpop.f32.mrb[0].mxu0
    %v4619 = vadd.f32 %v4578, %v4618
    %v4620 = vpop.f32.mrb[0].mxu0
    %v4621 = vpop.f32.mrb[0].mxu0
    %4622 = vdwg.mxu0
    %4623 = vmatprep.subr.bf16.mxu0 %v3128
    %4624 = vmatpush1.bf16.msra.mxu0 %v3127
    %4625 = vmatprep.subr.bf16.mxu0 %v3137
    %4626 = vmatpush1.bf16.msra.mxu0 %v3136
    %4627 = vmatprep.subr.bf16.mxu0 %v3146
    %4628 = vmatpush1.bf16.msra.mxu0 %v3145
    %4629 = vmatprep.subr.bf16.mxu0 %v3155
    %4630 = vmatpush1.bf16.msra.mxu0 %v3154
    %4631 = vmatprep.subr.bf16.mxu0 %v3164
    %4632 = vmatpush1.bf16.msra.mxu0 %v3163
    %4633 = vmatprep.subr.bf16.mxu0 %v3173
    %4634 = vmatpush1.bf16.msra.mxu0 %v3172
    %4635 = vmatprep.subr.bf16.mxu0 %v3182
    %4636 = vmatpush1.bf16.msra.mxu0 %v3181
    %4637 = vmatprep.subr.bf16.mxu0 %v3191
    %4638 = vmatpush1.bf16.msra.mxu0 %v3190
    %4639 = vmatprep.subr.bf16.mxu0 %v3200
    %4640 = vmatpush1.bf16.msra.mxu0 %v3199
    %4641 = vmatprep.subr.bf16.mxu0 %v3209
    %4642 = vmatpush1.bf16.msra.mxu0 %v3208
    %4643 = vmatprep.subr.bf16.mxu0 %v3218
    %4644 = vmatpush1.bf16.msra.mxu0 %v3217
    %4645 = vmatprep.subr.bf16.mxu0 %v3227
    %4646 = vmatpush1.bf16.msra.mxu0 %v3226
    %4647 = vmatprep.subr.bf16.mxu0 %v3236
    %4648 = vmatpush1.bf16.msra.mxu0 %v3235
    %4649 = vmatprep.subr.bf16.mxu0 %v3245
    %4650 = vmatpush1.bf16.msra.mxu0 %v3244
    %4651 = vmatprep.subr.bf16.mxu0 %v3254
    %4652 = vmatpush1.bf16.msra.mxu0 %v3253
    %4653 = vmatprep.subr.bf16.mxu0 %v3263
    %4654 = vmatpush1.bf16.msra.mxu0 %v3262
    %4655 = vmatprep.mubr.bf16.mxu0 %v95
    %4656 = vmatmul.mubr.bf16.gmra.mrb[0].mxu0 %v94
    %v4657 = vpop.f32.mrb[0].mxu0
    %v4658 = vadd.f32 %v4617, %v4657
    %v4659 = vpop.f32.mrb[0].mxu0
    %v4660 = vadd.f32 %v4619, %v4659
    %v4661 = vpop.f32.mrb[0].mxu0
    %v4662 = vpop.f32.mrb[0].mxu0
    %4663 = vdwg.mxu0
    %4664 = vmatprep.subr.bf16.mxu0 %v3272
    %4665 = vmatpush1.bf16.msra.mxu0 %v3271
    %4666 = vmatprep.subr.bf16.mxu0 %v3281
    %4667 = vmatpush1.bf16.msra.mxu0 %v3280
    %4668 = vmatprep.subr.bf16.mxu0 %v3290
    %4669 = vmatpush1.bf16.msra.mxu0 %v3289
    %4670 = vmatprep.subr.bf16.mxu0 %v3299
    %4671 = vmatpush1.bf16.msra.mxu0 %v3298
    %4672 = vmatprep.subr.bf16.mxu0 %v3308
    %4673 = vmatpush1.bf16.msra.mxu0 %v3307
    %4674 = vmatprep.subr.bf16.mxu0 %v3317
    %4675 = vmatpush1.bf16.msra.mxu0 %v3316
    %4676 = vmatprep.subr.bf16.mxu0 %v3326
    %4677 = vmatpush1.bf16.msra.mxu0 %v3325
    %4678 = vmatprep.subr.bf16.mxu0 %v3335
    %4679 = vmatpush1.bf16.msra.mxu0 %v3334
    %4680 = vmatprep.subr.bf16.mxu0 %v3344
    %4681 = vmatpush1.bf16.msra.mxu0 %v3343
    %4682 = vmatprep.subr.bf16.mxu0 %v3353
    %4683 = vmatpush1.bf16.msra.mxu0 %v3352
    %4684 = vmatprep.subr.bf16.mxu0 %v3362
    %4685 = vmatpush1.bf16.msra.mxu0 %v3361
    %4686 = vmatprep.subr.bf16.mxu0 %v3371
    %4687 = vmatpush1.bf16.msra.mxu0 %v3370
    %4688 = vmatprep.subr.bf16.mxu0 %v3380
    %4689 = vmatpush1.bf16.msra.mxu0 %v3379
    %4690 = vmatprep.subr.bf16.mxu0 %v3389
    %4691 = vmatpush1.bf16.msra.mxu0 %v3388
    %4692 = vmatprep.subr.bf16.mxu0 %v3398
    %4693 = vmatpush1.bf16.msra.mxu0 %v3397
    %4694 = vmatprep.subr.bf16.mxu0 %v3407
    %4695 = vmatpush1.bf16.msra.mxu0 %v3406
    %4696 = vmatprep.mubr.bf16.mxu0 %v97
    %4697 = vmatmul.mubr.bf16.gmra.mrb[0].mxu0 %v96
    %v4698 = vpop.f32.mrb[0].mxu0
    %v4699 = vadd.f32 %v4658, %v4698
    %v4700 = vpop.f32.mrb[0].mxu0
    %v4701 = vadd.f32 %v4660, %v4700
    %v4702 = vpop.f32.mrb[0].mxu0
    %v4703 = vpop.f32.mrb[0].mxu0
    %4704 = vdwg.mxu0
    %4705 = vmatprep.subr.bf16.mxu0 %v3416
    %4706 = vmatpush1.bf16.msra.mxu0 %v3415
    %4707 = vmatprep.subr.bf16.mxu0 %v3425
    %4708 = vmatpush1.bf16.msra.mxu0 %v3424
    %4709 = vmatprep.subr.bf16.mxu0 %v3434
    %4710 = vmatpush1.bf16.msra.mxu0 %v3433
    %4711 = vmatprep.subr.bf16.mxu0 %v3443
    %4712 = vmatpush1.bf16.msra.mxu0 %v3442
    %4713 = vmatprep.subr.bf16.mxu0 %v3452
    %4714 = vmatpush1.bf16.msra.mxu0 %v3451
    %4715 = vmatprep.subr.bf16.mxu0 %v3461
    %4716 = vmatpush1.bf16.msra.mxu0 %v3460
    %4717 = vmatprep.subr.bf16.mxu0 %v3470
    %4718 = vmatpush1.bf16.msra.mxu0 %v3469
    %4719 = vmatprep.subr.bf16.mxu0 %v3479
    %4720 = vmatpush1.bf16.msra.mxu0 %v3478
    %4721 = vmatprep.subr.bf16.mxu0 0
    %4722 = vmatpush1.bf16.msra.mxu0 0
    %4723 = vmatprep.subr.bf16.mxu0 0
    %4724 = vmatpush1.bf16.msra.mxu0 0
    %4725 = vmatprep.subr.bf16.mxu0 0
    %4726 = vmatpush1.bf16.msra.mxu0 0
    %4727 = vmatprep.subr.bf16.mxu0 0
    %4728 = vmatpush1.bf16.msra.mxu0 0
    %4729 = vmatprep.subr.bf16.mxu0 0
    %4730 = vmatpush1.bf16.msra.mxu0 0
    %4731 = vmatprep.subr.bf16.mxu0 0
    %4732 = vmatpush1.bf16.msra.mxu0 0
    %4733 = vmatprep.subr.bf16.mxu0 0
    %4734 = vmatpush1.bf16.msra.mxu0 0
    %4735 = vmatprep.subr.bf16.mxu0 0
    %4736 = vmatpush1.bf16.msra.mxu0 0
    %4737 = vmatprep.mubr.bf16.mxu0 0
    %4738 = vmatmul.mubr.bf16.gmra.mrb[0].mxu0 %v98
    %v4739 = vpop.f32.mrb[0].mxu0
    %v4740 = vadd.f32 %v4699, %v4739
    %v4741 = vpop.f32.mrb[0].mxu0
    %v4742 = vadd.f32 %v4701, %v4741
    %v4743 = vpop.f32.mrb[0].mxu0
    %v4744 = vpop.f32.mrb[0].mxu0
    %4745 = vdwg.mxu0
    %4746 = vmatprep.subr.bf16.mxu0 %v2842
    %4747 = vmatpush1.bf16.msra.mxu0 %v2841
    %4748 = vmatprep.subr.bf16.mxu0 %v2851
    %4749 = vmatpush1.bf16.msra.mxu0 %v2850
    %4750 = vmatprep.subr.bf16.mxu0 %v2860
    %4751 = vmatpush1.bf16.msra.mxu0 %v2859
    %4752 = vmatprep.subr.bf16.mxu0 %v2869
    %4753 = vmatpush1.bf16.msra.mxu0 %v2868
    %4754 = vmatprep.subr.bf16.mxu0 %v2878
    %4755 = vmatpush1.bf16.msra.mxu0 %v2877
    %4756 = vmatprep.subr.bf16.mxu0 %v2887
    %4757 = vmatpush1.bf16.msra.mxu0 %v2886
    %4758 = vmatprep.subr.bf16.mxu0 %v2896
    %4759 = vmatpush1.bf16.msra.mxu0 %v2895
    %4760 = vmatprep.subr.bf16.mxu0 %v2905
    %4761 = vmatpush1.bf16.msra.mxu0 %v2904
    %4762 = vmatprep.subr.bf16.mxu0 %v2914
    %4763 = vmatpush1.bf16.msra.mxu0 %v2913
    %4764 = vmatprep.subr.bf16.mxu0 %v2923
    %4765 = vmatpush1.bf16.msra.mxu0 %v2922
    %4766 = vmatprep.subr.bf16.mxu0 %v2932
    %4767 = vmatpush1.bf16.msra.mxu0 %v2931
    %4768 = vmatprep.subr.bf16.mxu0 %v2941
    %4769 = vmatpush1.bf16.msra.mxu0 %v2940
    %4770 = vmatprep.subr.bf16.mxu0 %v2950
    %4771 = vmatpush1.bf16.msra.mxu0 %v2949
    %4772 = vmatprep.subr.bf16.mxu0 %v2959
    %4773 = vmatpush1.bf16.msra.mxu0 %v2958
    %4774 = vmatprep.subr.bf16.mxu0 %v2968
    %4775 = vmatpush1.bf16.msra.mxu0 %v2967
    %4776 = vmatprep.subr.bf16.mxu0 %v2977
    %4777 = vmatpush1.bf16.msra.mxu0 %v2976
    %4778 = vmatprep.mubr.bf16.mxu0 %v91
    %4779 = vmatmul.mubr.bf16.gmra.mrb[0].mxu0 %v90
    %v4780 = vpop.f32.mrb[0].mxu0
    %v4781 = vadd.f32 0.0, %v4780
    %v4782 = vpop.f32.mrb[0].mxu0
    %v4783 = vadd.f32 0.0, %v4782
    %v4784 = vpop.f32.mrb[0].mxu0
    %v4785 = vpop.f32.mrb[0].mxu0
    %4786 = vdwg.mxu0
    %4787 = vmatprep.subr.bf16.mxu0 %v2986
    %4788 = vmatpush1.bf16.msra.mxu0 %v2985
    %4789 = vmatprep.subr.bf16.mxu0 %v2995
    %4790 = vmatpush1.bf16.msra.mxu0 %v2994
    %4791 = vmatprep.subr.bf16.mxu0 %v3004
    %4792 = vmatpush1.bf16.msra.mxu0 %v3003
    %4793 = vmatprep.subr.bf16.mxu0 %v3013
    %4794 = vmatpush1.bf16.msra.mxu0 %v3012
    %4795 = vmatprep.subr.bf16.mxu0 %v3022
    %4796 = vmatpush1.bf16.msra.mxu0 %v3021
    %4797 = vmatprep.subr.bf16.mxu0 %v3031
    %4798 = vmatpush1.bf16.msra.mxu0 %v3030
    %4799 = vmatprep.subr.bf16.mxu0 %v3040
    %4800 = vmatpush1.bf16.msra.mxu0 %v3039
    %4801 = vmatprep.subr.bf16.mxu0 %v3049
    %4802 = vmatpush1.bf16.msra.mxu0 %v3048
    %4803 = vmatprep.subr.bf16.mxu0 %v3058
    %4804 = vmatpush1.bf16.msra.mxu0 %v3057
    %4805 = vmatprep.subr.bf16.mxu0 %v3067
    %4806 = vmatpush1.bf16.msra.mxu0 %v3066
    %4807 = vmatprep.subr.bf16.mxu0 %v3076
    %4808 = vmatpush1.bf16.msra.mxu0 %v3075
    %4809 = vmatprep.subr.bf16.mxu0 %v3085
    %4810 = vmatpush1.bf16.msra.mxu0 %v3084
    %4811 = vmatprep.subr.bf16.mxu0 %v3094
    %4812 = vmatpush1.bf16.msra.mxu0 %v3093
    %4813 = vmatprep.subr.bf16.mxu0 %v3103
    %4814 = vmatpush1.bf16.msra.mxu0 %v3102
    %4815 = vmatprep.subr.bf16.mxu0 %v3112
    %4816 = vmatpush1.bf16.msra.mxu0 %v3111
    %4817 = vmatprep.subr.bf16.mxu0 %v3121
    %4818 = vmatpush1.bf16.msra.mxu0 %v3120
    %4819 = vmatprep.mubr.bf16.mxu0 %v93
    %4820 = vmatmul.mubr.bf16.gmra.mrb[0].mxu0 %v92
    %v4821 = vpop.f32.mrb[0].mxu0
    %v4822 = vadd.f32 %v4781, %v4821
    %v4823 = vpop.f32.mrb[0].mxu0
    %v4824 = vadd.f32 %v4783, %v4823
    %v4825 = vpop.f32.mrb[0].mxu0
    %v4826 = vpop.f32.mrb[0].mxu0
    %4827 = vdwg.mxu0
    %4828 = vmatprep.subr.bf16.mxu0 %v3130
    %4829 = vmatpush1.bf16.msra.mxu0 %v3129
    %4830 = vmatprep.subr.bf16.mxu0 %v3139
    %4831 = vmatpush1.bf16.msra.mxu0 %v3138
    %4832 = vmatprep.subr.bf16.mxu0 %v3148
    %4833 = vmatpush1.bf16.msra.mxu0 %v3147
    %4834 = vmatprep.subr.bf16.mxu0 %v3157
    %4835 = vmatpush1.bf16.msra.mxu0 %v3156
    %4836 = vmatprep.subr.bf16.mxu0 %v3166
    %4837 = vmatpush1.bf16.msra.mxu0 %v3165
    %4838 = vmatprep.subr.bf16.mxu0 %v3175
    %4839 = vmatpush1.bf16.msra.mxu0 %v3174
    %4840 = vmatprep.subr.bf16.mxu0 %v3184
    %4841 = vmatpush1.bf16.msra.mxu0 %v3183
    %4842 = vmatprep.subr.bf16.mxu0 %v3193
    %4843 = vmatpush1.bf16.msra.mxu0 %v3192
    %4844 = vmatprep.subr.bf16.mxu0 %v3202
    %4845 = vmatpush1.bf16.msra.mxu0 %v3201
    %4846 = vmatprep.subr.bf16.mxu0 %v3211
    %4847 = vmatpush1.bf16.msra.mxu0 %v3210
    %4848 = vmatprep.subr.bf16.mxu0 %v3220
    %4849 = vmatpush1.bf16.msra.mxu0 %v3219
    %4850 = vmatprep.subr.bf16.mxu0 %v3229
    %4851 = vmatpush1.bf16.msra.mxu0 %v3228
    %4852 = vmatprep.subr.bf16.mxu0 %v3238
    %4853 = vmatpush1.bf16.msra.mxu0 %v3237
    %4854 = vmatprep.subr.bf16.mxu0 %v3247
    %4855 = vmatpush1.bf16.msra.mxu0 %v3246
    %4856 = vmatprep.subr.bf16.mxu0 %v3256
    %4857 = vmatpush1.bf16.msra.mxu0 %v3255
    %4858 = vmatprep.subr.bf16.mxu0 %v3265
    %4859 = vmatpush1.bf16.msra.mxu0 %v3264
    %4860 = vmatprep.mubr.bf16.mxu0 %v95
    %4861 = vmatmul.mubr.bf16.gmra.mrb[0].mxu0 %v94
    %v4862 = vpop.f32.mrb[0].mxu0
    %v4863 = vadd.f32 %v4822, %v4862
    %v4864 = vpop.f32.mrb[0].mxu0
    %v4865 = vadd.f32 %v4824, %v4864
    %v4866 = vpop.f32.mrb[0].mxu0
    %v4867 = vpop.f32.mrb[0].mxu0
    %4868 = vdwg.mxu0
    %4869 = vmatprep.subr.bf16.mxu0 %v3274
    %4870 = vmatpush1.bf16.msra.mxu0 %v3273
    %4871 = vmatprep.subr.bf16.mxu0 %v3283
    %4872 = vmatpush1.bf16.msra.mxu0 %v3282
    %4873 = vmatprep.subr.bf16.mxu0 %v3292
    %4874 = vmatpush1.bf16.msra.mxu0 %v3291
    %4875 = vmatprep.subr.bf16.mxu0 %v3301
    %4876 = vmatpush1.bf16.msra.mxu0 %v3300
    %4877 = vmatprep.subr.bf16.mxu0 %v3310
    %4878 = vmatpush1.bf16.msra.mxu0 %v3309
    %4879 = vmatprep.subr.bf16.mxu0 %v3319
    %4880 = vmatpush1.bf16.msra.mxu0 %v3318
    %4881 = vmatprep.subr.bf16.mxu0 %v3328
    %4882 = vmatpush1.bf16.msra.mxu0 %v3327
    %4883 = vmatprep.subr.bf16.mxu0 %v3337
    %4884 = vmatpush1.bf16.msra.mxu0 %v3336
    %4885 = vmatprep.subr.bf16.mxu0 %v3346
    %4886 = vmatpush1.bf16.msra.mxu0 %v3345
    %4887 = vmatprep.subr.bf16.mxu0 %v3355
    %4888 = vmatpush1.bf16.msra.mxu0 %v3354
    %4889 = vmatprep.subr.bf16.mxu0 %v3364
    %4890 = vmatpush1.bf16.msra.mxu0 %v3363
    %4891 = vmatprep.subr.bf16.mxu0 %v3373
    %4892 = vmatpush1.bf16.msra.mxu0 %v3372
    %4893 = vmatprep.subr.bf16.mxu0 %v3382
    %4894 = vmatpush1.bf16.msra.mxu0 %v3381
    %4895 = vmatprep.subr.bf16.mxu0 %v3391
    %4896 = vmatpush1.bf16.msra.mxu0 %v3390
    %4897 = vmatprep.subr.bf16.mxu0 %v3400
    %4898 = vmatpush1.bf16.msra.mxu0 %v3399
    %4899 = vmatprep.subr.bf16.mxu0 %v3409
    %4900 = vmatpush1.bf16.msra.mxu0 %v3408
    %4901 = vmatprep.mubr.bf16.mxu0 %v97
    %4902 = vmatmul.mubr.bf16.gmra.mrb[0].mxu0 %v96
    %v4903 = vpop.f32.mrb[0].mxu0
    %v4904 = vadd.f32 %v4863, %v4903
    %v4905 = vpop.f32.mrb[0].mxu0
    %v4906 = vadd.f32 %v4865, %v4905
    %v4907 = vpop.f32.mrb[0].mxu0
    %v4908 = vpop.f32.mrb[0].mxu0
    %4909 = vdwg.mxu0
    %4910 = vmatprep.subr.bf16.mxu0 %v3418
    %4911 = vmatpush1.bf16.msra.mxu0 %v3417
    %4912 = vmatprep.subr.bf16.mxu0 %v3427
    %4913 = vmatpush1.bf16.msra.mxu0 %v3426
    %4914 = vmatprep.subr.bf16.mxu0 %v3436
    %4915 = vmatpush1.bf16.msra.mxu0 %v3435
    %4916 = vmatprep.subr.bf16.mxu0 %v3445
    %4917 = vmatpush1.bf16.msra.mxu0 %v3444
    %4918 = vmatprep.subr.bf16.mxu0 %v3454
    %4919 = vmatpush1.bf16.msra.mxu0 %v3453
    %4920 = vmatprep.subr.bf16.mxu0 %v3463
    %4921 = vmatpush1.bf16.msra.mxu0 %v3462
    %4922 = vmatprep.subr.bf16.mxu0 %v3472
    %4923 = vmatpush1.bf16.msra.mxu0 %v3471
    %4924 = vmatprep.subr.bf16.mxu0 %v3481
    %4925 = vmatpush1.bf16.msra.mxu0 %v3480
    %4926 = vmatprep.subr.bf16.mxu0 0
    %4927 = vmatpush1.bf16.msra.mxu0 0
    %4928 = vmatprep.subr.bf16.mxu0 0
    %4929 = vmatpush1.bf16.msra.mxu0 0
    %4930 = vmatprep.subr.bf16.mxu0 0
    %4931 = vmatpush1.bf16.msra.mxu0 0
    %4932 = vmatprep.subr.bf16.mxu0 0
    %4933 = vmatpush1.bf16.msra.mxu0 0
    %4934 = vmatprep.subr.bf16.mxu0 0
    %4935 = vmatpush1.bf16.msra.mxu0 0
    %4936 = vmatprep.subr.bf16.mxu0 0
    %4937 = vmatpush1.bf16.msra.mxu0 0
    %4938 = vmatprep.subr.bf16.mxu0 0
    %4939 = vmatpush1.bf16.msra.mxu0 0
    %4940 = vmatprep.subr.bf16.mxu0 0
    %4941 = vmatpush1.bf16.msra.mxu0 0
    %4942 = vmatprep.mubr.bf16.mxu0 0
    %4943 = vmatmul.mubr.bf16.gmra.mrb[0].mxu0 %v98
    %v4944 = vpop.f32.mrb[0].mxu0
    %v4945 = vadd.f32 %v4904, %v4944
    %v4946 = vpop.f32.mrb[0].mxu0
    %v4947 = vadd.f32 %v4906, %v4946
    %v4948 = vpop.f32.mrb[0].mxu0
    %v4949 = vpop.f32.mrb[0].mxu0
    %4950 = vdwg.mxu0
    %4951 = vmatprep.subr.bf16.mxu0 0
    %4952 = vmatpush1.bf16.msra.mxu0 %v2843
    %4953 = vmatprep.subr.bf16.mxu0 0
    %4954 = vmatpush1.bf16.msra.mxu0 %v2852
    %4955 = vmatprep.subr.bf16.mxu0 0
    %4956 = vmatpush1.bf16.msra.mxu0 %v2861
    %4957 = vmatprep.subr.bf16.mxu0 0
    %4958 = vmatpush1.bf16.msra.mxu0 %v2870
    %4959 = vmatprep.subr.bf16.mxu0 0
    %4960 = vmatpush1.bf16.msra.mxu0 %v2879
    %4961 = vmatprep.subr.bf16.mxu0 0
    %4962 = vmatpush1.bf16.msra.mxu0 %v2888
    %4963 = vmatprep.subr.bf16.mxu0 0
    %4964 = vmatpush1.bf16.msra.mxu0 %v2897
    %4965 = vmatprep.subr.bf16.mxu0 0
    %4966 = vmatpush1.bf16.msra.mxu0 %v2906
    %4967 = vmatprep.subr.bf16.mxu0 0
    %4968 = vmatpush1.bf16.msra.mxu0 %v2915
    %4969 = vmatprep.subr.bf16.mxu0 0
    %4970 = vmatpush1.bf16.msra.mxu0 %v2924
    %4971 = vmatprep.subr.bf16.mxu0 0
    %4972 = vmatpush1.bf16.msra.mxu0 %v2933
    %4973 = vmatprep.subr.bf16.mxu0 0
    %4974 = vmatpush1.bf16.msra.mxu0 %v2942
    %4975 = vmatprep.subr.bf16.mxu0 0
    %4976 = vmatpush1.bf16.msra.mxu0 %v2951
    %4977 = vmatprep.subr.bf16.mxu0 0
    %4978 = vmatpush1.bf16.msra.mxu0 %v2960
    %4979 = vmatprep.subr.bf16.mxu0 0
    %4980 = vmatpush1.bf16.msra.mxu0 %v2969
    %4981 = vmatprep.subr.bf16.mxu0 0
    %4982 = vmatpush1.bf16.msra.mxu0 %v2978
    %4983 = vmatprep.mubr.bf16.mxu0 %v91
    %4984 = vmatmul.mubr.bf16.gmra.mrb[0].mxu0 %v90
    %v4985 = vpop.f32.mrb[0].mxu0
    %v4986 = vadd.f32 0.0, %v4985
    %v4987 = vpop.f32.mrb[0].mxu0
    %v4988 = vpop.f32.mrb[0].mxu0
    %v4989 = vpop.f32.mrb[0].mxu0
    %4990 = vdwg.mxu0
    %4991 = vmatprep.subr.bf16.mxu0 0
    %4992 = vmatpush1.bf16.msra.mxu0 %v2987
    %4993 = vmatprep.subr.bf16.mxu0 0
    %4994 = vmatpush1.bf16.msra.mxu0 %v2996
    %4995 = vmatprep.subr.bf16.mxu0 0
    %4996 = vmatpush1.bf16.msra.mxu0 %v3005
    %4997 = vmatprep.subr.bf16.mxu0 0
    %4998 = vmatpush1.bf16.msra.mxu0 %v3014
    %4999 = vmatprep.subr.bf16.mxu0 0
    %5000 = vmatpush1.bf16.msra.mxu0 %v3023
    %5001 = vmatprep.subr.bf16.mxu0 0
    %5002 = vmatpush1.bf16.msra.mxu0 %v3032
    %5003 = vmatprep.subr.bf16.mxu0 0
    %5004 = vmatpush1.bf16.msra.mxu0 %v3041
    %5005 = vmatprep.subr.bf16.mxu0 0
    %5006 = vmatpush1.bf16.msra.mxu0 %v3050
    %5007 = vmatprep.subr.bf16.mxu0 0
    %5008 = vmatpush1.bf16.msra.mxu0 %v3059
    %5009 = vmatprep.subr.bf16.mxu0 0
    %5010 = vmatpush1.bf16.msra.mxu0 %v3068
    %5011 = vmatprep.subr.bf16.mxu0 0
    %5012 = vmatpush1.bf16.msra.mxu0 %v3077
    %5013 = vmatprep.subr.bf16.mxu0 0
    %5014 = vmatpush1.bf16.msra.mxu0 %v3086
    %5015 = vmatprep.subr.bf16.mxu0 0
    %5016 = vmatpush1.bf16.msra.mxu0 %v3095
    %5017 = vmatprep.subr.bf16.mxu0 0
    %5018 = vmatpush1.bf16.msra.mxu0 %v3104
    %5019 = vmatprep.subr.bf16.mxu0 0
    %5020 = vmatpush1.bf16.msra.mxu0 %v3113
    %5021 = vmatprep.subr.bf16.mxu0 0
    %5022 = vmatpush1.bf16.msra.mxu0 %v3122
    %5023 = vmatprep.mubr.bf16.mxu0 %v93
    %5024 = vmatmul.mubr.bf16.gmra.mrb[0].mxu0 %v92
    %v5025 = vpop.f32.mrb[0].mxu0
    %v5026 = vadd.f32 %v4986, %v5025
    %v5027 = vpop.f32.mrb[0].mxu0
    %v5028 = vpop.f32.mrb[0].mxu0
    %v5029 = vpop.f32.mrb[0].mxu0
    %5030 = vdwg.mxu0
    %5031 = vmatprep.subr.bf16.mxu0 0
    %5032 = vmatpush1.bf16.msra.mxu0 %v3131
    %5033 = vmatprep.subr.bf16.mxu0 0
    %5034 = vmatpush1.bf16.msra.mxu0 %v3140
    %5035 = vmatprep.subr.bf16.mxu0 0
    %5036 = vmatpush1.bf16.msra.mxu0 %v3149
    %5037 = vmatprep.subr.bf16.mxu0 0
    %5038 = vmatpush1.bf16.msra.mxu0 %v3158
    %5039 = vmatprep.subr.bf16.mxu0 0
    %5040 = vmatpush1.bf16.msra.mxu0 %v3167
    %5041 = vmatprep.subr.bf16.mxu0 0
    %5042 = vmatpush1.bf16.msra.mxu0 %v3176
    %5043 = vmatprep.subr.bf16.mxu0 0
    %5044 = vmatpush1.bf16.msra.mxu0 %v3185
    %5045 = vmatprep.subr.bf16.mxu0 0
    %5046 = vmatpush1.bf16.msra.mxu0 %v3194
    %5047 = vmatprep.subr.bf16.mxu0 0
    %5048 = vmatpush1.bf16.msra.mxu0 %v3203
    %5049 = vmatprep.subr.bf16.mxu0 0
    %5050 = vmatpush1.bf16.msra.mxu0 %v3212
    %5051 = vmatprep.subr.bf16.mxu0 0
    %5052 = vmatpush1.bf16.msra.mxu0 %v3221
    %5053 = vmatprep.subr.bf16.mxu0 0
    %5054 = vmatpush1.bf16.msra.mxu0 %v3230
    %5055 = vmatprep.subr.bf16.mxu0 0
    %5056 = vmatpush1.bf16.msra.mxu0 %v3239
    %5057 = vmatprep.subr.bf16.mxu0 0
    %5058 = vmatpush1.bf16.msra.mxu0 %v3248
    %5059 = vmatprep.subr.bf16.mxu0 0
    %5060 = vmatpush1.bf16.msra.mxu0 %v3257
    %5061 = vmatprep.subr.bf16.mxu0 0
    %5062 = vmatpush1.bf16.msra.mxu0 %v3266
    %5063 = vmatprep.mubr.bf16.mxu0 %v95
    %5064 = vmatmul.mubr.bf16.gmra.mrb[0].mxu0 %v94
    %v5065 = vpop.f32.mrb[0].mxu0
    %v5066 = vadd.f32 %v5026, %v5065
    %v5067 = vpop.f32.mrb[0].mxu0
    %v5068 = vpop.f32.mrb[0].mxu0
    %v5069 = vpop.f32.mrb[0].mxu0
    %5070 = vdwg.mxu0
    %5071 = vmatprep.subr.bf16.mxu0 0
    %5072 = vmatpush1.bf16.msra.mxu0 %v3275
    %5073 = vmatprep.subr.bf16.mxu0 0
    %5074 = vmatpush1.bf16.msra.mxu0 %v3284
    %5075 = vmatprep.subr.bf16.mxu0 0
    %5076 = vmatpush1.bf16.msra.mxu0 %v3293
    %5077 = vmatprep.subr.bf16.mxu0 0
    %5078 = vmatpush1.bf16.msra.mxu0 %v3302
    %5079 = vmatprep.subr.bf16.mxu0 0
    %5080 = vmatpush1.bf16.msra.mxu0 %v3311
    %5081 = vmatprep.subr.bf16.mxu0 0
    %5082 = vmatpush1.bf16.msra.mxu0 %v3320
    %5083 = vmatprep.subr.bf16.mxu0 0
    %5084 = vmatpush1.bf16.msra.mxu0 %v3329
    %5085 = vmatprep.subr.bf16.mxu0 0
    %5086 = vmatpush1.bf16.msra.mxu0 %v3338
    %5087 = vmatprep.subr.bf16.mxu0 0
    %5088 = vmatpush1.bf16.msra.mxu0 %v3347
    %5089 = vmatprep.subr.bf16.mxu0 0
    %5090 = vmatpush1.bf16.msra.mxu0 %v3356
    %5091 = vmatprep.subr.bf16.mxu0 0
    %5092 = vmatpush1.bf16.msra.mxu0 %v3365
    %5093 = vmatprep.subr.bf16.mxu0 0
    %5094 = vmatpush1.bf16.msra.mxu0 %v3374
    %5095 = vmatprep.subr.bf16.mxu0 0
    %5096 = vmatpush1.bf16.msra.mxu0 %v3383
    %5097 = vmatprep.subr.bf16.mxu0 0
    %5098 = vmatpush1.bf16.msra.mxu0 %v3392
    %5099 = vmatprep.subr.bf16.mxu0 0
    %5100 = vmatpush1.bf16.msra.mxu0 %v3401
    %5101 = vmatprep.subr.bf16.mxu0 0
    %5102 = vmatpush1.bf16.msra.mxu0 %v3410
    %5103 = vmatprep.mubr.bf16.mxu0 %v97
    %5104 = vmatmul.mubr.bf16.gmra.mrb[0].mxu0 %v96
    %v5105 = vpop.f32.mrb[0].mxu0
    %v5106 = vadd.f32 %v5066, %v5105
    %v5107 = vpop.f32.mrb[0].mxu0
    %v5108 = vpop.f32.mrb[0].mxu0
    %v5109 = vpop.f32.mrb[0].mxu0
    %5110 = vdwg.mxu0
    %5111 = vmatprep.subr.bf16.mxu0 0
    %5112 = vmatpush1.bf16.msra.mxu0 %v3419
    %5113 = vmatprep.subr.bf16.mxu0 0
    %5114 = vmatpush1.bf16.msra.mxu0 %v3428
    %5115 = vmatprep.subr.bf16.mxu0 0
    %5116 = vmatpush1.bf16.msra.mxu0 %v3437
    %5117 = vmatprep.subr.bf16.mxu0 0
    %5118 = vmatpush1.bf16.msra.mxu0 %v3446
    %5119 = vmatprep.subr.bf16.mxu0 0
    %5120 = vmatpush1.bf16.msra.mxu0 %v3455
    %5121 = vmatprep.subr.bf16.mxu0 0
    %5122 = vmatpush1.bf16.msra.mxu0 %v3464
    %5123 = vmatprep.subr.bf16.mxu0 0
    %5124 = vmatpush1.bf16.msra.mxu0 %v3473
    %5125 = vmatprep.subr.bf16.mxu0 0
    %5126 = vmatpush1.bf16.msra.mxu0 %v3482
    %5127 = vmatprep.subr.bf16.mxu0 0
    %5128 = vmatpush1.bf16.msra.mxu0 0
    %5129 = vmatprep.subr.bf16.mxu0 0
    %5130 = vmatpush1.bf16.msra.mxu0 0
    %5131 = vmatprep.subr.bf16.mxu0 0
    %5132 = vmatpush1.bf16.msra.mxu0 0
    %5133 = vmatprep.subr.bf16.mxu0 0
    %5134 = vmatpush1.bf16.msra.mxu0 0
    %5135 = vmatprep.subr.bf16.mxu0 0
    %5136 = vmatpush1.bf16.msra.mxu0 0
    %5137 = vmatprep.subr.bf16.mxu0 0
    %5138 = vmatpush1.bf16.msra.mxu0 0
    %5139 = vmatprep.subr.bf16.mxu0 0
    %5140 = vmatpush1.bf16.msra.mxu0 0
    %5141 = vmatprep.subr.bf16.mxu0 0
    %5142 = vmatpush1.bf16.msra.mxu0 0
    %5143 = vmatprep.mubr.bf16.mxu0 0
    %5144 = vmatmul.mubr.bf16.gmra.mrb[0].mxu0 %v98
    %v5145 = vpop.f32.mrb[0].mxu0
    %v5146 = vadd.f32 %v5106, %v5145
    %v5147 = vpop.f32.mrb[0].mxu0
    %v5148 = vpop.f32.mrb[0].mxu0
    %v5149 = vpop.f32.mrb[0].mxu0
    %5150 = vdwg.mxu0
    %v5151 = vld [vmem:[#allocation6] sm:$0xff]
    %v5152 = vld [vmem:[#allocation6 + $0x8] sm:$0xff]
    %v5153 = vld [vmem:[#allocation6 + $0x10] sm:$0xff]
    %v5154 = vld [vmem:[#allocation6 + $0x18] sm:$0xff]
    %v5155 = vld [vmem:[#allocation6 + $0x20] sm:$0xf]
    %v5156 = vstv %s72
    %v5157 = vmul.f32 %v5156, %v4330
    %v5158 = vmul.f32 %v5156, %v4332
    %v5159 = vmul.f32 %v5156, %v4535
    %v5160 = vmul.f32 %v5156, %v4537
    %v5161 = vmul.f32 %v5156, %v4740
    %v5162 = vmul.f32 %v5156, %v4742
    %v5163 = vmul.f32 %v5156, %v4945
    %v5164 = vmul.f32 %v5156, %v4947
    %v5165 = vmul.f32 %v5156, %v5146
    %v5174 = vcombine.low %v5157, %v5158
    %v5175 = vcombine.low %v5159, %v5160
    %v5176 = vcombine.low %v5161, %v5162
    %v5177 = vcombine.low %v5163, %v5164
    %v5182 = vsub.f32 %v5151, %v5174
    %v5183 = vsub.f32 %v5152, %v5175
    %v5184 = vsub.f32 %v5153, %v5176
    %v5185 = vsub.f32 %v5154, %v5177
    %v5186 = vsub.f32 %v5155, %v5165
    %v5187 = vld [vmem:[#allocation9] sm:$0xff]
    %v5188 = vld [vmem:[#allocation9 + $0x8] sm:$0xff]
    %v5189 = vld [vmem:[#allocation9 + $0x10] sm:$0xff]
    %v5190 = vld [vmem:[#allocation9 + $0x18] sm:$0xff]
    %v5191 = vld [vmem:[#allocation9 + $0x20] sm:$0xf]
    %v5192 = vmul.f32 %v5156, %v5187
    %v5193 = vmul.f32 %v5156, %v5188
    %v5194 = vmul.f32 %v5156, %v5189
    %v5195 = vmul.f32 %v5156, %v5190
    %v5196 = vmul.f32 %v5156, %v5191
    %v5197 = vadd.f32 %v5182, %v5192
    %v5198 = vadd.f32 %v5183, %v5193
    %v5199 = vadd.f32 %v5184, %v5194
    %v5200 = vadd.f32 %v5185, %v5195
    %v5201 = vadd.f32 %v5186, %v5196
    %5202 = vst [vmem:[#allocation11] sm:$0xff] %v5197
    %5203 = vst [vmem:[#allocation11 + $0x8] sm:$0xff] %v5198
    %5204 = vst [vmem:[#allocation11 + $0x10] sm:$0xff] %v5199
    %5205 = vst [vmem:[#allocation11 + $0x18] sm:$0xff] %v5200
    %5206 = vst [vmem:[#allocation11 + $0x20] sm:$0xf] %v5201
    // Predicated region
    $region38: #{tpu_custom_call.1} parent=1 // pred_check
      _
    $region39: #{tpu_custom_call.1} parent=1 // pred_check_branch
      %5208 = sbr.rel (0) target = $region41
    $region40: #{tpu_custom_call.1} parent=1 // pred_region
      %s5210 = ssub.s32 576, 576
      %5211 = vsyncadd [#allocation5], %s5210
      %s5213 = sshll.u32 [#allocation11], 4
      %s5214 = int_to_ptr.vmem [resolvable:$true] %s5213
      %5216 = dma.vmem_to_hbm [thread:$0]  %s5214, 576, %s5, [#allocation5]
    $region41: #{tpu_custom_call.1} parent=1 // pred_fallthru
      _
    // Predicated region
    $region42: #{tpu_custom_call.1} parent=1 // pred_check
      _
    $region43: #{tpu_custom_call.1} parent=1 // pred_check_branch
      %5218 = sbr.rel (0) target = $region45
    $region44: #{tpu_custom_call.1} parent=1 // pred_region
      %5219 = dma.done [#allocation5], 576
    $region45: #{tpu_custom_call.1} parent=1 // pred_fallthru
      _
    %5220 = vsyncpa [#allocation4], 1
    %5221 = vsyncpa [#allocation7], 1
    %5222 = vsyncpa [#allocation10], 1
    %5223 = vsyncpa [#allocation5], 1

</llo_original>
